<compile_context>
chip_gen: v7x
topology: tpu7x:2x2x1
jax: 0.10.0
libtpu: 0.0.40
codegen_flags: <defaults>
</compile_context>

<pallas_src>
import functools
import math

import numpy as np
import jax
import jax.numpy as jnp
from jax.experimental import pallas as pl
from jax.experimental.pallas import tpu as pltpu

# ----------------------------------------------------------------------------
# Tokenizer / biological tables (pure python, mirrors Tokenizer and
# BiologicalMappings from the PyTorch reference)
# ----------------------------------------------------------------------------
SPECIAL = ['[START]', '[END]', '[PAD]', '[UNK]', '[SEG]']
AAS = ['A', 'R', 'S', 'I', 'L', 'G', 'V', 'T', 'P', 'N', 'D', 'C', 'Q', 'E',
       'H', 'K', 'F', 'Y', 'M', 'W', '*']
CODONS = [a + b + c for a in 'UCAG' for b in 'UCAG' for c in 'UCAG']
TOKENS = SPECIAL + AAS + CODONS
TOK2ID = {t: i for i, t in enumerate(TOKENS)}
VOCAB = len(TOKENS)                 # 90
PAD_ID = TOK2ID['[PAD]']
START_ID = TOK2ID['[START]']
END_ID = TOK2ID['[END]']

AA_TO_CODON = {
    'A': ['GCU', 'GCC', 'GCA', 'GCG'],
    'R': ['CGU', 'CGC', 'CGA', 'CGG', 'AGA', 'AGG'],
    'S': ['UCU', 'UCC', 'UCA', 'UCG', 'AGU', 'AGC'],
    'I': ['AUU', 'AUC', 'AUA'],
    'L': ['UUA', 'UUG', 'CUU', 'CUC', 'CUA', 'CUG'],
    'G': ['GGU', 'GGC', 'GGA', 'GGG'],
    'V': ['GUU', 'GUC', 'GUA', 'GUG'],
    'T': ['ACU', 'ACC', 'ACA', 'ACG'],
    'P': ['CCU', 'CCC', 'CCA', 'CCG'],
    'N': ['AAU', 'AAC'], 'D': ['GAU', 'GAC'], 'C': ['UGU', 'UGC'],
    'Q': ['CAA', 'CAG'], 'E': ['GAA', 'GAG'], 'H': ['CAU', 'CAC'],
    'K': ['AAA', 'AAG'], 'F': ['UUU', 'UUC'], 'Y': ['UAU', 'UAC'],
    'M': ['AUG'], 'W': ['UGG'], '*': ['UAG', 'UGA', 'UAA'],
}

EPAD = 128          # router-logit lane padding (E=4 -> 128, lane-dense stores)
VPAD = 128          # vocab lane padding (V=90 -> 128, lane-dense stores)
NEG_BIG = -3.0e38   # "already selected" marker for in-kernel top-k
PAD_BIAS = -1.0e30  # router bias for padded expert lanes (never selected)


def build_mask_table_padded():
    """(VPAD, VPAD) f32: row = token id, 1.0 at allowed codon ids for an AA
    token, 0 elsewhere (matches precomputed_masks.get(tok, zeros))."""
    tbl = np.zeros((VPAD, VPAD), dtype=np.float32)
    for aa, codons in AA_TO_CODON.items():
        aa_id = TOK2ID[aa]
        for c in codons:
            tbl[aa_id, TOK2ID[c]] = 1.0
    return jnp.asarray(tbl)


def sinusoidal_pe(seq_len, d_model):
    pos = np.arange(seq_len)[:, None]
    i = np.arange(d_model)[None, :]
    angle = pos / np.power(10000.0, (2 * (i // 2)) / d_model)
    pe = np.zeros((seq_len, d_model), dtype=np.float32)
    pe[:, 0::2] = np.sin(angle[:, 0::2])
    pe[:, 1::2] = np.cos(angle[:, 1::2])
    return jnp.asarray(pe)


# ----------------------------------------------------------------------------
# Fused encoder-stack kernel: one grid step = (batch element, layer).
# Attention + LN1 + router + in-kernel top-k gating + MoE + LN2, all in VMEM.
# ----------------------------------------------------------------------------
def _encoder_stack_kernel(tok_ref, x_ref,
                          wqkv_ref, bqkv_ref, wo_ref, bo_ref,
                          ln1g_ref, ln1b_ref, wrp_ref, brp_ref,
                          ew1_ref, eb1_ref, ew2_ref, eb2_ref,
                          ln2g_ref, ln2b_ref,
                          y_ref, r_ref,
                          x_scr,
                          *, nhead, num_experts, top_k, scale):
    l = pl.program_id(1)
    n_layers = pl.num_programs(1)

    # layer 0: load the embedded input into the carried VMEM activation
    @pl.when(l == 0)
    def _():
        x_scr[...] = x_ref[0]

    x = x_scr[...]                                    # (S, D) f32
    S, D = x.shape
    Dh = D // nhead

    # additive key-padding bias built in-kernel from int32 token ids.
    # NOTE: -1e9 instead of -inf; an all-padded row becomes uniform, not NaN.
    tok = tok_ref[0]                                  # (1, S) int32
    bias = jnp.where(tok == PAD_ID, jnp.float32(-1e9), jnp.float32(0.0))

    # ---- fused QKV projection (bf16 operands, f32 accumulation) -------------
    qkv = jnp.dot(x.astype(jnp.bfloat16), wqkv_ref[0],
                  preferred_element_type=jnp.float32) + bqkv_ref[0]   # (S, 3D)

    # ---- multi-head attention + output projection ---------------------------
    # TODO(synk): switch to a head-major Wqkv layout / batched dot_general and
    # a lax.fori_loop when nhead / D grow (avoids sub-128-lane head slices).
    wo = wo_ref[0]                                    # (D, D) bf16
    proj = jnp.zeros((S, D), jnp.float32)
    for h in range(nhead):                            # static unroll, H small
        q = qkv[:, h * Dh:(h + 1) * Dh].astype(jnp.bfloat16)
        k = qkv[:, D + h * Dh:D + (h + 1) * Dh].astype(jnp.bfloat16)
        v = qkv[:, 2 * D + h * Dh:2 * D + (h + 1) * Dh].astype(jnp.bfloat16)
        s = jax.lax.dot_general(q, k, (((1,), (1,)), ((), ())),
                                preferred_element_type=jnp.float32) * scale
        s = s + bias                                   # (S,S) + (1,S)
        s = s - jnp.max(s, axis=-1, keepdims=True)
        p = jnp.exp(s)
        p = p * pl.reciprocal(jnp.sum(p, axis=-1, keepdims=True), approx=True)
        o_h = jnp.dot(p.astype(jnp.bfloat16), v,
                      preferred_element_type=jnp.float32)            # (S, Dh)
        # concat(heads) @ Wo  ==  sum_h o_h @ Wo[h*Dh:(h+1)*Dh, :]
        proj = proj + jnp.dot(o_h.astype(jnp.bfloat16),
                              wo[h * Dh:(h + 1) * Dh, :],
                              preferred_element_type=jnp.float32)
    attn = proj + bo_ref[0]

    # ---- residual + LayerNorm1 ----------------------------------------------
    h1 = x + attn
    mean = jnp.mean(h1, axis=-1, keepdims=True)
    var = jnp.mean((h1 - mean) ** 2, axis=-1, keepdims=True)
    x1 = (h1 - mean) * jax.lax.rsqrt(var + 1e-5) * ln1g_ref[0] + ln1b_ref[0]

    # ---- router logits (lane-dense, padded lanes carry -1e30 bias) ----------
    r = jnp.dot(x1.astype(jnp.bfloat16), wrp_ref[0],
                preferred_element_type=jnp.float32) + brp_ref[0]      # (S,EPAD)
    r_ref[0, 0] = r

    # ---- in-kernel top-k gating: dense (S, EPAD) gate weights ---------------
    lane = jax.lax.broadcasted_iota(jnp.int32, r.shape, 1).astype(jnp.float32)
    remaining = r
    sel = jnp.zeros_like(r)
    for _ in range(top_k):                            # static unroll, k small
        m = jnp.max(remaining, axis=-1, keepdims=True)
        is_m = remaining >= m
        idx = jnp.min(jnp.where(is_m, lane, jnp.float32(EPAD)),
                      axis=-1, keepdims=True)         # first lane holding max
        hit = (lane == idx).astype(jnp.float32)
        sel = sel + hit
        remaining = jnp.where(hit > 0.0, jnp.float32(NEG_BIG), remaining)
    sel_mask = sel > 0.0
    mx_sel = jnp.max(jnp.where(sel_mask, r, jnp.float32(NEG_BIG)),
                     axis=-1, keepdims=True)
    g_num = jnp.where(sel_mask, jnp.exp(r - mx_sel), jnp.float32(0.0))
    gates = g_num * pl.reciprocal(jnp.sum(g_num, axis=-1, keepdims=True),
                                  approx=True)        # (S, EPAD), rows sum to 1

    # ---- MoE experts, gate-weighted accumulation in VMEM --------------------
    # TODO(synk): tile the dff axis + lax.fori_loop over experts when F / E grow.
    x1b = x1.astype(jnp.bfloat16)
    moe = jnp.zeros((S, D), jnp.float32)
    for e in range(num_experts):                      # static unroll, E small
        he = jnp.dot(x1b, ew1_ref[0, e],
                     preferred_element_type=jnp.float32) + eb1_ref[0, e]
        he = jnp.maximum(he, 0.0)
        oe = jnp.dot(he.astype(jnp.bfloat16), ew2_ref[0, e],
                     preferred_element_type=jnp.float32) + eb2_ref[0, e]
        moe = moe + gates[:, e:e + 1] * oe

    # ---- residual + LayerNorm2, carry to next layer --------------------------
    h2 = x1 + moe
    mean2 = jnp.mean(h2, axis=-1, keepdims=True)
    var2 = jnp.mean((h2 - mean2) ** 2, axis=-1, keepdims=True)
    y = (h2 - mean2) * jax.lax.rsqrt(var2 + 1e-5) * ln2g_ref[0] + ln2b_ref[0]

    x_scr[...] = y
    @pl.when(l == n_layers - 1)
    def _():
        y_ref[0] = y


def encoder_stack(params, x, tokens, *, nhead, num_experts, top_k):
    B, S, D = x.shape
    L = params['wqkv'].shape[0]
    F = params['e_w1'].shape[-1]
    E = num_experts
    tok_row = tokens[:, None, :].astype(jnp.int32)            # (B, 1, S)
    scale = 1.0 / math.sqrt(D // nhead)
    kern = functools.partial(_encoder_stack_kernel, nhead=nhead,
                             num_experts=num_experts, top_k=top_k, scale=scale)

    bmap = lambda b, l: (b, 0, 0)           # batch-indexed activations/tokens
    lmap3 = lambda b, l: (l, 0, 0)          # layer-indexed 3-D weights
    lmap4 = lambda b, l: (l, 0, 0, 0)       # layer-indexed 4-D expert weights

    y, r_all = pl.pallas_call(
        kern,
        out_shape=(jax.ShapeDtypeStruct((B, S, D), jnp.float32),
                   jax.ShapeDtypeStruct((L, B, S, EPAD), jnp.float32)),
        grid=(B, L),
        in_specs=[
            pl.BlockSpec((1, 1, S), bmap),                 # tokens
            pl.BlockSpec((1, S, D), bmap),                 # x (embedded input)
            pl.BlockSpec((1, D, 3 * D), lmap3),            # wqkv (bf16)
            pl.BlockSpec((1, 1, 3 * D), lmap3),            # bqkv
            pl.BlockSpec((1, D, D), lmap3),                # wo (bf16)
            pl.BlockSpec((1, 1, D), lmap3),                # bo
            pl.BlockSpec((1, 1, D), lmap3),                # ln1_g
            pl.BlockSpec((1, 1, D), lmap3),                # ln1_b
            pl.BlockSpec((1, D, EPAD), lmap3),             # wr padded (bf16)
            pl.BlockSpec((1, 1, EPAD), lmap3),             # br padded
            pl.BlockSpec((1, E, D, F), lmap4),             # expert w1 (bf16)
            pl.BlockSpec((1, E, 1, F), lmap4),             # expert b1
            pl.BlockSpec((1, E, F, D), lmap4),             # expert w2 (bf16)
            pl.BlockSpec((1, E, 1, D), lmap4),             # expert b2
            pl.BlockSpec((1, 1, D), lmap3),                # ln2_g
            pl.BlockSpec((1, 1, D), lmap3),                # ln2_b
        ],
        out_specs=(pl.BlockSpec((1, S, D), bmap),
                   pl.BlockSpec((1, 1, S, EPAD), lambda b, l: (l, b, 0, 0))),
        scratch_shapes=[pltpu.VMEM((S, D), jnp.float32)],  # carried activation
        compiler_params=pltpu.CompilerParams(
            dimension_semantics=("parallel", "arbitrary")),
    )(tok_row, x,
      params['wqkv'], params['bqkv'], params['wo'], params['bo'],
      params['ln1_g'], params['ln1_b'], params['wrp'], params['brp'],
      params['e_w1'], params['e_b1'], params['e_w2'], params['e_b2'],
      params['ln2_g'], params['ln2_b'])
    return y, r_all


# ----------------------------------------------------------------------------
# mRNA output head: Linear -> LayerNorm -> ReLU -> Linear -> masked_fill, with
# the amino-acid -> codon mask built in-kernel (one_hot(tokens) @ table).
# Output is lane-dense (VPAD=128); wrapper slices back to VOCAB.
# ----------------------------------------------------------------------------
def _mrna_head_kernel(tok_ref, x_ref, w1_ref, b1_ref, g_ref, be_ref,
                      w2_ref, b2_ref, mtbl_ref, o_ref):
    x = x_ref[0]                                      # (S, D)
    h = jnp.dot(x.astype(jnp.bfloat16), w1_ref[...],
                preferred_element_type=jnp.float32) + b1_ref[...]
    mean = jnp.mean(h, axis=-1, keepdims=True)
    var = jnp.mean((h - mean) ** 2, axis=-1, keepdims=True)
    h = (h - mean) * jax.lax.rsqrt(var + 1e-5) * g_ref[...] + be_ref[...]
    h = jnp.maximum(h, 0.0)                           # Dropout = identity (eval)
    logits = jnp.dot(h.astype(jnp.bfloat16), w2_ref[...],
                     preferred_element_type=jnp.float32) + b2_ref[...]  # (S,VPAD)

    tok = tok_ref[0]                                  # (S, 1) int32
    oh = (jax.lax.broadcasted_iota(jnp.int32, (tok.shape[0], VPAD), 1)
          == tok).astype(jnp.float32)                 # (S, VPAD) one-hot
    mask = jnp.dot(oh, mtbl_ref[...],
                   preferred_element_type=jnp.float32)                  # (S,VPAD)
    o_ref[0] = jnp.where(mask > 0.5, logits, jnp.float32(-60000.0))


def _rep_spec(shape):
    """Block = whole array, constant block index across the grid."""
    n = len(shape)
    return pl.BlockSpec(shape, lambda b, _n=n: (0,) * _n)


def mrna_head(params, x, tokens):
    B, S, D = x.shape
    D2 = params['head_w1'].shape[1]
    tok_col = tokens[:, :, None].astype(jnp.int32)            # (B, S, 1)
    out = pl.pallas_call(
        _mrna_head_kernel,
        out_shape=jax.ShapeDtypeStruct((B, S, VPAD), jnp.float32),
        grid=(B,),
        in_specs=[pl.BlockSpec((1, S, 1), lambda b: (b, 0, 0)),
                  pl.BlockSpec((1, S, D), lambda b: (b, 0, 0)),
                  _rep_spec((D, D2)),
                  _rep_spec((1, D2)),
                  _rep_spec((1, D2)),
                  _rep_spec((1, D2)),
                  _rep_spec((D2, VPAD)),
                  _rep_spec((1, VPAD)),
                  _rep_spec((VPAD, VPAD))],
        out_specs=pl.BlockSpec((1, S, VPAD), lambda b: (b, 0, 0)),
        compiler_params=pltpu.CompilerParams(
            dimension_semantics=("parallel",)),
    )(tok_col, x, params['head_w1'], params['head_b1'], params['head_g'],
      params['head_be'], params['head_w2p'], params['head_b2p'],
      params['mask_tbl'])
    return out[..., :VOCAB]


# ----------------------------------------------------------------------------
# Parameter init (deterministic, synthetic — Encoder body not given in spec).
# Matmul weights stored bf16 (MXU/DMA win on v6e/v7x); biases & LN params f32.
# ----------------------------------------------------------------------------
def init_params(key, vocab, d_model, nhead, num_layers, dff, num_experts):
    D, E, L, F = d_model, num_experts, num_layers, dff
    D2 = D // 2
    kk = jax.random.split(key, 8)

    def nrm(k, shape, scale=0.02):
        return scale * jax.random.normal(k, shape, jnp.float32)

    wr = nrm(kk[3], (L, D, E))
    head_w2 = nrm(kk[7], (D2, vocab))
    params = {
        'embedding': nrm(kk[0], (vocab, D)),
        # per-layer weights stacked on a leading layer axis
        'wqkv': nrm(kk[1], (L, D, 3 * D)).astype(jnp.bfloat16),
        'bqkv': jnp.zeros((L, 1, 3 * D), jnp.float32),
        'wo': nrm(kk[2], (L, D, D)).astype(jnp.bfloat16),
        'bo': jnp.zeros((L, 1, D), jnp.float32),
        'ln1_g': jnp.ones((L, 1, D), jnp.float32),
        'ln1_b': jnp.zeros((L, 1, D), jnp.float32),
        # router projection padded to EPAD lanes; padded lanes biased to -1e30
        'wrp': jnp.pad(wr, ((0, 0), (0, 0), (0, EPAD - E))).astype(jnp.bfloat16),
        'brp': jnp.concatenate(
            [jnp.zeros((L, 1, E), jnp.float32),
             jnp.full((L, 1, EPAD - E), PAD_BIAS, jnp.float32)], axis=-1),
        'e_w1': nrm(kk[4], (L, E, D, F)).astype(jnp.bfloat16),
        'e_b1': jnp.zeros((L, E, 1, F), jnp.float32),
        'e_w2': nrm(kk[5], (L, E, F, D)).astype(jnp.bfloat16),
        'e_b2': jnp.zeros((L, E, 1, D), jnp.float32),
        'ln2_g': jnp.ones((L, 1, D), jnp.float32),
        'ln2_b': jnp.zeros((L, 1, D), jnp.float32),
        # mRNA output head (final Linear padded to VPAD lanes)
        'head_w1': nrm(kk[6], (D, D2)).astype(jnp.bfloat16),
        'head_b1': jnp.zeros((1, D2), jnp.float32),
        'head_g': jnp.ones((1, D2), jnp.float32),
        'head_be': jnp.zeros((1, D2), jnp.float32),
        'head_w2p': jnp.pad(head_w2,
                            ((0, 0), (0, VPAD - vocab))).astype(jnp.bfloat16),
        'head_b2p': jnp.zeros((1, VPAD), jnp.float32),
        'mask_tbl': build_mask_table_padded(),
    }
    return params


# ----------------------------------------------------------------------------
# Forward pass: 1 fused encoder-stack Pallas call + 1 head call.
# Only the embedding gather, positional encoding and the (tiny) router entropy
# remain as JAX glue.
# ----------------------------------------------------------------------------
def actor_forward(params, tokens, *, nhead, num_experts, top_k):
    B, S = tokens.shape
    D = params['embedding'].shape[1]

    # embedding lookup + sinusoidal positional encoding (glue)
    x = params['embedding'][tokens] * jnp.sqrt(jnp.float32(D)) \
        + sinusoidal_pe(S, D)[None]                    # (B, S, D)

    y, r_all = encoder_stack(params, x, tokens, nhead=nhead,
                             num_experts=num_experts, top_k=top_k)
    r_all = r_all[..., :num_experts]                   # (L, B, S, E)

    # router entropy (tiny: L*B*S*E elements), averaged over all positions
    # including [PAD] tokens (same convention as the previous version).
    probs = jax.nn.softmax(r_all, axis=-1)
    ent_per_layer = -jnp.mean(jnp.sum(probs * jnp.log(probs + 1e-9), axis=-1),
                              axis=(1, 2))
    entropy_loss = jnp.mean(ent_per_layer)
    router_logits_list = [r_all[l] for l in range(r_all.shape[0])]

    mrna_logits = mrna_head(params, y, tokens)
    return mrna_logits, router_logits_list, entropy_loss


# ----------------------------------------------------------------------------
if __name__ == "__main__":
    B, S = 2, 8
    D_MODEL, NHEAD, N_LAYERS, DFF = 32, 4, 2, 64
    N_EXPERTS, TOP_K = 4, 2

    key = jax.random.PRNGKey(0)
    pkey, dkey = jax.random.split(key)
    params = init_params(pkey, VOCAB, D_MODEL, NHEAD, N_LAYERS, DFF, N_EXPERTS)

    # deterministic "encoded protein" ids: [START] + amino acids + [END] + [PAD]
    aa_lo, aa_hi = len(SPECIAL), len(SPECIAL) + len(AAS)
    aa_ids = jax.random.randint(dkey, (B, S - 3), aa_lo, aa_hi, dtype=jnp.int32)
    tokens = jnp.concatenate([
        jnp.full((B, 1), START_ID, jnp.int32),
        aa_ids,
        jnp.full((B, 1), END_ID, jnp.int32),
        jnp.full((B, 1), PAD_ID, jnp.int32)], axis=1)

    fwd = jax.jit(functools.partial(actor_forward, nhead=NHEAD,
                                    num_experts=N_EXPERTS, top_k=TOP_K))
    logits, router_list, ent = fwd(params, tokens)
    jax.block_until_ready((logits, router_list, ent))
    assert logits.shape == (B, S, VOCAB)
    assert len(router_list) == N_LAYERS
    assert all(r.shape == (B, S, N_EXPERTS) for r in router_list)
    assert bool(jnp.isfinite(ent))
    print("KERNEL_OK")
</pallas_src>

<mosaic_0001>
module attributes {stable_mosaic.version = 11 : i64} {
  func.func @_mrna_head_kernel(%arg0: i32, %arg1: memref<1x8x1xi32, #tpu.memory_space<vmem>>, %arg2: memref<1x8x32xf32, #tpu.memory_space<vmem>>, %arg3: memref<32x16xbf16, #tpu.memory_space<vmem>>, %arg4: memref<1x16xf32, #tpu.memory_space<vmem>>, %arg5: memref<1x16xf32, #tpu.memory_space<vmem>>, %arg6: memref<1x16xf32, #tpu.memory_space<vmem>>, %arg7: memref<16x128xbf16, #tpu.memory_space<vmem>>, %arg8: memref<1x128xf32, #tpu.memory_space<vmem>>, %arg9: memref<128x128xf32, #tpu.memory_space<vmem>>, %arg10: memref<1x8x128xf32, #tpu.memory_space<vmem>>) attributes {dimension_semantics = [#tpu.dimension_semantics<parallel>], iteration_bounds = array<i64: 2>, scalar_prefetch = 0 : i64, scratch_operands = 0 : i64, tpu.core_type = #tpu.core_type<tc>, window_params = [{transform_indices = @transform_0, window_bounds = array<i64: 1, 8, 1>}, {transform_indices = @transform_1, window_bounds = array<i64: 1, 8, 32>}, {pipeline_mode = #tpu.pipeline_mode<synchronous>, transform_indices = @transform_2, window_bounds = array<i64: 32, 16>}, {pipeline_mode = #tpu.pipeline_mode<synchronous>, transform_indices = @transform_3, window_bounds = array<i64: 1, 16>}, {pipeline_mode = #tpu.pipeline_mode<synchronous>, transform_indices = @transform_4, window_bounds = array<i64: 1, 16>}, {pipeline_mode = #tpu.pipeline_mode<synchronous>, transform_indices = @transform_5, window_bounds = array<i64: 1, 16>}, {pipeline_mode = #tpu.pipeline_mode<synchronous>, transform_indices = @transform_6, window_bounds = array<i64: 16, 128>}, {pipeline_mode = #tpu.pipeline_mode<synchronous>, transform_indices = @transform_7, window_bounds = array<i64: 1, 128>}, {pipeline_mode = #tpu.pipeline_mode<synchronous>, transform_indices = @transform_8, window_bounds = array<i64: 128, 128>}, {transform_indices = @transform_9, window_bounds = array<i64: 1, 8, 128>}]} {
    %c0 = arith.constant 0 : index
    %c0_0 = arith.constant 0 : index
    %c0_1 = arith.constant 0 : index
    %0 = vector.load %arg2[%c0, %c0_0, %c0_1] : memref<1x8x32xf32, #tpu.memory_space<vmem>>, vector<1x8x32xf32>
    %1 = vector.shape_cast %0 : vector<1x8x32xf32> to vector<8x32xf32>
    %2 = arith.truncf %1 : vector<8x32xf32> to vector<8x32xbf16>
    %c0_2 = arith.constant 0 : index
    %c0_3 = arith.constant 0 : index
    %3 = vector.load %arg3[%c0_2, %c0_3] : memref<32x16xbf16, #tpu.memory_space<vmem>>, vector<32x16xbf16>
    %cst = arith.constant dense<0.000000e+00> : vector<8x16xf32>
    %4 = tpu.matmul %2, %3, %cst {dimension_numbers = #tpu.dot_dimension_numbers<[1], [0], [0], [1], [0, 0, 1, 1], [], []>} : vector<8x32xbf16>, vector<32x16xbf16>, vector<8x16xf32> -> vector<8x16xf32>
    %c0_4 = arith.constant 0 : index
    %c0_5 = arith.constant 0 : index
    %5 = vector.load %arg4[%c0_4, %c0_5] : memref<1x16xf32, #tpu.memory_space<vmem>>, vector<1x16xf32>
    %6 = vector.broadcast %5 : vector<1x16xf32> to vector<8x16xf32>
    %7 = arith.addf %4, %6 : vector<8x16xf32>
    %cst_6 = arith.constant dense<0.000000e+00> : vector<8xf32>
    %8 = vector.multi_reduction <add>, %7, %cst_6 [1] : vector<8x16xf32> to vector<8xf32>
    %9 = vector.shape_cast %8 : vector<8xf32> to vector<8x1xf32>
    %cst_7 = arith.constant 1.600000e+01 : f32
    %10 = vector.broadcast %cst_7 : f32 to vector<8x1xf32>
    %11 = arith.divf %9, %10 : vector<8x1xf32>
    %12 = vector.broadcast %11 : vector<8x1xf32> to vector<8x16xf32>
    %13 = arith.subf %7, %12 : vector<8x16xf32>
    %14 = arith.mulf %13, %13 : vector<8x16xf32>
    %cst_8 = arith.constant dense<0.000000e+00> : vector<8xf32>
    %15 = vector.multi_reduction <add>, %14, %cst_8 [1] : vector<8x16xf32> to vector<8xf32>
    %16 = vector.shape_cast %15 : vector<8xf32> to vector<8x1xf32>
    %cst_9 = arith.constant 1.600000e+01 : f32
    %17 = vector.broadcast %cst_9 : f32 to vector<8x1xf32>
    %18 = arith.divf %16, %17 : vector<8x1xf32>
    %19 = vector.broadcast %11 : vector<8x1xf32> to vector<8x16xf32>
    %20 = arith.subf %7, %19 : vector<8x16xf32>
    %cst_10 = arith.constant 9.99999974E-6 : f32
    %21 = vector.broadcast %cst_10 : f32 to vector<8x1xf32>
    %22 = arith.addf %18, %21 : vector<8x1xf32>
    %23 = math.rsqrt %22 : vector<8x1xf32>
    %24 = vector.broadcast %23 : vector<8x1xf32> to vector<8x16xf32>
    %25 = arith.mulf %20, %24 : vector<8x16xf32>
    %c0_11 = arith.constant 0 : index
    %c0_12 = arith.constant 0 : index
    %26 = vector.load %arg5[%c0_11, %c0_12] : memref<1x16xf32, #tpu.memory_space<vmem>>, vector<1x16xf32>
    %27 = vector.broadcast %26 : vector<1x16xf32> to vector<8x16xf32>
    %28 = arith.mulf %25, %27 : vector<8x16xf32>
    %c0_13 = arith.constant 0 : index
    %c0_14 = arith.constant 0 : index
    %29 = vector.load %arg6[%c0_13, %c0_14] : memref<1x16xf32, #tpu.memory_space<vmem>>, vector<1x16xf32>
    %30 = vector.broadcast %29 : vector<1x16xf32> to vector<8x16xf32>
    %31 = arith.addf %28, %30 : vector<8x16xf32>
    %cst_15 = arith.constant 0.000000e+00 : f32
    %32 = vector.broadcast %cst_15 : f32 to vector<8x16xf32>
    %33 = arith.maximumf %31, %32 : vector<8x16xf32>
    %34 = arith.truncf %33 : vector<8x16xf32> to vector<8x16xbf16>
    %c0_16 = arith.constant 0 : index
    %c0_17 = arith.constant 0 : index
    %35 = vector.load %arg7[%c0_16, %c0_17] : memref<16x128xbf16, #tpu.memory_space<vmem>>, vector<16x128xbf16>
    %cst_18 = arith.constant dense<0.000000e+00> : vector<8x128xf32>
    %36 = tpu.matmul %34, %35, %cst_18 {dimension_numbers = #tpu.dot_dimension_numbers<[1], [0], [0], [1], [0, 0, 1, 1], [], []>} : vector<8x16xbf16>, vector<16x128xbf16>, vector<8x128xf32> -> vector<8x128xf32>
    %c0_19 = arith.constant 0 : index
    %c0_20 = arith.constant 0 : index
    %37 = vector.load %arg8[%c0_19, %c0_20] : memref<1x128xf32, #tpu.memory_space<vmem>>, vector<1x128xf32>
    %38 = vector.broadcast %37 : vector<1x128xf32> to vector<8x128xf32>
    %39 = arith.addf %36, %38 : vector<8x128xf32>
    %c0_21 = arith.constant 0 : index
    %c0_22 = arith.constant 0 : index
    %c0_23 = arith.constant 0 : index
    %40 = vector.load %arg1[%c0_21, %c0_22, %c0_23] : memref<1x8x1xi32, #tpu.memory_space<vmem>>, vector<1x8x1xi32>
    %41 = vector.shape_cast %40 : vector<1x8x1xi32> to vector<8x1xi32>
    %42 = tpu.iota {dimensions = array<i32: 1>} : vector<8x128xi32>
    %43 = vector.broadcast %41 : vector<8x1xi32> to vector<8x128xi32>
    %44 = arith.cmpi eq, %42, %43 : vector<8x128xi32>
    %45 = arith.extui %44 : vector<8x128xi1> to vector<8x128xi32>
    %46 = arith.sitofp %45 : vector<8x128xi32> to vector<8x128xf32>
    %c0_24 = arith.constant 0 : index
    %c0_25 = arith.constant 0 : index
    %47 = vector.load %arg9[%c0_24, %c0_25] : memref<128x128xf32, #tpu.memory_space<vmem>>, vector<128x128xf32>
    %cst_26 = arith.constant dense<0.000000e+00> : vector<8x128xf32>
    %48 = tpu.matmul %46, %47, %cst_26 {dimension_numbers = #tpu.dot_dimension_numbers<[1], [0], [0], [1], [0, 0, 1, 1], [], []>} : vector<8x128xf32>, vector<128x128xf32>, vector<8x128xf32> -> vector<8x128xf32>
    %cst_27 = arith.constant 5.000000e-01 : f32
    %49 = vector.broadcast %cst_27 : f32 to vector<8x128xf32>
    %50 = arith.cmpf ogt, %48, %49 : vector<8x128xf32>
    %cst_28 = arith.constant -6.000000e+04 : f32
    %51 = vector.broadcast %cst_28 : f32 to vector<8x128xf32>
    %52 = arith.select %50, %39, %51 : vector<8x128xi1>, vector<8x128xf32>
    %c0_29 = arith.constant 0 : index
    %c0_30 = arith.constant 0 : index
    %c0_31 = arith.constant 0 : index
    %53 = vector.load %arg10[%c0_29, %c0_30, %c0_31] : memref<1x8x128xf32, #tpu.memory_space<vmem>>, vector<1x8x128xf32>
    %54 = vector.shape_cast %53 : vector<1x8x128xf32> to vector<8x128xf32>
    %55 = vector.shape_cast %52 : vector<8x128xf32> to vector<1x8x128xf32>
    tpu.vector_store %arg10[%c0_29, %c0_30, %c0_31], %55 {strides = array<i32>} : memref<1x8x128xf32, #tpu.memory_space<vmem>>, vector<1x8x128xf32>,
    return
  }
  func.func @transform_0(%arg0: i32) -> (i32, i32, i32) {
    %c0_i32 = arith.constant 0 : i32
    %c0_i32_0 = arith.constant 0 : i32
    %c0_i32_1 = arith.constant 0 : i32
    return %arg0, %c0_i32, %c0_i32_0 : i32, i32, i32
  }
  func.func @transform_1(%arg0: i32) -> (i32, i32, i32) {
    %c0_i32 = arith.constant 0 : i32
    %c0_i32_0 = arith.constant 0 : i32
    %c0_i32_1 = arith.constant 0 : i32
    return %arg0, %c0_i32, %c0_i32_0 : i32, i32, i32
  }
  func.func @transform_2(%arg0: i32) -> (i32, i32) {
    %c0_i32 = arith.constant 0 : i32
    %c0_i32_0 = arith.constant 0 : i32
    %c0_i32_1 = arith.constant 0 : i32
    return %c0_i32, %c0_i32_0 : i32, i32
  }
  func.func @transform_3(%arg0: i32) -> (i32, i32) {
    %c0_i32 = arith.constant 0 : i32
    %c0_i32_0 = arith.constant 0 : i32
    %c0_i32_1 = arith.constant 0 : i32
    return %c0_i32, %c0_i32_0 : i32, i32
  }
  func.func @transform_4(%arg0: i32) -> (i32, i32) {
    %c0_i32 = arith.constant 0 : i32
    %c0_i32_0 = arith.constant 0 : i32
    %c0_i32_1 = arith.constant 0 : i32
    return %c0_i32, %c0_i32_0 : i32, i32
  }
  func.func @transform_5(%arg0: i32) -> (i32, i32) {
    %c0_i32 = arith.constant 0 : i32
    %c0_i32_0 = arith.constant 0 : i32
    %c0_i32_1 = arith.constant 0 : i32
    return %c0_i32, %c0_i32_0 : i32, i32
  }
  func.func @transform_6(%arg0: i32) -> (i32, i32) {
    %c0_i32 = arith.constant 0 : i32
    %c0_i32_0 = arith.constant 0 : i32
    %c0_i32_1 = arith.constant 0 : i32
    return %c0_i32, %c0_i32_0 : i32, i32
  }
  func.func @transform_7(%arg0: i32) -> (i32, i32) {
    %c0_i32 = arith.constant 0 : i32
    %c0_i32_0 = arith.constant 0 : i32
    %c0_i32_1 = arith.constant 0 : i32
    return %c0_i32, %c0_i32_0 : i32, i32
  }
  func.func @transform_8(%arg0: i32) -> (i32, i32) {
    %c0_i32 = arith.constant 0 : i32
    %c0_i32_0 = arith.constant 0 : i32
    %c0_i32_1 = arith.constant 0 : i32
    return %c0_i32, %c0_i32_0 : i32, i32
  }
  func.func @transform_9(%arg0: i32) -> (i32, i32, i32) {
    %c0_i32 = arith.constant 0 : i32
    %c0_i32_0 = arith.constant 0 : i32
    %c0_i32_1 = arith.constant 0 : i32
    return %arg0, %c0_i32, %c0_i32_0 : i32, i32, i32
  }
}

module attributes {stable_mosaic.version = 11 : i64} {
  func.func @_encoder_stack_kernel(%arg0: i32, %arg1: i32, %arg2: memref<1x1x8xi32, #tpu.memory_space<vmem>>, %arg3: memref<1x8x32xf32, #tpu.memory_space<vmem>>, %arg4: memref<1x32x96xbf16, #tpu.memory_space<vmem>>, %arg5: memref<1x1x96xf32, #tpu.memory_space<vmem>>, %arg6: memref<1x32x32xbf16, #tpu.memory_space<vmem>>, %arg7: memref<1x1x32xf32, #tpu.memory_space<vmem>>, %arg8: memref<1x1x32xf32, #tpu.memory_space<vmem>>, %arg9: memref<1x1x32xf32, #tpu.memory_space<vmem>>, %arg10: memref<1x32x128xbf16, #tpu.memory_space<vmem>>, %arg11: memref<1x1x128xf32, #tpu.memory_space<vmem>>, %arg12: memref<1x4x32x64xbf16, #tpu.memory_space<vmem>>, %arg13: memref<1x4x1x64xf32, #tpu.memory_space<vmem>>, %arg14: memref<1x4x64x32xbf16, #tpu.memory_space<vmem>>, %arg15: memref<1x4x1x32xf32, #tpu.memory_space<vmem>>, %arg16: memref<1x1x32xf32, #tpu.memory_space<vmem>>, %arg17: memref<1x1x32xf32, #tpu.memory_space<vmem>>, %arg18: memref<1x8x32xf32, #tpu.memory_space<vmem>>, %arg19: memref<1x1x8x128xf32, #tpu.memory_space<vmem>>, %arg20: memref<8x32xf32, #tpu.memory_space<vmem>>) attributes {dimension_semantics = [#tpu.dimension_semantics<parallel>, #tpu.dimension_semantics<arbitrary>], iteration_bounds = array<i64: 2, 2>, scalar_prefetch = 0 : i64, scratch_operands = 1 : i64, tpu.core_type = #tpu.core_type<tc>, window_params = [{transform_indices = @transform_0, window_bounds = array<i64: 1, 1, 8>}, {transform_indices = @transform_1, window_bounds = array<i64: 1, 8, 32>}, {transform_indices = @transform_2, window_bounds = array<i64: 1, 32, 96>}, {transform_indices = @transform_3, window_bounds = array<i64: 1, 1, 96>}, {transform_indices = @transform_4, window_bounds = array<i64: 1, 32, 32>}, {transform_indices = @transform_5, window_bounds = array<i64: 1, 1, 32>}, {transform_indices = @transform_6, window_bounds = array<i64: 1, 1, 32>}, {transform_indices = @transform_7, window_bounds = array<i64: 1, 1, 32>}, {transform_indices = @transform_8, window_bounds = array<i64: 1, 32, 128>}, {transform_indices = @transform_9, window_bounds = array<i64: 1, 1, 128>}, {transform_indices = @transform_10, window_bounds = array<i64: 1, 4, 32, 64>}, {transform_indices = @transform_11, window_bounds = array<i64: 1, 4, 1, 64>}, {transform_indices = @transform_12, window_bounds = array<i64: 1, 4, 64, 32>}, {transform_indices = @transform_13, window_bounds = array<i64: 1, 4, 1, 32>}, {transform_indices = @transform_14, window_bounds = array<i64: 1, 1, 32>}, {transform_indices = @transform_15, window_bounds = array<i64: 1, 1, 32>}, {transform_indices = @transform_16, window_bounds = array<i64: 1, 8, 32>}, {transform_indices = @transform_17, window_bounds = array<i64: 1, 1, 8, 128>}]} {
    %c0_i32 = arith.constant 0 : i32
    %0 = arith.cmpi eq, %arg1, %c0_i32 : i32
    %1 = arith.extui %0 : i1 to i32
    %c0_i32_0 = arith.constant 0 : i32
    %2 = arith.cmpi ne, %1, %c0_i32_0 : i32
    scf.if %2 {
      %c0_168 = arith.constant 0 : index
      %c0_169 = arith.constant 0 : index
      %c0_170 = arith.constant 0 : index
      %338 = vector.load %arg3[%c0_168, %c0_169, %c0_170] : memref<1x8x32xf32, #tpu.memory_space<vmem>>, vector<1x8x32xf32>
      %339 = vector.shape_cast %338 : vector<1x8x32xf32> to vector<8x32xf32>
      %c0_171 = arith.constant 0 : index
      %c0_172 = arith.constant 0 : index
      %340 = vector.load %arg20[%c0_171, %c0_172] : memref<8x32xf32, #tpu.memory_space<vmem>>, vector<8x32xf32>
      tpu.vector_store %arg20[%c0_171, %c0_172], %339 {strides = array<i32>} : memref<8x32xf32, #tpu.memory_space<vmem>>, vector<8x32xf32>,
    } else {
    }
    %c0 = arith.constant 0 : index
    %c0_1 = arith.constant 0 : index
    %3 = vector.load %arg20[%c0, %c0_1] : memref<8x32xf32, #tpu.memory_space<vmem>>, vector<8x32xf32>
    %c0_2 = arith.constant 0 : index
    %c0_3 = arith.constant 0 : index
    %c0_4 = arith.constant 0 : index
    %4 = vector.load %arg2[%c0_2, %c0_3, %c0_4] : memref<1x1x8xi32, #tpu.memory_space<vmem>>, vector<1x1x8xi32>
    %5 = vector.shape_cast %4 : vector<1x1x8xi32> to vector<1x8xi32>
    %c2_i32 = arith.constant 2 : i32
    %6 = vector.broadcast %c2_i32 : i32 to vector<1x8xi32>
    %7 = arith.cmpi eq, %5, %6 : vector<1x8xi32>
    %cst = arith.constant -1.000000e+09 : f32
    %cst_5 = arith.constant 0.000000e+00 : f32
    %8 = vector.broadcast %cst : f32 to vector<1x8xf32>
    %9 = vector.broadcast %cst_5 : f32 to vector<1x8xf32>
    %10 = arith.select %7, %8, %9 : vector<1x8xi1>, vector<1x8xf32>
    %11 = arith.truncf %3 : vector<8x32xf32> to vector<8x32xbf16>
    %c0_6 = arith.constant 0 : index
    %c0_7 = arith.constant 0 : index
    %c0_8 = arith.constant 0 : index
    %12 = vector.load %arg4[%c0_6, %c0_7, %c0_8] : memref<1x32x96xbf16, #tpu.memory_space<vmem>>, vector<1x32x96xbf16>
    %13 = vector.shape_cast %12 : vector<1x32x96xbf16> to vector<32x96xbf16>
    %cst_9 = arith.constant dense<0.000000e+00> : vector<8x96xf32>
    %14 = tpu.matmul %11, %13, %cst_9 {dimension_numbers = #tpu.dot_dimension_numbers<[1], [0], [0], [1], [0, 0, 1, 1], [], []>} : vector<8x32xbf16>, vector<32x96xbf16>, vector<8x96xf32> -> vector<8x96xf32>
    %c0_10 = arith.constant 0 : index
    %c0_11 = arith.constant 0 : index
    %c0_12 = arith.constant 0 : index
    %15 = vector.load %arg5[%c0_10, %c0_11, %c0_12] : memref<1x1x96xf32, #tpu.memory_space<vmem>>, vector<1x1x96xf32>
    %16 = vector.shape_cast %15 : vector<1x1x96xf32> to vector<1x96xf32>
    %17 = vector.broadcast %16 : vector<1x96xf32> to vector<8x96xf32>
    %18 = arith.addf %14, %17 : vector<8x96xf32>
    %c0_13 = arith.constant 0 : index
    %c0_14 = arith.constant 0 : index
    %c0_15 = arith.constant 0 : index
    %19 = vector.load %arg6[%c0_13, %c0_14, %c0_15] : memref<1x32x32xbf16, #tpu.memory_space<vmem>>, vector<1x32x32xbf16>
    %20 = vector.shape_cast %19 : vector<1x32x32xbf16> to vector<32x32xbf16>
    %cst_16 = arith.constant 0.000000e+00 : f32
    %21 = vector.broadcast %cst_16 : f32 to vector<8x32xf32>
    %22 = vector.extract_strided_slice %18 {offsets = [0, 0], sizes = [8, 8], strides = [1, 1]} : vector<8x96xf32> to vector<8x8xf32>
    %23 = arith.truncf %22 : vector<8x8xf32> to vector<8x8xbf16>
    %24 = vector.extract_strided_slice %18 {offsets = [0, 32], sizes = [8, 8], strides = [1, 1]} : vector<8x96xf32> to vector<8x8xf32>
    %25 = arith.truncf %24 : vector<8x8xf32> to vector<8x8xbf16>
    %26 = vector.extract_strided_slice %18 {offsets = [0, 64], sizes = [8, 8], strides = [1, 1]} : vector<8x96xf32> to vector<8x8xf32>
    %27 = arith.truncf %26 : vector<8x8xf32> to vector<8x8xbf16>
    %cst_17 = arith.constant dense<0.000000e+00> : vector<8x8xf32>
    %28 = tpu.matmul %23, %25, %cst_17 {dimension_numbers = #tpu.dot_dimension_numbers<[1], [1], [0], [0], [0, 0, 1, 0], [], []>} : vector<8x8xbf16>, vector<8x8xbf16>, vector<8x8xf32> -> vector<8x8xf32>
    %cst_18 = arith.constant 0.353553385 : f32
    %29 = vector.broadcast %cst_18 : f32 to vector<8x8xf32>
    %30 = arith.mulf %28, %29 : vector<8x8xf32>
    %31 = vector.broadcast %10 : vector<1x8xf32> to vector<8x8xf32>
    %32 = arith.addf %30, %31 : vector<8x8xf32>
    %cst_19 = arith.constant dense<0xFF800000> : vector<8xf32>
    %33 = vector.multi_reduction <maximumf>, %32, %cst_19 [1] : vector<8x8xf32> to vector<8xf32>
    %34 = vector.shape_cast %33 : vector<8xf32> to vector<8x1xf32>
    %35 = vector.broadcast %34 : vector<8x1xf32> to vector<8x8xf32>
    %36 = arith.subf %32, %35 : vector<8x8xf32>
    %37 = math.exp %36 : vector<8x8xf32>
    %cst_20 = arith.constant dense<0.000000e+00> : vector<8xf32>
    %38 = vector.multi_reduction <add>, %37, %cst_20 [1] : vector<8x8xf32> to vector<8xf32>
    %39 = vector.shape_cast %38 : vector<8xf32> to vector<8x1xf32>
    %40 = tpu.reciprocal %39 {approx = true} : vector<8x1xf32> -> vector<8x1xf32>
    %41 = vector.broadcast %40 : vector<8x1xf32> to vector<8x8xf32>
    %42 = arith.mulf %37, %41 : vector<8x8xf32>
    %43 = arith.truncf %42 : vector<8x8xf32> to vector<8x8xbf16>
    %cst_21 = arith.constant dense<0.000000e+00> : vector<8x8xf32>
    %44 = tpu.matmul %43, %27, %cst_21 {dimension_numbers = #tpu.dot_dimension_numbers<[1], [0], [0], [1], [0, 0, 1, 1], [], []>} : vector<8x8xbf16>, vector<8x8xbf16>, vector<8x8xf32> -> vector<8x8xf32>
    %45 = arith.truncf %44 : vector<8x8xf32> to vector<8x8xbf16>
    %46 = vector.extract_strided_slice %20 {offsets = [0, 0], sizes = [8, 32], strides = [1, 1]} : vector<32x32xbf16> to vector<8x32xbf16>
    %cst_22 = arith.constant dense<0.000000e+00> : vector<8x32xf32>
    %47 = tpu.matmul %45, %46, %cst_22 {dimension_numbers = #tpu.dot_dimension_numbers<[1], [0], [0], [1], [0, 0, 1, 1], [], []>} : vector<8x8xbf16>, vector<8x32xbf16>, vector<8x32xf32> -> vector<8x32xf32>
    %48 = arith.addf %21, %47 : vector<8x32xf32>
    %49 = vector.extract_strided_slice %18 {offsets = [0, 8], sizes = [8, 8], strides = [1, 1]} : vector<8x96xf32> to vector<8x8xf32>
    %50 = arith.truncf %49 : vector<8x8xf32> to vector<8x8xbf16>
    %51 = vector.extract_strided_slice %18 {offsets = [0, 40], sizes = [8, 8], strides = [1, 1]} : vector<8x96xf32> to vector<8x8xf32>
    %52 = arith.truncf %51 : vector<8x8xf32> to vector<8x8xbf16>
    %53 = vector.extract_strided_slice %18 {offsets = [0, 72], sizes = [8, 8], strides = [1, 1]} : vector<8x96xf32> to vector<8x8xf32>
    %54 = arith.truncf %53 : vector<8x8xf32> to vector<8x8xbf16>
    %cst_23 = arith.constant dense<0.000000e+00> : vector<8x8xf32>
    %55 = tpu.matmul %50, %52, %cst_23 {dimension_numbers = #tpu.dot_dimension_numbers<[1], [1], [0], [0], [0, 0, 1, 0], [], []>} : vector<8x8xbf16>, vector<8x8xbf16>, vector<8x8xf32> -> vector<8x8xf32>
    %cst_24 = arith.constant 0.353553385 : f32
    %56 = vector.broadcast %cst_24 : f32 to vector<8x8xf32>
    %57 = arith.mulf %55, %56 : vector<8x8xf32>
    %58 = vector.broadcast %10 : vector<1x8xf32> to vector<8x8xf32>
    %59 = arith.addf %57, %58 : vector<8x8xf32>
    %cst_25 = arith.constant dense<0xFF800000> : vector<8xf32>
    %60 = vector.multi_reduction <maximumf>, %59, %cst_25 [1] : vector<8x8xf32> to vector<8xf32>
    %61 = vector.shape_cast %60 : vector<8xf32> to vector<8x1xf32>
    %62 = vector.broadcast %61 : vector<8x1xf32> to vector<8x8xf32>
    %63 = arith.subf %59, %62 : vector<8x8xf32>
    %64 = math.exp %63 : vector<8x8xf32>
    %cst_26 = arith.constant dense<0.000000e+00> : vector<8xf32>
    %65 = vector.multi_reduction <add>, %64, %cst_26 [1] : vector<8x8xf32> to vector<8xf32>
    %66 = vector.shape_cast %65 : vector<8xf32> to vector<8x1xf32>
    %67 = tpu.reciprocal %66 {approx = true} : vector<8x1xf32> -> vector<8x1xf32>
    %68 = vector.broadcast %67 : vector<8x1xf32> to vector<8x8xf32>
    %69 = arith.mulf %64, %68 : vector<8x8xf32>
    %70 = arith.truncf %69 : vector<8x8xf32> to vector<8x8xbf16>
    %cst_27 = arith.constant dense<0.000000e+00> : vector<8x8xf32>
    %71 = tpu.matmul %70, %54, %cst_27 {dimension_numbers = #tpu.dot_dimension_numbers<[1], [0], [0], [1], [0, 0, 1, 1], [], []>} : vector<8x8xbf16>, vector<8x8xbf16>, vector<8x8xf32> -> vector<8x8xf32>
    %72 = arith.truncf %71 : vector<8x8xf32> to vector<8x8xbf16>
    %73 = vector.extract_strided_slice %20 {offsets = [8, 0], sizes = [8, 32], strides = [1, 1]} : vector<32x32xbf16> to vector<8x32xbf16>
    %cst_28 = arith.constant dense<0.000000e+00> : vector<8x32xf32>
    %74 = tpu.matmul %72, %73, %cst_28 {dimension_numbers = #tpu.dot_dimension_numbers<[1], [0], [0], [1], [0, 0, 1, 1], [], []>} : vector<8x8xbf16>, vector<8x32xbf16>, vector<8x32xf32> -> vector<8x32xf32>
    %75 = arith.addf %48, %74 : vector<8x32xf32>
    %76 = vector.extract_strided_slice %18 {offsets = [0, 16], sizes = [8, 8], strides = [1, 1]} : vector<8x96xf32> to vector<8x8xf32>
    %77 = arith.truncf %76 : vector<8x8xf32> to vector<8x8xbf16>
    %78 = vector.extract_strided_slice %18 {offsets = [0, 48], sizes = [8, 8], strides = [1, 1]} : vector<8x96xf32> to vector<8x8xf32>
    %79 = arith.truncf %78 : vector<8x8xf32> to vector<8x8xbf16>
    %80 = vector.extract_strided_slice %18 {offsets = [0, 80], sizes = [8, 8], strides = [1, 1]} : vector<8x96xf32> to vector<8x8xf32>
    %81 = arith.truncf %80 : vector<8x8xf32> to vector<8x8xbf16>
    %cst_29 = arith.constant dense<0.000000e+00> : vector<8x8xf32>
    %82 = tpu.matmul %77, %79, %cst_29 {dimension_numbers = #tpu.dot_dimension_numbers<[1], [1], [0], [0], [0, 0, 1, 0], [], []>} : vector<8x8xbf16>, vector<8x8xbf16>, vector<8x8xf32> -> vector<8x8xf32>
    %cst_30 = arith.constant 0.353553385 : f32
    %83 = vector.broadcast %cst_30 : f32 to vector<8x8xf32>
    %84 = arith.mulf %82, %83 : vector<8x8xf32>
    %85 = vector.broadcast %10 : vector<1x8xf32> to vector<8x8xf32>
    %86 = arith.addf %84, %85 : vector<8x8xf32>
    %cst_31 = arith.constant dense<0xFF800000> : vector<8xf32>
    %87 = vector.multi_reduction <maximumf>, %86, %cst_31 [1] : vector<8x8xf32> to vector<8xf32>
    %88 = vector.shape_cast %87 : vector<8xf32> to vector<8x1xf32>
    %89 = vector.broadcast %88 : vector<8x1xf32> to vector<8x8xf32>
    %90 = arith.subf %86, %89 : vector<8x8xf32>
    %91 = math.exp %90 : vector<8x8xf32>
    %cst_32 = arith.constant dense<0.000000e+00> : vector<8xf32>
    %92 = vector.multi_reduction <add>, %91, %cst_32 [1] : vector<8x8xf32> to vector<8xf32>
    %93 = vector.shape_cast %92 : vector<8xf32> to vector<8x1xf32>
    %94 = tpu.reciprocal %93 {approx = true} : vector<8x1xf32> -> vector<8x1xf32>
    %95 = vector.broadcast %94 : vector<8x1xf32> to vector<8x8xf32>
    %96 = arith.mulf %91, %95 : vector<8x8xf32>
    %97 = arith.truncf %96 : vector<8x8xf32> to vector<8x8xbf16>
    %cst_33 = arith.constant dense<0.000000e+00> : vector<8x8xf32>
    %98 = tpu.matmul %97, %81, %cst_33 {dimension_numbers = #tpu.dot_dimension_numbers<[1], [0], [0], [1], [0, 0, 1, 1], [], []>} : vector<8x8xbf16>, vector<8x8xbf16>, vector<8x8xf32> -> vector<8x8xf32>
    %99 = arith.truncf %98 : vector<8x8xf32> to vector<8x8xbf16>
    %100 = vector.extract_strided_slice %20 {offsets = [16, 0], sizes = [8, 32], strides = [1, 1]} : vector<32x32xbf16> to vector<8x32xbf16>
    %cst_34 = arith.constant dense<0.000000e+00> : vector<8x32xf32>
    %101 = tpu.matmul %99, %100, %cst_34 {dimension_numbers = #tpu.dot_dimension_numbers<[1], [0], [0], [1], [0, 0, 1, 1], [], []>} : vector<8x8xbf16>, vector<8x32xbf16>, vector<8x32xf32> -> vector<8x32xf32>
    %102 = arith.addf %75, %101 : vector<8x32xf32>
    %103 = vector.extract_strided_slice %18 {offsets = [0, 24], sizes = [8, 8], strides = [1, 1]} : vector<8x96xf32> to vector<8x8xf32>
    %104 = arith.truncf %103 : vector<8x8xf32> to vector<8x8xbf16>
    %105 = vector.extract_strided_slice %18 {offsets = [0, 56], sizes = [8, 8], strides = [1, 1]} : vector<8x96xf32> to vector<8x8xf32>
    %106 = arith.truncf %105 : vector<8x8xf32> to vector<8x8xbf16>
    %107 = vector.extract_strided_slice %18 {offsets = [0, 88], sizes = [8, 8], strides = [1, 1]} : vector<8x96xf32> to vector<8x8xf32>
    %108 = arith.truncf %107 : vector<8x8xf32> to vector<8x8xbf16>
    %cst_35 = arith.constant dense<0.000000e+00> : vector<8x8xf32>
    %109 = tpu.matmul %104, %106, %cst_35 {dimension_numbers = #tpu.dot_dimension_numbers<[1], [1], [0], [0], [0, 0, 1, 0], [], []>} : vector<8x8xbf16>, vector<8x8xbf16>, vector<8x8xf32> -> vector<8x8xf32>
    %cst_36 = arith.constant 0.353553385 : f32
    %110 = vector.broadcast %cst_36 : f32 to vector<8x8xf32>
    %111 = arith.mulf %109, %110 : vector<8x8xf32>
    %112 = vector.broadcast %10 : vector<1x8xf32> to vector<8x8xf32>
    %113 = arith.addf %111, %112 : vector<8x8xf32>
    %cst_37 = arith.constant dense<0xFF800000> : vector<8xf32>
    %114 = vector.multi_reduction <maximumf>, %113, %cst_37 [1] : vector<8x8xf32> to vector<8xf32>
    %115 = vector.shape_cast %114 : vector<8xf32> to vector<8x1xf32>
    %116 = vector.broadcast %115 : vector<8x1xf32> to vector<8x8xf32>
    %117 = arith.subf %113, %116 : vector<8x8xf32>
    %118 = math.exp %117 : vector<8x8xf32>
    %cst_38 = arith.constant dense<0.000000e+00> : vector<8xf32>
    %119 = vector.multi_reduction <add>, %118, %cst_38 [1] : vector<8x8xf32> to vector<8xf32>
    %120 = vector.shape_cast %119 : vector<8xf32> to vector<8x1xf32>
    %121 = tpu.reciprocal %120 {approx = true} : vector<8x1xf32> -> vector<8x1xf32>
    %122 = vector.broadcast %121 : vector<8x1xf32> to vector<8x8xf32>
    %123 = arith.mulf %118, %122 : vector<8x8xf32>
    %124 = arith.truncf %123 : vector<8x8xf32> to vector<8x8xbf16>
    %cst_39 = arith.constant dense<0.000000e+00> : vector<8x8xf32>
    %125 = tpu.matmul %124, %108, %cst_39 {dimension_numbers = #tpu.dot_dimension_numbers<[1], [0], [0], [1], [0, 0, 1, 1], [], []>} : vector<8x8xbf16>, vector<8x8xbf16>, vector<8x8xf32> -> vector<8x8xf32>
    %126 = arith.truncf %125 : vector<8x8xf32> to vector<8x8xbf16>
    %127 = vector.extract_strided_slice %20 {offsets = [24, 0], sizes = [8, 32], strides = [1, 1]} : vector<32x32xbf16> to vector<8x32xbf16>
    %cst_40 = arith.constant dense<0.000000e+00> : vector<8x32xf32>
    %128 = tpu.matmul %126, %127, %cst_40 {dimension_numbers = #tpu.dot_dimension_numbers<[1], [0], [0], [1], [0, 0, 1, 1], [], []>} : vector<8x8xbf16>, vector<8x32xbf16>, vector<8x32xf32> -> vector<8x32xf32>
    %129 = arith.addf %102, %128 : vector<8x32xf32>
    %c0_41 = arith.constant 0 : index
    %c0_42 = arith.constant 0 : index
    %c0_43 = arith.constant 0 : index
    %130 = vector.load %arg7[%c0_41, %c0_42, %c0_43] : memref<1x1x32xf32, #tpu.memory_space<vmem>>, vector<1x1x32xf32>
    %131 = vector.shape_cast %130 : vector<1x1x32xf32> to vector<1x32xf32>
    %132 = vector.broadcast %131 : vector<1x32xf32> to vector<8x32xf32>
    %133 = arith.addf %129, %132 : vector<8x32xf32>
    %134 = arith.addf %3, %133 : vector<8x32xf32>
    %cst_44 = arith.constant dense<0.000000e+00> : vector<8xf32>
    %135 = vector.multi_reduction <add>, %134, %cst_44 [1] : vector<8x32xf32> to vector<8xf32>
    %136 = vector.shape_cast %135 : vector<8xf32> to vector<8x1xf32>
    %cst_45 = arith.constant 3.200000e+01 : f32
    %137 = vector.broadcast %cst_45 : f32 to vector<8x1xf32>
    %138 = arith.divf %136, %137 : vector<8x1xf32>
    %139 = vector.broadcast %138 : vector<8x1xf32> to vector<8x32xf32>
    %140 = arith.subf %134, %139 : vector<8x32xf32>
    %141 = arith.mulf %140, %140 : vector<8x32xf32>
    %cst_46 = arith.constant dense<0.000000e+00> : vector<8xf32>
    %142 = vector.multi_reduction <add>, %141, %cst_46 [1] : vector<8x32xf32> to vector<8xf32>
    %143 = vector.shape_cast %142 : vector<8xf32> to vector<8x1xf32>
    %cst_47 = arith.constant 3.200000e+01 : f32
    %144 = vector.broadcast %cst_47 : f32 to vector<8x1xf32>
    %145 = arith.divf %143, %144 : vector<8x1xf32>
    %146 = vector.broadcast %138 : vector<8x1xf32> to vector<8x32xf32>
    %147 = arith.subf %134, %146 : vector<8x32xf32>
    %cst_48 = arith.constant 9.99999974E-6 : f32
    %148 = vector.broadcast %cst_48 : f32 to vector<8x1xf32>
    %149 = arith.addf %145, %148 : vector<8x1xf32>
    %150 = math.rsqrt %149 : vector<8x1xf32>
    %151 = vector.broadcast %150 : vector<8x1xf32> to vector<8x32xf32>
    %152 = arith.mulf %147, %151 : vector<8x32xf32>
    %c0_49 = arith.constant 0 : index
    %c0_50 = arith.constant 0 : index
    %c0_51 = arith.constant 0 : index
    %153 = vector.load %arg8[%c0_49, %c0_50, %c0_51] : memref<1x1x32xf32, #tpu.memory_space<vmem>>, vector<1x1x32xf32>
    %154 = vector.shape_cast %153 : vector<1x1x32xf32> to vector<1x32xf32>
    %155 = vector.broadcast %154 : vector<1x32xf32> to vector<8x32xf32>
    %156 = arith.mulf %152, %155 : vector<8x32xf32>
    %c0_52 = arith.constant 0 : index
    %c0_53 = arith.constant 0 : index
    %c0_54 = arith.constant 0 : index
    %157 = vector.load %arg9[%c0_52, %c0_53, %c0_54] : memref<1x1x32xf32, #tpu.memory_space<vmem>>, vector<1x1x32xf32>
    %158 = vector.shape_cast %157 : vector<1x1x32xf32> to vector<1x32xf32>
    %159 = vector.broadcast %158 : vector<1x32xf32> to vector<8x32xf32>
    %160 = arith.addf %156, %159 : vector<8x32xf32>
    %161 = arith.truncf %160 : vector<8x32xf32> to vector<8x32xbf16>
    %c0_55 = arith.constant 0 : index
    %c0_56 = arith.constant 0 : index
    %c0_57 = arith.constant 0 : index
    %162 = vector.load %arg10[%c0_55, %c0_56, %c0_57] : memref<1x32x128xbf16, #tpu.memory_space<vmem>>, vector<1x32x128xbf16>
    %163 = vector.shape_cast %162 : vector<1x32x128xbf16> to vector<32x128xbf16>
    %cst_58 = arith.constant dense<0.000000e+00> : vector<8x128xf32>
    %164 = tpu.matmul %161, %163, %cst_58 {dimension_numbers = #tpu.dot_dimension_numbers<[1], [0], [0], [1], [0, 0, 1, 1], [], []>} : vector<8x32xbf16>, vector<32x128xbf16>, vector<8x128xf32> -> vector<8x128xf32>
    %c0_59 = arith.constant 0 : index
    %c0_60 = arith.constant 0 : index
    %c0_61 = arith.constant 0 : index
    %165 = vector.load %arg11[%c0_59, %c0_60, %c0_61] : memref<1x1x128xf32, #tpu.memory_space<vmem>>, vector<1x1x128xf32>
    %166 = vector.shape_cast %165 : vector<1x1x128xf32> to vector<1x128xf32>
    %167 = vector.broadcast %166 : vector<1x128xf32> to vector<8x128xf32>
    %168 = arith.addf %164, %167 : vector<8x128xf32>
    %c0_62 = arith.constant 0 : index
    %c0_63 = arith.constant 0 : index
    %c0_64 = arith.constant 0 : index
    %c0_65 = arith.constant 0 : index
    %169 = vector.load %arg19[%c0_62, %c0_63, %c0_64, %c0_65] : memref<1x1x8x128xf32, #tpu.memory_space<vmem>>, vector<1x1x8x128xf32>
    %170 = vector.shape_cast %169 : vector<1x1x8x128xf32> to vector<8x128xf32>
    %171 = vector.shape_cast %168 : vector<8x128xf32> to vector<1x1x8x128xf32>
    tpu.vector_store %arg19[%c0_62, %c0_63, %c0_64, %c0_65], %171 {strides = array<i32>} : memref<1x1x8x128xf32, #tpu.memory_space<vmem>>, vector<1x1x8x128xf32>,
    %172 = tpu.iota {dimensions = array<i32: 1>} : vector<8x128xi32>
    %173 = arith.sitofp %172 : vector<8x128xi32> to vector<8x128xf32>
    %cst_66 = arith.constant 0.000000e+00 : f32
    %174 = vector.broadcast %cst_66 : f32 to vector<8x128xf32>
    %cst_67 = arith.constant dense<0xFF800000> : vector<8xf32>
    %175 = vector.multi_reduction <maximumf>, %168, %cst_67 [1] : vector<8x128xf32> to vector<8xf32>
    %176 = vector.shape_cast %175 : vector<8xf32> to vector<8x1xf32>
    %177 = vector.broadcast %176 : vector<8x1xf32> to vector<8x128xf32>
    %178 = arith.cmpf oge, %168, %177 : vector<8x128xf32>
    %cst_68 = arith.constant 1.280000e+02 : f32
    %179 = vector.broadcast %cst_68 : f32 to vector<8x128xf32>
    %180 = arith.select %178, %173, %179 : vector<8x128xi1>, vector<8x128xf32>
    %cst_69 = arith.constant dense<0x7F800000> : vector<8xf32>
    %181 = vector.multi_reduction <minimumf>, %180, %cst_69 [1] : vector<8x128xf32> to vector<8xf32>
    %182 = vector.shape_cast %181 : vector<8xf32> to vector<8x1xf32>
    %183 = vector.broadcast %182 : vector<8x1xf32> to vector<8x128xf32>
    %184 = arith.cmpf oeq, %173, %183 : vector<8x128xf32>
    %185 = arith.extui %184 : vector<8x128xi1> to vector<8x128xi32>
    %186 = arith.sitofp %185 : vector<8x128xi32> to vector<8x128xf32>
    %187 = arith.addf %174, %186 : vector<8x128xf32>
    %cst_70 = arith.constant 0.000000e+00 : f32
    %188 = vector.broadcast %cst_70 : f32 to vector<8x128xf32>
    %189 = arith.cmpf ogt, %186, %188 : vector<8x128xf32>
    %cst_71 = arith.constant -3.000000e+38 : f32
    %190 = vector.broadcast %cst_71 : f32 to vector<8x128xf32>
    %191 = arith.select %189, %190, %168 : vector<8x128xi1>, vector<8x128xf32>
    %cst_72 = arith.constant dense<0xFF800000> : vector<8xf32>
    %192 = vector.multi_reduction <maximumf>, %191, %cst_72 [1] : vector<8x128xf32> to vector<8xf32>
    %193 = vector.shape_cast %192 : vector<8xf32> to vector<8x1xf32>
    %194 = vector.broadcast %193 : vector<8x1xf32> to vector<8x128xf32>
    %195 = arith.cmpf oge, %191, %194 : vector<8x128xf32>
    %cst_73 = arith.constant 1.280000e+02 : f32
    %196 = vector.broadcast %cst_73 : f32 to vector<8x128xf32>
    %197 = arith.select %195, %173, %196 : vector<8x128xi1>, vector<8x128xf32>
    %cst_74 = arith.constant dense<0x7F800000> : vector<8xf32>
    %198 = vector.multi_reduction <minimumf>, %197, %cst_74 [1] : vector<8x128xf32> to vector<8xf32>
    %199 = vector.shape_cast %198 : vector<8xf32> to vector<8x1xf32>
    %200 = vector.broadcast %199 : vector<8x1xf32> to vector<8x128xf32>
    %201 = arith.cmpf oeq, %173, %200 : vector<8x128xf32>
    %202 = arith.extui %201 : vector<8x128xi1> to vector<8x128xi32>
    %203 = arith.sitofp %202 : vector<8x128xi32> to vector<8x128xf32>
    %204 = arith.addf %187, %203 : vector<8x128xf32>
    %cst_75 = arith.constant 0.000000e+00 : f32
    %205 = vector.broadcast %cst_75 : f32 to vector<8x128xf32>
    %206 = arith.cmpf ogt, %204, %205 : vector<8x128xf32>
    %cst_76 = arith.constant -3.000000e+38 : f32
    %207 = vector.broadcast %cst_76 : f32 to vector<8x128xf32>
    %208 = arith.select %206, %168, %207 : vector<8x128xi1>, vector<8x128xf32>
    %cst_77 = arith.constant dense<0xFF800000> : vector<8xf32>
    %209 = vector.multi_reduction <maximumf>, %208, %cst_77 [1] : vector<8x128xf32> to vector<8xf32>
    %210 = vector.shape_cast %209 : vector<8xf32> to vector<8x1xf32>
    %211 = vector.broadcast %210 : vector<8x1xf32> to vector<8x128xf32>
    %212 = arith.subf %168, %211 : vector<8x128xf32>
    %213 = math.exp %212 : vector<8x128xf32>
    %cst_78 = arith.constant 0.000000e+00 : f32
    %214 = vector.broadcast %cst_78 : f32 to vector<8x128xf32>
    %215 = arith.select %206, %213, %214 : vector<8x128xi1>, vector<8x128xf32>
    %cst_79 = arith.constant dense<0.000000e+00> : vector<8xf32>
    %216 = vector.multi_reduction <add>, %215, %cst_79 [1] : vector<8x128xf32> to vector<8xf32>
    %217 = vector.shape_cast %216 : vector<8xf32> to vector<8x1xf32>
    %218 = tpu.reciprocal %217 {approx = true} : vector<8x1xf32> -> vector<8x1xf32>
    %219 = vector.broadcast %218 : vector<8x1xf32> to vector<8x128xf32>
    %220 = arith.mulf %215, %219 : vector<8x128xf32>
    %221 = arith.truncf %160 : vector<8x32xf32> to vector<8x32xbf16>
    %cst_80 = arith.constant 0.000000e+00 : f32
    %222 = vector.broadcast %cst_80 : f32 to vector<8x32xf32>
    %c0_81 = arith.constant 0 : index
    %c0_82 = arith.constant 0 : index
    %c0_83 = arith.constant 0 : index
    %c0_84 = arith.constant 0 : index
    %223 = vector.load %arg12[%c0_81, %c0_82, %c0_83, %c0_84] : memref<1x4x32x64xbf16, #tpu.memory_space<vmem>>, vector<1x1x32x64xbf16>
    %224 = vector.shape_cast %223 : vector<1x1x32x64xbf16> to vector<32x64xbf16>
    %cst_85 = arith.constant dense<0.000000e+00> : vector<8x64xf32>
    %225 = tpu.matmul %221, %224, %cst_85 {dimension_numbers = #tpu.dot_dimension_numbers<[1], [0], [0], [1], [0, 0, 1, 1], [], []>} : vector<8x32xbf16>, vector<32x64xbf16>, vector<8x64xf32> -> vector<8x64xf32>
    %c0_86 = arith.constant 0 : index
    %c0_87 = arith.constant 0 : index
    %c0_88 = arith.constant 0 : index
    %c0_89 = arith.constant 0 : index
    %226 = vector.load %arg13[%c0_86, %c0_87, %c0_88, %c0_89] : memref<1x4x1x64xf32, #tpu.memory_space<vmem>>, vector<1x1x1x64xf32>
    %227 = vector.shape_cast %226 : vector<1x1x1x64xf32> to vector<1x64xf32>
    %228 = vector.broadcast %227 : vector<1x64xf32> to vector<8x64xf32>
    %229 = arith.addf %225, %228 : vector<8x64xf32>
    %cst_90 = arith.constant 0.000000e+00 : f32
    %230 = vector.broadcast %cst_90 : f32 to vector<8x64xf32>
    %231 = arith.maximumf %229, %230 : vector<8x64xf32>
    %232 = arith.truncf %231 : vector<8x64xf32> to vector<8x64xbf16>
    %c0_91 = arith.constant 0 : index
    %c0_92 = arith.constant 0 : index
    %c0_93 = arith.constant 0 : index
    %c0_94 = arith.constant 0 : index
    %233 = vector.load %arg14[%c0_91, %c0_92, %c0_93, %c0_94] : memref<1x4x64x32xbf16, #tpu.memory_space<vmem>>, vector<1x1x64x32xbf16>
    %234 = vector.shape_cast %233 : vector<1x1x64x32xbf16> to vector<64x32xbf16>
    %cst_95 = arith.constant dense<0.000000e+00> : vector<8x32xf32>
    %235 = tpu.matmul %232, %234, %cst_95 {dimension_numbers = #tpu.dot_dimension_numbers<[1], [0], [0], [1], [0, 0, 1, 1], [], []>} : vector<8x64xbf16>, vector<64x32xbf16>, vector<8x32xf32> -> vector<8x32xf32>
    %c0_96 = arith.constant 0 : index
    %c0_97 = arith.constant 0 : index
    %c0_98 = arith.constant 0 : index
    %c0_99 = arith.constant 0 : index
    %236 = vector.load %arg15[%c0_96, %c0_97, %c0_98, %c0_99] : memref<1x4x1x32xf32, #tpu.memory_space<vmem>>, vector<1x1x1x32xf32>
    %237 = vector.shape_cast %236 : vector<1x1x1x32xf32> to vector<1x32xf32>
    %238 = vector.broadcast %237 : vector<1x32xf32> to vector<8x32xf32>
    %239 = arith.addf %235, %238 : vector<8x32xf32>
    %240 = vector.extract_strided_slice %220 {offsets = [0, 0], sizes = [8, 1], strides = [1, 1]} : vector<8x128xf32> to vector<8x1xf32>
    %241 = vector.broadcast %240 : vector<8x1xf32> to vector<8x32xf32>
    %242 = arith.mulf %241, %239 : vector<8x32xf32>
    %243 = arith.addf %222, %242 : vector<8x32xf32>
    %c0_100 = arith.constant 0 : index
    %c1 = arith.constant 1 : index
    %c0_101 = arith.constant 0 : index
    %c0_102 = arith.constant 0 : index
    %244 = vector.load %arg12[%c0_100, %c1, %c0_101, %c0_102] : memref<1x4x32x64xbf16, #tpu.memory_space<vmem>>, vector<1x1x32x64xbf16>
    %245 = vector.shape_cast %244 : vector<1x1x32x64xbf16> to vector<32x64xbf16>
    %cst_103 = arith.constant dense<0.000000e+00> : vector<8x64xf32>
    %246 = tpu.matmul %221, %245, %cst_103 {dimension_numbers = #tpu.dot_dimension_numbers<[1], [0], [0], [1], [0, 0, 1, 1], [], []>} : vector<8x32xbf16>, vector<32x64xbf16>, vector<8x64xf32> -> vector<8x64xf32>
    %c0_104 = arith.constant 0 : index
    %c1_105 = arith.constant 1 : index
    %c0_106 = arith.constant 0 : index
    %c0_107 = arith.constant 0 : index
    %247 = vector.load %arg13[%c0_104, %c1_105, %c0_106, %c0_107] : memref<1x4x1x64xf32, #tpu.memory_space<vmem>>, vector<1x1x1x64xf32>
    %248 = vector.shape_cast %247 : vector<1x1x1x64xf32> to vector<1x64xf32>
    %249 = vector.broadcast %248 : vector<1x64xf32> to vector<8x64xf32>
    %250 = arith.addf %246, %249 : vector<8x64xf32>
    %cst_108 = arith.constant 0.000000e+00 : f32
    %251 = vector.broadcast %cst_108 : f32 to vector<8x64xf32>
    %252 = arith.maximumf %250, %251 : vector<8x64xf32>
    %253 = arith.truncf %252 : vector<8x64xf32> to vector<8x64xbf16>
    %c0_109 = arith.constant 0 : index
    %c1_110 = arith.constant 1 : index
    %c0_111 = arith.constant 0 : index
    %c0_112 = arith.constant 0 : index
    %254 = vector.load %arg14[%c0_109, %c1_110, %c0_111, %c0_112] : memref<1x4x64x32xbf16, #tpu.memory_space<vmem>>, vector<1x1x64x32xbf16>
    %255 = vector.shape_cast %254 : vector<1x1x64x32xbf16> to vector<64x32xbf16>
    %cst_113 = arith.constant dense<0.000000e+00> : vector<8x32xf32>
    %256 = tpu.matmul %253, %255, %cst_113 {dimension_numbers = #tpu.dot_dimension_numbers<[1], [0], [0], [1], [0, 0, 1, 1], [], []>} : vector<8x64xbf16>, vector<64x32xbf16>, vector<8x32xf32> -> vector<8x32xf32>
    %c0_114 = arith.constant 0 : index
    %c1_115 = arith.constant 1 : index
    %c0_116 = arith.constant 0 : index
    %c0_117 = arith.constant 0 : index
    %257 = vector.load %arg15[%c0_114, %c1_115, %c0_116, %c0_117] : memref<1x4x1x32xf32, #tpu.memory_space<vmem>>, vector<1x1x1x32xf32>
    %258 = vector.shape_cast %257 : vector<1x1x1x32xf32> to vector<1x32xf32>
    %259 = vector.broadcast %258 : vector<1x32xf32> to vector<8x32xf32>
    %260 = arith.addf %256, %259 : vector<8x32xf32>
    %261 = vector.extract_strided_slice %220 {offsets = [0, 1], sizes = [8, 1], strides = [1, 1]} : vector<8x128xf32> to vector<8x1xf32>
    %262 = vector.broadcast %261 : vector<8x1xf32> to vector<8x32xf32>
    %263 = arith.mulf %262, %260 : vector<8x32xf32>
    %264 = arith.addf %243, %263 : vector<8x32xf32>
    %c0_118 = arith.constant 0 : index
    %c2 = arith.constant 2 : index
    %c0_119 = arith.constant 0 : index
    %c0_120 = arith.constant 0 : index
    %265 = vector.load %arg12[%c0_118, %c2, %c0_119, %c0_120] : memref<1x4x32x64xbf16, #tpu.memory_space<vmem>>, vector<1x1x32x64xbf16>
    %266 = vector.shape_cast %265 : vector<1x1x32x64xbf16> to vector<32x64xbf16>
    %cst_121 = arith.constant dense<0.000000e+00> : vector<8x64xf32>
    %267 = tpu.matmul %221, %266, %cst_121 {dimension_numbers = #tpu.dot_dimension_numbers<[1], [0], [0], [1], [0, 0, 1, 1], [], []>} : vector<8x32xbf16>, vector<32x64xbf16>, vector<8x64xf32> -> vector<8x64xf32>
    %c0_122 = arith.constant 0 : index
    %c2_123 = arith.constant 2 : index
    %c0_124 = arith.constant 0 : index
    %c0_125 = arith.constant 0 : index
    %268 = vector.load %arg13[%c0_122, %c2_123, %c0_124, %c0_125] : memref<1x4x1x64xf32, #tpu.memory_space<vmem>>, vector<1x1x1x64xf32>
    %269 = vector.shape_cast %268 : vector<1x1x1x64xf32> to vector<1x64xf32>
    %270 = vector.broadcast %269 : vector<1x64xf32> to vector<8x64xf32>
    %271 = arith.addf %267, %270 : vector<8x64xf32>
    %cst_126 = arith.constant 0.000000e+00 : f32
    %272 = vector.broadcast %cst_126 : f32 to vector<8x64xf32>
    %273 = arith.maximumf %271, %272 : vector<8x64xf32>
    %274 = arith.truncf %273 : vector<8x64xf32> to vector<8x64xbf16>
    %c0_127 = arith.constant 0 : index
    %c2_128 = arith.constant 2 : index
    %c0_129 = arith.constant 0 : index
    %c0_130 = arith.constant 0 : index
    %275 = vector.load %arg14[%c0_127, %c2_128, %c0_129, %c0_130] : memref<1x4x64x32xbf16, #tpu.memory_space<vmem>>, vector<1x1x64x32xbf16>
    %276 = vector.shape_cast %275 : vector<1x1x64x32xbf16> to vector<64x32xbf16>
    %cst_131 = arith.constant dense<0.000000e+00> : vector<8x32xf32>
    %277 = tpu.matmul %274, %276, %cst_131 {dimension_numbers = #tpu.dot_dimension_numbers<[1], [0], [0], [1], [0, 0, 1, 1], [], []>} : vector<8x64xbf16>, vector<64x32xbf16>, vector<8x32xf32> -> vector<8x32xf32>
    %c0_132 = arith.constant 0 : index
    %c2_133 = arith.constant 2 : index
    %c0_134 = arith.constant 0 : index
    %c0_135 = arith.constant 0 : index
    %278 = vector.load %arg15[%c0_132, %c2_133, %c0_134, %c0_135] : memref<1x4x1x32xf32, #tpu.memory_space<vmem>>, vector<1x1x1x32xf32>
    %279 = vector.shape_cast %278 : vector<1x1x1x32xf32> to vector<1x32xf32>
    %280 = vector.broadcast %279 : vector<1x32xf32> to vector<8x32xf32>
    %281 = arith.addf %277, %280 : vector<8x32xf32>
    %282 = vector.extract_strided_slice %220 {offsets = [0, 2], sizes = [8, 1], strides = [1, 1]} : vector<8x128xf32> to vector<8x1xf32>
    %283 = vector.broadcast %282 : vector<8x1xf32> to vector<8x32xf32>
    %284 = arith.mulf %283, %281 : vector<8x32xf32>
    %285 = arith.addf %264, %284 : vector<8x32xf32>
    %c0_136 = arith.constant 0 : index
    %c3 = arith.constant 3 : index
    %c0_137 = arith.constant 0 : index
    %c0_138 = arith.constant 0 : index
    %286 = vector.load %arg12[%c0_136, %c3, %c0_137, %c0_138] : memref<1x4x32x64xbf16, #tpu.memory_space<vmem>>, vector<1x1x32x64xbf16>
    %287 = vector.shape_cast %286 : vector<1x1x32x64xbf16> to vector<32x64xbf16>
    %cst_139 = arith.constant dense<0.000000e+00> : vector<8x64xf32>
    %288 = tpu.matmul %221, %287, %cst_139 {dimension_numbers = #tpu.dot_dimension_numbers<[1], [0], [0], [1], [0, 0, 1, 1], [], []>} : vector<8x32xbf16>, vector<32x64xbf16>, vector<8x64xf32> -> vector<8x64xf32>
    %c0_140 = arith.constant 0 : index
    %c3_141 = arith.constant 3 : index
    %c0_142 = arith.constant 0 : index
    %c0_143 = arith.constant 0 : index
    %289 = vector.load %arg13[%c0_140, %c3_141, %c0_142, %c0_143] : memref<1x4x1x64xf32, #tpu.memory_space<vmem>>, vector<1x1x1x64xf32>
    %290 = vector.shape_cast %289 : vector<1x1x1x64xf32> to vector<1x64xf32>
    %291 = vector.broadcast %290 : vector<1x64xf32> to vector<8x64xf32>
    %292 = arith.addf %288, %291 : vector<8x64xf32>
    %cst_144 = arith.constant 0.000000e+00 : f32
    %293 = vector.broadcast %cst_144 : f32 to vector<8x64xf32>
    %294 = arith.maximumf %292, %293 : vector<8x64xf32>
    %295 = arith.truncf %294 : vector<8x64xf32> to vector<8x64xbf16>
    %c0_145 = arith.constant 0 : index
    %c3_146 = arith.constant 3 : index
    %c0_147 = arith.constant 0 : index
    %c0_148 = arith.constant 0 : index
    %296 = vector.load %arg14[%c0_145, %c3_146, %c0_147, %c0_148] : memref<1x4x64x32xbf16, #tpu.memory_space<vmem>>, vector<1x1x64x32xbf16>
    %297 = vector.shape_cast %296 : vector<1x1x64x32xbf16> to vector<64x32xbf16>
    %cst_149 = arith.constant dense<0.000000e+00> : vector<8x32xf32>
    %298 = tpu.matmul %295, %297, %cst_149 {dimension_numbers = #tpu.dot_dimension_numbers<[1], [0], [0], [1], [0, 0, 1, 1], [], []>} : vector<8x64xbf16>, vector<64x32xbf16>, vector<8x32xf32> -> vector<8x32xf32>
    %c0_150 = arith.constant 0 : index
    %c3_151 = arith.constant 3 : index
    %c0_152 = arith.constant 0 : index
    %c0_153 = arith.constant 0 : index
    %299 = vector.load %arg15[%c0_150, %c3_151, %c0_152, %c0_153] : memref<1x4x1x32xf32, #tpu.memory_space<vmem>>, vector<1x1x1x32xf32>
    %300 = vector.shape_cast %299 : vector<1x1x1x32xf32> to vector<1x32xf32>
    %301 = vector.broadcast %300 : vector<1x32xf32> to vector<8x32xf32>
    %302 = arith.addf %298, %301 : vector<8x32xf32>
    %303 = vector.extract_strided_slice %220 {offsets = [0, 3], sizes = [8, 1], strides = [1, 1]} : vector<8x128xf32> to vector<8x1xf32>
    %304 = vector.broadcast %303 : vector<8x1xf32> to vector<8x32xf32>
    %305 = arith.mulf %304, %302 : vector<8x32xf32>
    %306 = arith.addf %285, %305 : vector<8x32xf32>
    %307 = arith.addf %160, %306 : vector<8x32xf32>
    %cst_154 = arith.constant dense<0.000000e+00> : vector<8xf32>
    %308 = vector.multi_reduction <add>, %307, %cst_154 [1] : vector<8x32xf32> to vector<8xf32>
    %309 = vector.shape_cast %308 : vector<8xf32> to vector<8x1xf32>
    %cst_155 = arith.constant 3.200000e+01 : f32
    %310 = vector.broadcast %cst_155 : f32 to vector<8x1xf32>
    %311 = arith.divf %309, %310 : vector<8x1xf32>
    %312 = vector.broadcast %311 : vector<8x1xf32> to vector<8x32xf32>
    %313 = arith.subf %307, %312 : vector<8x32xf32>
    %314 = arith.mulf %313, %313 : vector<8x32xf32>
    %cst_156 = arith.constant dense<0.000000e+00> : vector<8xf32>
    %315 = vector.multi_reduction <add>, %314, %cst_156 [1] : vector<8x32xf32> to vector<8xf32>
    %316 = vector.shape_cast %315 : vector<8xf32> to vector<8x1xf32>
    %cst_157 = arith.constant 3.200000e+01 : f32
    %317 = vector.broadcast %cst_157 : f32 to vector<8x1xf32>
    %318 = arith.divf %316, %317 : vector<8x1xf32>
    %319 = vector.broadcast %311 : vector<8x1xf32> to vector<8x32xf32>
    %320 = arith.subf %307, %319 : vector<8x32xf32>
    %cst_158 = arith.constant 9.99999974E-6 : f32
    %321 = vector.broadcast %cst_158 : f32 to vector<8x1xf32>
    %322 = arith.addf %318, %321 : vector<8x1xf32>
    %323 = math.rsqrt %322 : vector<8x1xf32>
    %324 = vector.broadcast %323 : vector<8x1xf32> to vector<8x32xf32>
    %325 = arith.mulf %320, %324 : vector<8x32xf32>
    %c0_159 = arith.constant 0 : index
    %c0_160 = arith.constant 0 : index
    %c0_161 = arith.constant 0 : index
    %326 = vector.load %arg16[%c0_159, %c0_160, %c0_161] : memref<1x1x32xf32, #tpu.memory_space<vmem>>, vector<1x1x32xf32>
    %327 = vector.shape_cast %326 : vector<1x1x32xf32> to vector<1x32xf32>
    %328 = vector.broadcast %327 : vector<1x32xf32> to vector<8x32xf32>
    %329 = arith.mulf %325, %328 : vector<8x32xf32>
    %c0_162 = arith.constant 0 : index
    %c0_163 = arith.constant 0 : index
    %c0_164 = arith.constant 0 : index
    %330 = vector.load %arg17[%c0_162, %c0_163, %c0_164] : memref<1x1x32xf32, #tpu.memory_space<vmem>>, vector<1x1x32xf32>
    %331 = vector.shape_cast %330 : vector<1x1x32xf32> to vector<1x32xf32>
    %332 = vector.broadcast %331 : vector<1x32xf32> to vector<8x32xf32>
    %333 = arith.addf %329, %332 : vector<8x32xf32>
    %c0_165 = arith.constant 0 : index
    %c0_166 = arith.constant 0 : index
    %334 = vector.load %arg20[%c0_165, %c0_166] : memref<8x32xf32, #tpu.memory_space<vmem>>, vector<8x32xf32>
    tpu.vector_store %arg20[%c0_165, %c0_166], %333 {strides = array<i32>} : memref<8x32xf32, #tpu.memory_space<vmem>>, vector<8x32xf32>,
    %c1_i32 = arith.constant 1 : i32
    %335 = arith.cmpi eq, %arg1, %c1_i32 : i32
    %336 = arith.extui %335 : i1 to i32
    %c0_i32_167 = arith.constant 0 : i32
    %337 = arith.cmpi ne, %336, %c0_i32_167 : i32
    scf.if %337 {
      %c0_168 = arith.constant 0 : index
      %c0_169 = arith.constant 0 : index
      %c0_170 = arith.constant 0 : index
      %338 = vector.load %arg18[%c0_168, %c0_169, %c0_170] : memref<1x8x32xf32, #tpu.memory_space<vmem>>, vector<1x8x32xf32>
      %339 = vector.shape_cast %338 : vector<1x8x32xf32> to vector<8x32xf32>
      %340 = vector.shape_cast %333 : vector<8x32xf32> to vector<1x8x32xf32>
      tpu.vector_store %arg18[%c0_168, %c0_169, %c0_170], %340 {strides = array<i32>} : memref<1x8x32xf32, #tpu.memory_space<vmem>>, vector<1x8x32xf32>,
    } else {
    }
    return
  }
  func.func @transform_0(%arg0: i32, %arg1: i32) -> (i32, i32, i32) {
    %c0_i32 = arith.constant 0 : i32
    %c0_i32_0 = arith.constant 0 : i32
    %c0_i32_1 = arith.constant 0 : i32
    return %arg0, %c0_i32, %c0_i32_0 : i32, i32, i32
  }
  func.func @transform_1(%arg0: i32, %arg1: i32) -> (i32, i32, i32) {
    %c0_i32 = arith.constant 0 : i32
    %c0_i32_0 = arith.constant 0 : i32
    %c0_i32_1 = arith.constant 0 : i32
    return %arg0, %c0_i32, %c0_i32_0 : i32, i32, i32
  }
  func.func @transform_2(%arg0: i32, %arg1: i32) -> (i32, i32, i32) {
    %c0_i32 = arith.constant 0 : i32
    %c0_i32_0 = arith.constant 0 : i32
    %c0_i32_1 = arith.constant 0 : i32
    return %arg1, %c0_i32, %c0_i32_0 : i32, i32, i32
  }
  func.func @transform_3(%arg0: i32, %arg1: i32) -> (i32, i32, i32) {
    %c0_i32 = arith.constant 0 : i32
    %c0_i32_0 = arith.constant 0 : i32
    %c0_i32_1 = arith.constant 0 : i32
    return %arg1, %c0_i32, %c0_i32_0 : i32, i32, i32
  }
  func.func @transform_4(%arg0: i32, %arg1: i32) -> (i32, i32, i32) {
    %c0_i32 = arith.constant 0 : i32
    %c0_i32_0 = arith.constant 0 : i32
    %c0_i32_1 = arith.constant 0 : i32
    return %arg1, %c0_i32, %c0_i32_0 : i32, i32, i32
  }
  func.func @transform_5(%arg0: i32, %arg1: i32) -> (i32, i32, i32) {
    %c0_i32 = arith.constant 0 : i32
    %c0_i32_0 = arith.constant 0 : i32
    %c0_i32_1 = arith.constant 0 : i32
    return %arg1, %c0_i32, %c0_i32_0 : i32, i32, i32
  }
  func.func @transform_6(%arg0: i32, %arg1: i32) -> (i32, i32, i32) {
    %c0_i32 = arith.constant 0 : i32
    %c0_i32_0 = arith.constant 0 : i32
    %c0_i32_1 = arith.constant 0 : i32
    return %arg1, %c0_i32, %c0_i32_0 : i32, i32, i32
  }
  func.func @transform_7(%arg0: i32, %arg1: i32) -> (i32, i32, i32) {
    %c0_i32 = arith.constant 0 : i32
    %c0_i32_0 = arith.constant 0 : i32
    %c0_i32_1 = arith.constant 0 : i32
    return %arg1, %c0_i32, %c0_i32_0 : i32, i32, i32
  }
  func.func @transform_8(%arg0: i32, %arg1: i32) -> (i32, i32, i32) {
    %c0_i32 = arith.constant 0 : i32
    %c0_i32_0 = arith.constant 0 : i32
    %c0_i32_1 = arith.constant 0 : i32
    return %arg1, %c0_i32, %c0_i32_0 : i32, i32, i32
  }
  func.func @transform_9(%arg0: i32, %arg1: i32) -> (i32, i32, i32) {
    %c0_i32 = arith.constant 0 : i32
    %c0_i32_0 = arith.constant 0 : i32
    %c0_i32_1 = arith.constant 0 : i32
    return %arg1, %c0_i32, %c0_i32_0 : i32, i32, i32
  }
  func.func @transform_10(%arg0: i32, %arg1: i32) -> (i32, i32, i32, i32) {
    %c0_i32 = arith.constant 0 : i32
    %c0_i32_0 = arith.constant 0 : i32
    %c0_i32_1 = arith.constant 0 : i32
    %c0_i32_2 = arith.constant 0 : i32
    return %arg1, %c0_i32, %c0_i32_0, %c0_i32_1 : i32, i32, i32, i32
  }
  func.func @transform_11(%arg0: i32, %arg1: i32) -> (i32, i32, i32, i32) {
    %c0_i32 = arith.constant 0 : i32
    %c0_i32_0 = arith.constant 0 : i32
    %c0_i32_1 = arith.constant 0 : i32
    %c0_i32_2 = arith.constant 0 : i32
    return %arg1, %c0_i32, %c0_i32_0, %c0_i32_1 : i32, i32, i32, i32
  }
  func.func @transform_12(%arg0: i32, %arg1: i32) -> (i32, i32, i32, i32) {
    %c0_i32 = arith.constant 0 : i32
    %c0_i32_0 = arith.constant 0 : i32
    %c0_i32_1 = arith.constant 0 : i32
    %c0_i32_2 = arith.constant 0 : i32
    return %arg1, %c0_i32, %c0_i32_0, %c0_i32_1 : i32, i32, i32, i32
  }
  func.func @transform_13(%arg0: i32, %arg1: i32) -> (i32, i32, i32, i32) {
    %c0_i32 = arith.constant 0 : i32
    %c0_i32_0 = arith.constant 0 : i32
    %c0_i32_1 = arith.constant 0 : i32
    %c0_i32_2 = arith.constant 0 : i32
    return %arg1, %c0_i32, %c0_i32_0, %c0_i32_1 : i32, i32, i32, i32
  }
  func.func @transform_14(%arg0: i32, %arg1: i32) -> (i32, i32, i32) {
    %c0_i32 = arith.constant 0 : i32
    %c0_i32_0 = arith.constant 0 : i32
    %c0_i32_1 = arith.constant 0 : i32
    return %arg1, %c0_i32, %c0_i32_0 : i32, i32, i32
  }
  func.func @transform_15(%arg0: i32, %arg1: i32) -> (i32, i32, i32) {
    %c0_i32 = arith.constant 0 : i32
    %c0_i32_0 = arith.constant 0 : i32
    %c0_i32_1 = arith.constant 0 : i32
    return %arg1, %c0_i32, %c0_i32_0 : i32, i32, i32
  }
  func.func @transform_16(%arg0: i32, %arg1: i32) -> (i32, i32, i32) {
    %c0_i32 = arith.constant 0 : i32
    %c0_i32_0 = arith.constant 0 : i32
    %c0_i32_1 = arith.constant 0 : i32
    return %arg0, %c0_i32, %c0_i32_0 : i32, i32, i32
  }
  func.func @transform_17(%arg0: i32, %arg1: i32) -> (i32, i32, i32, i32) {
    %c0_i32 = arith.constant 0 : i32
    %c0_i32_0 = arith.constant 0 : i32
    %c0_i32_1 = arith.constant 0 : i32
    return %arg1, %arg0, %c0_i32, %c0_i32_0 : i32, i32, i32, i32
  }
}

</mosaic_0001>

<llo_original>
// kernel: actor_forward.3
$region0: #{actor_forward.3}
  #allocation0 [shape = 'u32[]', space=smem, size = 0x4, offset = 0x4, fixed_abs, tag = 'smem constant byte address 0x4 - core index']
  #allocation1 [shape = 'u32[144,128]{1,0:T(1,128)}', space=vmem, size = 0x12000, scoped, tag = 'internal scratch']
  %s0 = inlined_call_operand.vmem [shape: s32[2,8,1], index: 0, kind: input, shape index: {}]
  %s1 = inlined_call_operand.vmem [shape: f32[2,8,32], index: 1, kind: input, shape index: {}]
  %s2 = inlined_call_operand.vmem [shape: bf16[32,16], index: 2, kind: input, shape index: {}]
  %s3 = inlined_call_operand.vmem [shape: f32[1,16], index: 3, kind: input, shape index: {}]
  %s4 = inlined_call_operand.vmem [shape: f32[1,16], index: 4, kind: input, shape index: {}]
  %s5 = inlined_call_operand.vmem [shape: f32[1,16], index: 5, kind: input, shape index: {}]
  %s6 = inlined_call_operand.vmem [shape: bf16[16,128], index: 6, kind: input, shape index: {}]
  %s7 = inlined_call_operand.vmem [shape: f32[1,128], index: 7, kind: input, shape index: {}]
  %s8 = inlined_call_operand.vmem [shape: f32[128,128], index: 8, kind: input, shape index: {}]
  %s9 = inlined_call_operand.hbm [shape: f32[2,8,128], index: 9, kind: output, shape index: {}]
  %s10 = sld [smem:[#allocation0]]
  $region69: #{actor_forward.3} parent=0
    _
  %s12 = ssub.s32 1, %s10
  %s13 = scalar_select 0, %s12, %s10
  $region1: #{actor_forward.3} parent=0
    #allocation2 [shape = 'u8[8192]{0}', space=vmem, size = 0x2000, scoped, tag = 'output window, operand 0']
    #allocation3 [shape = 's32[2]{0}', space=sflag, size = 0x8, scoped, tag = 'scoped memory for actor_forward.3']
    %14 = vsyncpa [#allocation3], 0
    %s15 = scalar_lea.sflag [#allocation3], 1
    %16 = vsyncpa %s15, 0
    loop: start=0, step=1, limit=4
    $region2: #{actor_forward.3} parent=1 // loop_pre_header
      _
    $region3: #{actor_forward.3} parent=1 // loop_header
      %s18 = sphi 0, %s22
      %p19 = scmp.ge.s32.totalorder %s18, 4
      %s28 = sphi 0, %s30
      %s31 = sphi 0, %s28
      %s32 = sphi 0, %s31
      %s48 = sphi 0, %s32
      %s54 = sphi 0, %s56
      %s57 = sphi 0, %s54
      %s58 = sphi 0, %s57
      %s74 = sphi 0, %s58
      %s78 = sphi 0, %s78
      %s80 = sphi 0, %s78
      %s81 = sphi 0, %s80
      %s95 = sphi 0, %s81
      %s99 = sphi 0, %s99
      %s101 = sphi 0, %s99
      %s102 = sphi 0, %s101
      %s116 = sphi 0, %s102
      %s120 = sphi 0, %s120
      %s122 = sphi 0, %s120
      %s123 = sphi 0, %s122
      %s137 = sphi 0, %s123
      %s141 = sphi 0, %s141
      %s143 = sphi 0, %s141
      %s144 = sphi 0, %s143
      %s158 = sphi 0, %s144
      %s162 = sphi 0, %s162
      %s164 = sphi 0, %s162
      %s165 = sphi 0, %s164
      %s179 = sphi 0, %s165
      %s183 = sphi 0, %s183
      %s185 = sphi 0, %s183
      %s186 = sphi 0, %s185
      %s200 = sphi 0, %s186
      %s204 = sphi 0, %s204
      %s206 = sphi 0, %s204
      %s207 = sphi 0, %s206
      %s221 = sphi 0, %s207
      %s227 = sphi 0, %s229
      %s230 = sphi 0, %s227
      %s231 = sphi 0, %s230
      %s247 = sphi 0, %s231
    $region4: #{actor_forward.3} parent=1 // loop_header_branch
      %21 = sbr.rel (%p19) target = $region8
    $region5: #{actor_forward.3} parent=1 // loop_body
      %s23 = ssub.s32 %s18, 1
      %s24 = ssub.s32 %s18, 2
      %s25 = sadd.s32 %s18, 1
      %s26 = ssub.s32 %s18, %s25
      %p27 = scmp.eq.s32.totalorder %s26, 0
      %s29 = sadd.s32 %s28, 1
      %s30 = scalar_select %p27, %s28, %s29
      %p33 = pneg %p27
      %p34 = scmp.eq.s32.totalorder %s18, 1
      %p35 = por %p33, %p34
      %p36 = scmp.ne.s32.totalorder %s28, %s31
      %p37 = scmp.eq.s32.totalorder %s18, 0
      %p38 = por %p36, %p37
      %p39 = scmp.ne.s32.totalorder %s28, %s31
      %p40 = scmp.eq.s32.totalorder %s23, 1
      %p41 = por %p39, %p40
      %p42 = scmp.ne.s32.totalorder %s31, %s32
      %p43 = scmp.eq.s32.totalorder %s23, 0
      %p44 = por %p42, %p43
      %p45 = scmp.ne.s32.totalorder %s31, %s32
      %p46 = scmp.eq.s32.totalorder %s24, 1
      %p47 = por %p45, %p46
      %p49 = scmp.ne.s32.totalorder %s32, %s48
      %p50 = scmp.eq.s32.totalorder %s24, 0
      %p51 = por %p49, %p50
      %s52 = ssub.s32 %s18, %s25
      %p53 = scmp.eq.s32.totalorder %s52, 0
      %s55 = sadd.s32 %s54, 1
      %s56 = scalar_select %p53, %s54, %s55
      %p59 = pneg %p53
      %p60 = scmp.eq.s32.totalorder %s18, 1
      %p61 = por %p59, %p60
      %p62 = scmp.ne.s32.totalorder %s54, %s57
      %p63 = scmp.eq.s32.totalorder %s18, 0
      %p64 = por %p62, %p63
      %p65 = scmp.ne.s32.totalorder %s54, %s57
      %p66 = scmp.eq.s32.totalorder %s23, 1
      %p67 = por %p65, %p66
      %p68 = scmp.ne.s32.totalorder %s57, %s58
      %p69 = scmp.eq.s32.totalorder %s23, 0
      %p70 = por %p68, %p69
      %p71 = scmp.ne.s32.totalorder %s57, %s58
      %p72 = scmp.eq.s32.totalorder %s24, 1
      %p73 = por %p71, %p72
      %p75 = scmp.ne.s32.totalorder %s58, %s74
      %p76 = scmp.eq.s32.totalorder %s24, 0
      %p77 = por %p75, %p76
      %s79 = sadd.s32 %s78, 1
      %p82 = scmp.eq.s32.totalorder %s18, 1
      %p83 = scmp.ne.s32.totalorder %s78, %s80
      %p84 = scmp.eq.s32.totalorder %s18, 0
      %p85 = por %p83, %p84
      %p86 = scmp.ne.s32.totalorder %s78, %s80
      %p87 = scmp.eq.s32.totalorder %s23, 1
      %p88 = por %p86, %p87
      %p89 = scmp.ne.s32.totalorder %s80, %s81
      %p90 = scmp.eq.s32.totalorder %s23, 0
      %p91 = por %p89, %p90
      %p92 = scmp.ne.s32.totalorder %s80, %s81
      %p93 = scmp.eq.s32.totalorder %s24, 1
      %p94 = por %p92, %p93
      %p96 = scmp.ne.s32.totalorder %s81, %s95
      %p97 = scmp.eq.s32.totalorder %s24, 0
      %p98 = por %p96, %p97
      %s100 = sadd.s32 %s99, 1
      %p103 = scmp.eq.s32.totalorder %s18, 1
      %p104 = scmp.ne.s32.totalorder %s99, %s101
      %p105 = scmp.eq.s32.totalorder %s18, 0
      %p106 = por %p104, %p105
      %p107 = scmp.ne.s32.totalorder %s99, %s101
      %p108 = scmp.eq.s32.totalorder %s23, 1
      %p109 = por %p107, %p108
      %p110 = scmp.ne.s32.totalorder %s101, %s102
      %p111 = scmp.eq.s32.totalorder %s23, 0
      %p112 = por %p110, %p111
      %p113 = scmp.ne.s32.totalorder %s101, %s102
      %p114 = scmp.eq.s32.totalorder %s24, 1
      %p115 = por %p113, %p114
      %p117 = scmp.ne.s32.totalorder %s102, %s116
      %p118 = scmp.eq.s32.totalorder %s24, 0
      %p119 = por %p117, %p118
      %s121 = sadd.s32 %s120, 1
      %p124 = scmp.eq.s32.totalorder %s18, 1
      %p125 = scmp.ne.s32.totalorder %s120, %s122
      %p126 = scmp.eq.s32.totalorder %s18, 0
      %p127 = por %p125, %p126
      %p128 = scmp.ne.s32.totalorder %s120, %s122
      %p129 = scmp.eq.s32.totalorder %s23, 1
      %p130 = por %p128, %p129
      %p131 = scmp.ne.s32.totalorder %s122, %s123
      %p132 = scmp.eq.s32.totalorder %s23, 0
      %p133 = por %p131, %p132
      %p134 = scmp.ne.s32.totalorder %s122, %s123
      %p135 = scmp.eq.s32.totalorder %s24, 1
      %p136 = por %p134, %p135
      %p138 = scmp.ne.s32.totalorder %s123, %s137
      %p139 = scmp.eq.s32.totalorder %s24, 0
      %p140 = por %p138, %p139
      %s142 = sadd.s32 %s141, 1
      %p145 = scmp.eq.s32.totalorder %s18, 1
      %p146 = scmp.ne.s32.totalorder %s141, %s143
      %p147 = scmp.eq.s32.totalorder %s18, 0
      %p148 = por %p146, %p147
      %p149 = scmp.ne.s32.totalorder %s141, %s143
      %p150 = scmp.eq.s32.totalorder %s23, 1
      %p151 = por %p149, %p150
      %p152 = scmp.ne.s32.totalorder %s143, %s144
      %p153 = scmp.eq.s32.totalorder %s23, 0
      %p154 = por %p152, %p153
      %p155 = scmp.ne.s32.totalorder %s143, %s144
      %p156 = scmp.eq.s32.totalorder %s24, 1
      %p157 = por %p155, %p156
      %p159 = scmp.ne.s32.totalorder %s144, %s158
      %p160 = scmp.eq.s32.totalorder %s24, 0
      %p161 = por %p159, %p160
      %s163 = sadd.s32 %s162, 1
      %p166 = scmp.eq.s32.totalorder %s18, 1
      %p167 = scmp.ne.s32.totalorder %s162, %s164
      %p168 = scmp.eq.s32.totalorder %s18, 0
      %p169 = por %p167, %p168
      %p170 = scmp.ne.s32.totalorder %s162, %s164
      %p171 = scmp.eq.s32.totalorder %s23, 1
      %p172 = por %p170, %p171
      %p173 = scmp.ne.s32.totalorder %s164, %s165
      %p174 = scmp.eq.s32.totalorder %s23, 0
      %p175 = por %p173, %p174
      %p176 = scmp.ne.s32.totalorder %s164, %s165
      %p177 = scmp.eq.s32.totalorder %s24, 1
      %p178 = por %p176, %p177
      %p180 = scmp.ne.s32.totalorder %s165, %s179
      %p181 = scmp.eq.s32.totalorder %s24, 0
      %p182 = por %p180, %p181
      %s184 = sadd.s32 %s183, 1
      %p187 = scmp.eq.s32.totalorder %s18, 1
      %p188 = scmp.ne.s32.totalorder %s183, %s185
      %p189 = scmp.eq.s32.totalorder %s18, 0
      %p190 = por %p188, %p189
      %p191 = scmp.ne.s32.totalorder %s183, %s185
      %p192 = scmp.eq.s32.totalorder %s23, 1
      %p193 = por %p191, %p192
      %p194 = scmp.ne.s32.totalorder %s185, %s186
      %p195 = scmp.eq.s32.totalorder %s23, 0
      %p196 = por %p194, %p195
      %p197 = scmp.ne.s32.totalorder %s185, %s186
      %p198 = scmp.eq.s32.totalorder %s24, 1
      %p199 = por %p197, %p198
      %p201 = scmp.ne.s32.totalorder %s186, %s200
      %p202 = scmp.eq.s32.totalorder %s24, 0
      %p203 = por %p201, %p202
      %s205 = sadd.s32 %s204, 1
      %p208 = scmp.eq.s32.totalorder %s18, 1
      %p209 = scmp.ne.s32.totalorder %s204, %s206
      %p210 = scmp.eq.s32.totalorder %s18, 0
      %p211 = por %p209, %p210
      %p212 = scmp.ne.s32.totalorder %s204, %s206
      %p213 = scmp.eq.s32.totalorder %s23, 1
      %p214 = por %p212, %p213
      %p215 = scmp.ne.s32.totalorder %s206, %s207
      %p216 = scmp.eq.s32.totalorder %s23, 0
      %p217 = por %p215, %p216
      %p218 = scmp.ne.s32.totalorder %s206, %s207
      %p219 = scmp.eq.s32.totalorder %s24, 1
      %p220 = por %p218, %p219
      %p222 = scmp.ne.s32.totalorder %s207, %s221
      %p223 = scmp.eq.s32.totalorder %s24, 0
      %p224 = por %p222, %p223
      %s225 = ssub.s32 %s18, %s25
      %p226 = scmp.eq.s32.totalorder %s225, 0
      %s228 = sadd.s32 %s227, 1
      %s229 = scalar_select %p226, %s227, %s228
      %p232 = pneg %p226
      %p233 = scmp.eq.s32.totalorder %s18, 1
      %p234 = por %p232, %p233
      %p235 = scmp.ne.s32.totalorder %s227, %s230
      %p236 = scmp.eq.s32.totalorder %s18, 0
      %p237 = por %p235, %p236
      %p238 = scmp.ne.s32.totalorder %s227, %s230
      %p239 = scmp.eq.s32.totalorder %s23, 1
      %p240 = por %p238, %p239
      %p241 = scmp.ne.s32.totalorder %s230, %s231
      %p242 = scmp.eq.s32.totalorder %s23, 0
      %p243 = por %p241, %p242
      %p244 = scmp.ne.s32.totalorder %s230, %s231
      %p245 = scmp.eq.s32.totalorder %s24, 1
      %p246 = por %p244, %p245
      %p248 = scmp.ne.s32.totalorder %s231, %s247
      %p249 = scmp.eq.s32.totalorder %s24, 0
      %p250 = por %p248, %p249
      %p251 = scmp.le.s32.totalorder 1, %s18
      %p252 = scmp.lt.s32.totalorder %s18, 3
      %p253 = pnand %p251, %p252
      %p254 = pneg %p253
      // Predicated region
      $region9: #{actor_forward.3} parent=5 // pred_check
        _
      $region10: #{actor_forward.3} parent=5 // pred_check_branch
        %256 = sbr.rel (%p253) target = $region12
      $region11: #{actor_forward.3} parent=5 // pred_region
        %s257 = ssub.s32 %s18, 1
        // Predicated region
        $region13: #{actor_forward.3} parent=11 // pred_check
          %p258 = pneg %p91
        $region14: #{actor_forward.3} parent=11 // pred_check_branch
          %260 = sbr.rel (%p258) target = $region16
        $region15: #{actor_forward.3} parent=11 // pred_region
          _
        $region16: #{actor_forward.3} parent=11 // pred_fallthru
          _
        // Predicated region
        $region17: #{actor_forward.3} parent=11 // pred_check
          %p261 = pneg %p112
        $region18: #{actor_forward.3} parent=11 // pred_check_branch
          %263 = sbr.rel (%p261) target = $region20
        $region19: #{actor_forward.3} parent=11 // pred_region
          _
        $region20: #{actor_forward.3} parent=11 // pred_fallthru
          _
        // Predicated region
        $region21: #{actor_forward.3} parent=11 // pred_check
          %p264 = pneg %p133
        $region22: #{actor_forward.3} parent=11 // pred_check_branch
          %266 = sbr.rel (%p264) target = $region24
        $region23: #{actor_forward.3} parent=11 // pred_region
          _
        $region24: #{actor_forward.3} parent=11 // pred_fallthru
          _
        // Predicated region
        $region25: #{actor_forward.3} parent=11 // pred_check
          %p267 = pneg %p154
        $region26: #{actor_forward.3} parent=11 // pred_check_branch
          %269 = sbr.rel (%p267) target = $region28
        $region27: #{actor_forward.3} parent=11 // pred_region
          _
        $region28: #{actor_forward.3} parent=11 // pred_fallthru
          _
        // Predicated region
        $region29: #{actor_forward.3} parent=11 // pred_check
          %p270 = pneg %p175
        $region30: #{actor_forward.3} parent=11 // pred_check_branch
          %272 = sbr.rel (%p270) target = $region32
        $region31: #{actor_forward.3} parent=11 // pred_region
          _
        $region32: #{actor_forward.3} parent=11 // pred_fallthru
          _
        // Predicated region
        $region33: #{actor_forward.3} parent=11 // pred_check
          %p273 = pneg %p196
        $region34: #{actor_forward.3} parent=11 // pred_check_branch
          %275 = sbr.rel (%p273) target = $region36
        $region35: #{actor_forward.3} parent=11 // pred_region
          _
        $region36: #{actor_forward.3} parent=11 // pred_fallthru
          _
        // Predicated region
        $region37: #{actor_forward.3} parent=11 // pred_check
          %p276 = pneg %p217
        $region38: #{actor_forward.3} parent=11 // pred_check_branch
          %278 = sbr.rel (%p276) target = $region40
        $region39: #{actor_forward.3} parent=11 // pred_region
          _
        $region40: #{actor_forward.3} parent=11 // pred_fallthru
          _
      $region12: #{actor_forward.3} parent=5 // pred_fallthru
        _
      %p279 = scmp.lt.s32.totalorder %s18, 2
      // Predicated region
      $region41: #{actor_forward.3} parent=5 // pred_check
        %p280 = pneg %p279
      $region42: #{actor_forward.3} parent=5 // pred_check_branch
        %282 = sbr.rel (%p280) target = $region44
      $region43: #{actor_forward.3} parent=5 // pred_region
        // Predicated region
        $region45: #{actor_forward.3} parent=43 // pred_check
          %p283 = pneg %p38
        $region46: #{actor_forward.3} parent=43 // pred_check_branch
          %285 = sbr.rel (%p283) target = $region48
        $region47: #{actor_forward.3} parent=43 // pred_region
          %p286 = scmp.lt.s32.totalorder %s18, 1
          %s287 = scalar_select %p286, %s18, 1
          %s288 = smul.addr %s287, 8
          %s289 = scalar_lea.vmem %s0, %s288
        $region48: #{actor_forward.3} parent=43 // pred_fallthru
          _
        // Predicated region
        $region49: #{actor_forward.3} parent=43 // pred_check
          %p290 = pneg %p64
        $region50: #{actor_forward.3} parent=43 // pred_check_branch
          %292 = sbr.rel (%p290) target = $region52
        $region51: #{actor_forward.3} parent=43 // pred_region
          %p293 = scmp.lt.s32.totalorder %s18, 1
          %s294 = scalar_select %p293, %s18, 1
          %s295 = smul.addr %s294, 8
          %s296 = scalar_lea.vmem %s1, %s295
        $region52: #{actor_forward.3} parent=43 // pred_fallthru
          _
      $region44: #{actor_forward.3} parent=5 // pred_fallthru
        _
      %p297 = scmp.le.s32.totalorder 1, %s18
      %p298 = scmp.lt.s32.totalorder %s18, 3
      %p299 = pnand %p297, %p298
      %p300 = pneg %p299
      // Predicated region
      $region53: #{actor_forward.3} parent=5 // pred_check
        _
      $region54: #{actor_forward.3} parent=5 // pred_check_branch
        %302 = sbr.rel (%p299) target = $region56
      $region55: #{actor_forward.3} parent=5 // pred_region
        %s303 = ssub.s32 %s18, 1
        %p304 = scmp.lt.s32.totalorder %s23, 1
        %s305 = scalar_select %p304, %s23, 1
        %s306 = smul.addr %s305, 8
        %s307 = scalar_lea.vmem %s0, %s306
        %p308 = pneg %p44
        %p309 = pneg %p41
        %p310 = scmp.lt.s32.totalorder %s23, 1
        %s311 = scalar_select %p310, %s23, 1
        %s312 = smul.addr %s311, 8
        %s313 = scalar_lea.vmem %s1, %s312
        %p314 = pneg %p70
        %p315 = pneg %p67
        %p316 = pneg %p91
        %p317 = pneg %p88
        %p318 = pneg %p112
        %p319 = pneg %p109
        %p320 = pneg %p133
        %p321 = pneg %p130
        %p322 = pneg %p154
        %p323 = pneg %p151
        %p324 = pneg %p175
        %p325 = pneg %p172
        %p326 = pneg %p196
        %p327 = pneg %p193
        %p328 = pneg %p217
        %p329 = pneg %p214
        %p330 = pneg %p243
        %p331 = pneg %p240
        %s332 = sand.u32 %s230, 1
        %s333 = scalar_lea.sflag [#allocation3], %s332
        %s334 = sand.u32 %s230, 1
        %s335 = smul.addr %s334, 8
        %s336 = scalar_lea.vmem [#allocation2], %s335
        %p337 = scmp.lt.s32.totalorder %s23, 1
        %s338 = scalar_select %p337, %s23, 1
        %s339 = smul.addr %s338, 8
        %s340 = scalar_lea.vmem %s0, %s339
        %p341 = scmp.lt.s32.totalorder %s23, 1
        %s342 = scalar_select %p341, %s23, 1
        %s343 = smul.addr %s342, 8
        %s344 = scalar_lea.vmem %s1, %s343
        %v346 = vld [vmem:[%s344] sm:$0xff]
        %v347 = vpack.c.bf16 %v346, %v346
        %v348 = vld [vmem:[%s2] sm:$0xf]
        %v349 = vld [vmem:[%s2 + $0x4] sm:$0xf]
        %v350 = vld [vmem:[%s2 + $0x8] sm:$0xf]
        %v351 = vld [vmem:[%s2 + $0xc] sm:$0xf]
        %v352 = vld [vmem:[%s3] sm:$0x1]
        %v354 = vlaneseq
        %v355 = vshrl.u32 %v354, 7
        %v356 = vsub.s32 0, %v355
        %v357 = vrot.slane %v352, %v356
        %v363 = vunpack.c.l.b16 %v348
        %v364 = vunpack.c.l.b16 %v349
        %v365 = vunpack.c.l.b16 %v350
        %v366 = vunpack.c.l.b16 %v351
        %v367 = vpack.c.b16 %v364, %v363
        %v368 = vpack.c.b16 %v366, %v365
        %vm371 = vcmask 261120
        %v373 = vsel %vm371, %v347, 0
        %375 = vmatprep.subr.bf16.mxu0 0
        %376 = vmatpush1.bf16.msra.mxu0 %v367
        %377 = vmatprep.subr.bf16.mxu0 0
        %378 = vmatpush1.bf16.msra.mxu0 %v368
        %379 = vmatprep.subr.bf16.mxu0 0
        %380 = vmatpush1.bf16.msra.mxu0 0
        %381 = vmatprep.subr.bf16.mxu0 0
        %382 = vmatpush1.bf16.msra.mxu0 0
        %383 = vmatprep.subr.bf16.mxu0 0
        %384 = vmatpush1.bf16.msra.mxu0 0
        %385 = vmatprep.subr.bf16.mxu0 0
        %386 = vmatpush1.bf16.msra.mxu0 0
        %387 = vmatprep.subr.bf16.mxu0 0
        %388 = vmatpush1.bf16.msra.mxu0 0
        %389 = vmatprep.subr.bf16.mxu0 0
        %390 = vmatpush1.bf16.msra.mxu0 0
        %391 = vmatprep.subr.bf16.mxu0 0
        %392 = vmatpush1.bf16.msra.mxu0 0
        %393 = vmatprep.subr.bf16.mxu0 0
        %394 = vmatpush1.bf16.msra.mxu0 0
        %395 = vmatprep.subr.bf16.mxu0 0
        %396 = vmatpush1.bf16.msra.mxu0 0
        %397 = vmatprep.subr.bf16.mxu0 0
        %398 = vmatpush1.bf16.msra.mxu0 0
        %399 = vmatprep.subr.bf16.mxu0 0
        %400 = vmatpush1.bf16.msra.mxu0 0
        %401 = vmatprep.subr.bf16.mxu0 0
        %402 = vmatpush1.bf16.msra.mxu0 0
        %403 = vmatprep.subr.bf16.mxu0 0
        %404 = vmatpush1.bf16.msra.mxu0 0
        %405 = vmatprep.subr.bf16.mxu0 0
        %406 = vmatpush1.bf16.msra.mxu0 0
        %407 = vmatprep.mubr.bf16.mxu0 0
        %408 = vmatmul.mubr.bf16.gmra.mrb[0].mxu0 %v373
        %v409 = vpop.f32.mrb[0].mxu0
        %v410 = vadd.f32 %v357, %v409
        %v411 = vpop.f32.mrb[0].mxu0
        %v412 = vpop.f32.mrb[0].mxu0
        %v413 = vpop.f32.mrb[0].mxu0
        %414 = vdwg.mxu0
        %vm415 = vcmask 130048
        %v416 = vsel %vm415, %v410, 0.0
        %417 = vadd.xlane.f32.xlu0 %v416
        %v418 = vpop.xlane.xlu0 %417
        %v419 = vrcp.pop 16.0
        %v420 = vmul.f32 %v418, %v419
        %v421 = vsub.f32 %v410, %v420
        %v422 = vmul.f32 %v421, %v421
        %v423 = vsel %vm415, %v422, 0.0
        %424 = vadd.xlane.f32.xlu0 %v423
        %v425 = vpop.xlane.xlu0 %424
        %v426 = vmul.f32 %v425, %v419
        %v427 = vadd.f32 %v426, 1e-05
        %v428 = vrsqrt.pop %v427
        %v429 = vmul.f32 %v421, %v428
        %v430 = vld [vmem:[%s4] sm:$0x1]
        %v432 = vlaneseq
        %v433 = vshrl.u32 %v432, 7
        %v434 = vsub.s32 0, %v433
        %v435 = vrot.slane %v430, %v434
        %v437 = vmul.f32 %v429, %v435
        %v438 = vld [vmem:[%s5] sm:$0x1]
        %v440 = vlaneseq
        %v441 = vshrl.u32 %v440, 7
        %v442 = vsub.s32 0, %v441
        %v443 = vrot.slane %v438, %v442
        %v445 = vadd.f32 %v437, %v443
        %v446 = vmax.f32 %v445, 0.0
        %v447 = vpack.c.bf16 %v446, %v446
        %v448 = vld [vmem:[%s6] sm:$0xf]
        %v449 = vld [vmem:[%s6 + $0x4] sm:$0xf]
        %v450 = vld [vmem:[%s7] sm:$0x1]
        %v452 = vlaneseq
        %v453 = vshrl.u32 %v452, 7
        %v454 = vsub.s32 0, %v453
        %v455 = vrot.slane %v450, %v454
        %v459 = vunpack.c.l.b16 %v448
        %v460 = vunpack.c.l.b16 %v449
        %v461 = vpack.c.b16 %v460, %v459
        %v464 = vsel %vm415, %v447, 0
        %466 = vmatprep.subr.bf16.mxu0 0
        %467 = vmatpush1.bf16.msra.mxu0 %v461
        %468 = vmatprep.subr.bf16.mxu0 0
        %469 = vmatpush1.bf16.msra.mxu0 0
        %470 = vmatprep.subr.bf16.mxu0 0
        %471 = vmatpush1.bf16.msra.mxu0 0
        %472 = vmatprep.subr.bf16.mxu0 0
        %473 = vmatpush1.bf16.msra.mxu0 0
        %474 = vmatprep.subr.bf16.mxu0 0
        %475 = vmatpush1.bf16.msra.mxu0 0
        %476 = vmatprep.subr.bf16.mxu0 0
        %477 = vmatpush1.bf16.msra.mxu0 0
        %478 = vmatprep.subr.bf16.mxu0 0
        %479 = vmatpush1.bf16.msra.mxu0 0
        %480 = vmatprep.subr.bf16.mxu0 0
        %481 = vmatpush1.bf16.msra.mxu0 0
        %482 = vmatprep.subr.bf16.mxu0 0
        %483 = vmatpush1.bf16.msra.mxu0 0
        %484 = vmatprep.subr.bf16.mxu0 0
        %485 = vmatpush1.bf16.msra.mxu0 0
        %486 = vmatprep.subr.bf16.mxu0 0
        %487 = vmatpush1.bf16.msra.mxu0 0
        %488 = vmatprep.subr.bf16.mxu0 0
        %489 = vmatpush1.bf16.msra.mxu0 0
        %490 = vmatprep.subr.bf16.mxu0 0
        %491 = vmatpush1.bf16.msra.mxu0 0
        %492 = vmatprep.subr.bf16.mxu0 0
        %493 = vmatpush1.bf16.msra.mxu0 0
        %494 = vmatprep.subr.bf16.mxu0 0
        %495 = vmatpush1.bf16.msra.mxu0 0
        %496 = vmatprep.subr.bf16.mxu0 0
        %497 = vmatpush1.bf16.msra.mxu0 0
        %498 = vmatprep.mubr.bf16.mxu0 0
        %499 = vmatmul.mubr.bf16.gmra.mrb[0].mxu0 %v464
        %v500 = vpop.f32.mrb[0].mxu0
        %v501 = vadd.f32 %v455, %v500
        %v502 = vpop.f32.mrb[0].mxu0
        %v503 = vpop.f32.mrb[0].mxu0
        %v504 = vpop.f32.mrb[0].mxu0
        %505 = vdwg.mxu0
        %v506 = vld [vmem:[%s340] sm:$0xff]
        %v507 = vlaneseq
        %v508 = vand.u32 %v507, 127
        %509 = vset.pattern.permute.xlu0 0
        %510 = vperm.xlu0 %509, %v506
        %v511 = vpop.permute.xlu0 %510
        %vm512 = vcmp.eq.s32.totalorder %v508, %v511
        %v513 = vsel %vm512, 1, 0
        %v514 = vcvt.s32.f32 %v513
        %v515 = vld [vmem:[%s8] sm:$0xff]
        %v516 = vld [vmem:[%s8 + $0x8] sm:$0xff]
        %v517 = vld [vmem:[%s8 + $0x10] sm:$0xff]
        %v518 = vld [vmem:[%s8 + $0x18] sm:$0xff]
        %v519 = vld [vmem:[%s8 + $0x20] sm:$0xff]
        %v520 = vld [vmem:[%s8 + $0x28] sm:$0xff]
        %v521 = vld [vmem:[%s8 + $0x30] sm:$0xff]
        %v522 = vld [vmem:[%s8 + $0x38] sm:$0xff]
        %v523 = vld [vmem:[%s8 + $0x40] sm:$0xff]
        %v524 = vld [vmem:[%s8 + $0x48] sm:$0xff]
        %v525 = vld [vmem:[%s8 + $0x50] sm:$0xff]
        %v526 = vld [vmem:[%s8 + $0x58] sm:$0xff]
        %v527 = vld [vmem:[%s8 + $0x60] sm:$0xff]
        %v528 = vld [vmem:[%s8 + $0x68] sm:$0xff]
        %v529 = vld [vmem:[%s8 + $0x70] sm:$0xff]
        %v530 = vld [vmem:[%s8 + $0x78] sm:$0xff]
        %531 = vmatprep.subr.mxu0 0.0
        %532 = vmatpush1.msra.mxu0 %v515
        %533 = vmatprep.subr.mxu0 0.0
        %534 = vmatpush1.msra.mxu0 %v516
        %535 = vmatprep.subr.mxu0 0.0
        %536 = vmatpush1.msra.mxu0 %v517
        %537 = vmatprep.subr.mxu0 0.0
        %538 = vmatpush1.msra.mxu0 %v518
        %539 = vmatprep.subr.mxu0 0.0
        %540 = vmatpush1.msra.mxu0 %v519
        %541 = vmatprep.subr.mxu0 0.0
        %542 = vmatpush1.msra.mxu0 %v520
        %543 = vmatprep.subr.mxu0 0.0
        %544 = vmatpush1.msra.mxu0 %v521
        %545 = vmatprep.subr.mxu0 0.0
        %546 = vmatpush1.msra.mxu0 %v522
        %547 = vmatprep.subr.mxu0 0.0
        %548 = vmatpush1.msra.mxu0 %v523
        %549 = vmatprep.subr.mxu0 0.0
        %550 = vmatpush1.msra.mxu0 %v524
        %551 = vmatprep.subr.mxu0 0.0
        %552 = vmatpush1.msra.mxu0 %v525
        %553 = vmatprep.subr.mxu0 0.0
        %554 = vmatpush1.msra.mxu0 %v526
        %555 = vmatprep.subr.mxu0 0.0
        %556 = vmatpush1.msra.mxu0 %v527
        %557 = vmatprep.subr.mxu0 0.0
        %558 = vmatpush1.msra.mxu0 %v528
        %559 = vmatprep.subr.mxu0 0.0
        %560 = vmatpush1.msra.mxu0 %v529
        %561 = vmatprep.subr.mxu0 0.0
        %562 = vmatpush1.msra.mxu0 %v530
        %563 = vmatprep.subr.mxu0 0.0
        %564 = vmatpush1.msra.mxu0 0.0
        %565 = vmatprep.subr.mxu0 0.0
        %566 = vmatpush1.msra.mxu0 0.0
        %567 = vmatprep.subr.mxu0 0.0
        %568 = vmatpush1.msra.mxu0 0.0
        %569 = vmatprep.subr.mxu0 0.0
        %570 = vmatpush1.msra.mxu0 0.0
        %571 = vmatprep.subr.mxu0 0.0
        %572 = vmatpush1.msra.mxu0 0.0
        %573 = vmatprep.subr.mxu0 0.0
        %574 = vmatpush1.msra.mxu0 0.0
        %575 = vmatprep.subr.mxu0 0.0
        %576 = vmatpush1.msra.mxu0 0.0
        %577 = vmatprep.subr.mxu0 0.0
        %578 = vmatpush1.msra.mxu0 0.0
        %579 = vmatprep.subr.mxu0 0.0
        %580 = vmatpush1.msra.mxu0 0.0
        %581 = vmatprep.subr.mxu0 0.0
        %582 = vmatpush1.msra.mxu0 0.0
        %583 = vmatprep.subr.mxu0 0.0
        %584 = vmatpush1.msra.mxu0 0.0
        %585 = vmatprep.subr.mxu0 0.0
        %586 = vmatpush1.msra.mxu0 0.0
        %587 = vmatprep.subr.mxu0 0.0
        %588 = vmatpush1.msra.mxu0 0.0
        %589 = vmatprep.subr.mxu0 0.0
        %590 = vmatpush1.msra.mxu0 0.0
        %591 = vmatprep.subr.mxu0 0.0
        %592 = vmatpush1.msra.mxu0 0.0
        %593 = vmatprep.subr.mxu0 0.0
        %594 = vmatpush1.msra.mxu0 0.0
        %595 = vmatprep.mubr.f32.mxu0 0.0
        %596 = vmatmul.mubr.f32.gmra.mrb[0].mxu0 %v514
        %v597 = vpop.f32.mrb[0].mxu0
        %v598 = vadd.f32 0.0, %v597
        %v599 = vpop.f32.mrb[0].mxu0
        %600 = vdwg.mxu0
        %vm601 = vcmp.gt.f32.partialorder %v598, 0.5
        %v602 = vsel %vm601, %v501, -60000.0
        %603 = vst [vmem:[%s336] sm:$0xff] %v602
        %s604 = sand.u32 %s230, 1
        %s605 = scalar_lea.sflag [#allocation3], %s604
        %s606 = sand.u32 %s230, 1
        %s607 = smul.addr %s606, 8
        %s608 = scalar_lea.vmem [#allocation2], %s607
        // Predicated region
        $region57: #{actor_forward.3} parent=55 // pred_check
          %p609 = pneg %p240
        $region58: #{actor_forward.3} parent=55 // pred_check_branch
          %611 = sbr.rel (%p609) target = $region60
        $region59: #{actor_forward.3} parent=55 // pred_region
          %s613 = ssub.s32 128, 128
          %614 = vsyncadd %s605, %s613
          %s615 = smul.addr %s23, 128
          %s616 = scalar_lea.hbm %s9, %s615
          %s618 = sshll.u32 %s608, 4
          %s619 = int_to_ptr.vmem [resolvable:$true] %s618
          %621 = dma.vmem_to_hbm [thread:$0]  %s619, 128, %s616, %s605
        $region60: #{actor_forward.3} parent=55 // pred_fallthru
          _
      $region56: #{actor_forward.3} parent=5 // pred_fallthru
        _
      %p622 = scmp.le.s32.totalorder 2, %s18
      // Predicated region
      $region61: #{actor_forward.3} parent=5 // pred_check
        %p623 = pneg %p622
      $region62: #{actor_forward.3} parent=5 // pred_check_branch
        %625 = sbr.rel (%p623) target = $region64
      $region63: #{actor_forward.3} parent=5 // pred_region
        %s626 = ssub.s32 %s18, 2
        // Predicated region
        $region65: #{actor_forward.3} parent=63 // pred_check
          %p627 = pneg %p246
        $region66: #{actor_forward.3} parent=63 // pred_check_branch
          %629 = sbr.rel (%p627) target = $region68
        $region67: #{actor_forward.3} parent=63 // pred_region
          %s630 = sand.u32 %s231, 1
          %s631 = scalar_lea.sflag [#allocation3], %s630
          %s632 = sand.u32 %s231, 1
          %s633 = smul.addr %s632, 8
          %s634 = scalar_lea.vmem [#allocation2], %s633
          %635 = dma.done %s631, 128
        $region68: #{actor_forward.3} parent=63 // pred_fallthru
          _
      $region64: #{actor_forward.3} parent=5 // pred_fallthru
        _
    $region6: #{actor_forward.3} parent=1 // loop_footer
      %s22 = sadd.s32 1, %s18
    $region7: #{actor_forward.3} parent=1 // loop_footer_branch
      %17 = sbr.rel target = $region3
    $region8: #{actor_forward.3} parent=1 // loop_exit
      _
    %636 = vsyncpa [#allocation3], 1
    %s637 = scalar_lea.sflag [#allocation3], 1
    %638 = vsyncpa %s637, 1

// kernel: actor_forward.2
$region0: #{actor_forward.2}
  #allocation0 [shape = 'u32[]', space=smem, size = 0x4, offset = 0x4, fixed_abs, tag = 'smem constant byte address 0x4 - core index']
  #allocation1 [shape = 'u32[144,128]{1,0:T(1,128)}', space=vmem, size = 0x12000, scoped, tag = 'internal scratch']
  #allocation2 [shape = 'f32[8,32]{1,0:T(8,128)}', space=vmem, size = 0x1000, scoped, tag = 'scratch operand']
  %s0 = inlined_call_operand.vmem [shape: s32[2,1,8], index: 0, kind: input, shape index: {}]
  %s1 = inlined_call_operand.vmem [shape: f32[2,8,32], index: 1, kind: input, shape index: {}]
  %s2 = inlined_call_operand.vmem [shape: bf16[2,32,96], index: 2, kind: input, shape index: {}]
  %s3 = inlined_call_operand.vmem [shape: f32[2,1,96], index: 3, kind: input, shape index: {}]
  %s4 = inlined_call_operand.vmem [shape: bf16[2,32,32], index: 4, kind: input, shape index: {}]
  %s5 = inlined_call_operand.vmem [shape: f32[2,1,32], index: 5, kind: input, shape index: {}]
  %s6 = inlined_call_operand.vmem [shape: f32[2,1,32], index: 6, kind: input, shape index: {}]
  %s7 = inlined_call_operand.vmem [shape: f32[2,1,32], index: 7, kind: input, shape index: {}]
  %s8 = inlined_call_operand.vmem [shape: bf16[2,32,128], index: 8, kind: input, shape index: {}]
  %s9 = inlined_call_operand.vmem [shape: f32[2,1,128], index: 9, kind: input, shape index: {}]
  %s10 = inlined_call_operand.vmem [shape: bf16[2,4,32,64], index: 10, kind: input, shape index: {}]
  %s11 = inlined_call_operand.vmem [shape: f32[2,4,1,64], index: 11, kind: input, shape index: {}]
  %s12 = inlined_call_operand.vmem [shape: bf16[2,4,64,32], index: 12, kind: input, shape index: {}]
  %s13 = inlined_call_operand.vmem [shape: f32[2,4,1,32], index: 13, kind: input, shape index: {}]
  %s14 = inlined_call_operand.vmem [shape: f32[2,1,32], index: 14, kind: input, shape index: {}]
  %s15 = inlined_call_operand.vmem [shape: f32[2,1,32], index: 15, kind: input, shape index: {}]
  %s16 = inlined_call_operand.vmem [shape: f32[2,8,32], index: 16, kind: output, shape index: {0}]
  %s17 = inlined_call_operand.vmem [shape: f32[2,2,8,128], index: 17, kind: output, shape index: {1}]
  %18 = xla_tuple %s16, %s17
  %s19 = sld [smem:[#allocation0]]
  $region113: #{actor_forward.2} parent=0
    _
  %s21 = ssub.s32 1, %s19
  %s22 = scalar_select 0, %s21, %s19
  loop: start=0, step=1, limit=6
  $region2: #{actor_forward.2} parent=0 // loop_pre_header
    _
  $region3: #{actor_forward.2} parent=0 // loop_header
    %s24 = sphi 0, %s28
    %p25 = scmp.ge.s32.totalorder %s24, 6
    %s31 = sphi 0, %s43
    %s32 = sphi 0, %s39
    %s33 = sphi 0, %s31
    %s34 = sphi 0, %s32
    %s35 = sphi 0, %s33
    %s36 = sphi 0, %s34
    %s46 = sphi 0, %s48
    %s49 = sphi 0, %s46
    %s50 = sphi 0, %s49
    %s66 = sphi 0, %s50
    %s72 = sphi 0, %s74
    %s75 = sphi 0, %s72
    %s76 = sphi 0, %s75
    %s92 = sphi 0, %s76
    %s98 = sphi 0, %s100
    %s101 = sphi 0, %s98
    %s102 = sphi 0, %s101
    %s118 = sphi 0, %s102
    %s124 = sphi 0, %s126
    %s127 = sphi 0, %s124
    %s128 = sphi 0, %s127
    %s144 = sphi 0, %s128
    %s150 = sphi 0, %s152
    %s153 = sphi 0, %s150
    %s154 = sphi 0, %s153
    %s170 = sphi 0, %s154
    %s176 = sphi 0, %s178
    %s179 = sphi 0, %s176
    %s180 = sphi 0, %s179
    %s196 = sphi 0, %s180
    %s202 = sphi 0, %s204
    %s205 = sphi 0, %s202
    %s206 = sphi 0, %s205
    %s222 = sphi 0, %s206
    %s228 = sphi 0, %s230
    %s231 = sphi 0, %s228
    %s232 = sphi 0, %s231
    %s248 = sphi 0, %s232
    %s254 = sphi 0, %s256
    %s257 = sphi 0, %s254
    %s258 = sphi 0, %s257
    %s274 = sphi 0, %s258
    %s280 = sphi 0, %s282
    %s283 = sphi 0, %s280
    %s284 = sphi 0, %s283
    %s300 = sphi 0, %s284
    %s306 = sphi 0, %s308
    %s309 = sphi 0, %s306
    %s310 = sphi 0, %s309
    %s326 = sphi 0, %s310
    %s332 = sphi 0, %s334
    %s335 = sphi 0, %s332
    %s336 = sphi 0, %s335
    %s352 = sphi 0, %s336
    %s358 = sphi 0, %s360
    %s361 = sphi 0, %s358
    %s362 = sphi 0, %s361
    %s378 = sphi 0, %s362
    %s384 = sphi 0, %s386
    %s387 = sphi 0, %s384
    %s388 = sphi 0, %s387
    %s404 = sphi 0, %s388
    %s410 = sphi 0, %s412
    %s413 = sphi 0, %s410
    %s414 = sphi 0, %s413
    %s430 = sphi 0, %s414
    %s436 = sphi 0, %s438
    %s439 = sphi 0, %s436
    %s440 = sphi 0, %s439
    %s456 = sphi 0, %s440
    %s462 = sphi 0, %s464
    %s465 = sphi 0, %s462
    %s466 = sphi 0, %s465
    %s482 = sphi 0, %s466
    %s490 = sphi 0, %s492
    %s493 = sphi 0, %s490
    %s494 = sphi 0, %s493
    %s510 = sphi 0, %s494
  $region4: #{actor_forward.2} parent=0 // loop_header_branch
    %27 = sbr.rel (%p25) target = $region8
  $region5: #{actor_forward.2} parent=0 // loop_body
    %s29 = ssub.s32 %s24, 1
    %s30 = ssub.s32 %s24, 2
    %s37 = sadd.s32 1, %s32
    %p38 = scmp.ge.s32.totalorder %s37, 2
    %s39 = scalar_select %p38, 0, %s37
    %s40 = sadd.s32 1, %s31
    %s41 = scalar_select %p38, %s40, %s31
    %p42 = scmp.ge.s32.totalorder %s41, 2
    %s43 = scalar_select %p42, 0, %s41
    %s44 = ssub.s32 %s31, %s43
    %p45 = scmp.eq.s32.totalorder %s44, 0
    %s47 = sadd.s32 %s46, 1
    %s48 = scalar_select %p45, %s46, %s47
    %p51 = pneg %p45
    %p52 = scmp.eq.s32.totalorder %s24, 3
    %p53 = por %p51, %p52
    %p54 = scmp.ne.s32.totalorder %s46, %s49
    %p55 = scmp.eq.s32.totalorder %s24, 0
    %p56 = por %p54, %p55
    %p57 = scmp.ne.s32.totalorder %s46, %s49
    %p58 = scmp.eq.s32.totalorder %s29, 3
    %p59 = por %p57, %p58
    %p60 = scmp.ne.s32.totalorder %s49, %s50
    %p61 = scmp.eq.s32.totalorder %s29, 0
    %p62 = por %p60, %p61
    %p63 = scmp.ne.s32.totalorder %s49, %s50
    %p64 = scmp.eq.s32.totalorder %s30, 3
    %p65 = por %p63, %p64
    %p67 = scmp.ne.s32.totalorder %s50, %s66
    %p68 = scmp.eq.s32.totalorder %s30, 0
    %p69 = por %p67, %p68
    %s70 = ssub.s32 %s31, %s43
    %p71 = scmp.eq.s32.totalorder %s70, 0
    %s73 = sadd.s32 %s72, 1
    %s74 = scalar_select %p71, %s72, %s73
    %p77 = pneg %p71
    %p78 = scmp.eq.s32.totalorder %s24, 3
    %p79 = por %p77, %p78
    %p80 = scmp.ne.s32.totalorder %s72, %s75
    %p81 = scmp.eq.s32.totalorder %s24, 0
    %p82 = por %p80, %p81
    %p83 = scmp.ne.s32.totalorder %s72, %s75
    %p84 = scmp.eq.s32.totalorder %s29, 3
    %p85 = por %p83, %p84
    %p86 = scmp.ne.s32.totalorder %s75, %s76
    %p87 = scmp.eq.s32.totalorder %s29, 0
    %p88 = por %p86, %p87
    %p89 = scmp.ne.s32.totalorder %s75, %s76
    %p90 = scmp.eq.s32.totalorder %s30, 3
    %p91 = por %p89, %p90
    %p93 = scmp.ne.s32.totalorder %s76, %s92
    %p94 = scmp.eq.s32.totalorder %s30, 0
    %p95 = por %p93, %p94
    %s96 = ssub.s32 %s32, %s39
    %p97 = scmp.eq.s32.totalorder %s96, 0
    %s99 = sadd.s32 %s98, 1
    %s100 = scalar_select %p97, %s98, %s99
    %p103 = pneg %p97
    %p104 = scmp.eq.s32.totalorder %s24, 3
    %p105 = por %p103, %p104
    %p106 = scmp.ne.s32.totalorder %s98, %s101
    %p107 = scmp.eq.s32.totalorder %s24, 0
    %p108 = por %p106, %p107
    %p109 = scmp.ne.s32.totalorder %s98, %s101
    %p110 = scmp.eq.s32.totalorder %s29, 3
    %p111 = por %p109, %p110
    %p112 = scmp.ne.s32.totalorder %s101, %s102
    %p113 = scmp.eq.s32.totalorder %s29, 0
    %p114 = por %p112, %p113
    %p115 = scmp.ne.s32.totalorder %s101, %s102
    %p116 = scmp.eq.s32.totalorder %s30, 3
    %p117 = por %p115, %p116
    %p119 = scmp.ne.s32.totalorder %s102, %s118
    %p120 = scmp.eq.s32.totalorder %s30, 0
    %p121 = por %p119, %p120
    %s122 = ssub.s32 %s32, %s39
    %p123 = scmp.eq.s32.totalorder %s122, 0
    %s125 = sadd.s32 %s124, 1
    %s126 = scalar_select %p123, %s124, %s125
    %p129 = pneg %p123
    %p130 = scmp.eq.s32.totalorder %s24, 3
    %p131 = por %p129, %p130
    %p132 = scmp.ne.s32.totalorder %s124, %s127
    %p133 = scmp.eq.s32.totalorder %s24, 0
    %p134 = por %p132, %p133
    %p135 = scmp.ne.s32.totalorder %s124, %s127
    %p136 = scmp.eq.s32.totalorder %s29, 3
    %p137 = por %p135, %p136
    %p138 = scmp.ne.s32.totalorder %s127, %s128
    %p139 = scmp.eq.s32.totalorder %s29, 0
    %p140 = por %p138, %p139
    %p141 = scmp.ne.s32.totalorder %s127, %s128
    %p142 = scmp.eq.s32.totalorder %s30, 3
    %p143 = por %p141, %p142
    %p145 = scmp.ne.s32.totalorder %s128, %s144
    %p146 = scmp.eq.s32.totalorder %s30, 0
    %p147 = por %p145, %p146
    %s148 = ssub.s32 %s32, %s39
    %p149 = scmp.eq.s32.totalorder %s148, 0
    %s151 = sadd.s32 %s150, 1
    %s152 = scalar_select %p149, %s150, %s151
    %p155 = pneg %p149
    %p156 = scmp.eq.s32.totalorder %s24, 3
    %p157 = por %p155, %p156
    %p158 = scmp.ne.s32.totalorder %s150, %s153
    %p159 = scmp.eq.s32.totalorder %s24, 0
    %p160 = por %p158, %p159
    %p161 = scmp.ne.s32.totalorder %s150, %s153
    %p162 = scmp.eq.s32.totalorder %s29, 3
    %p163 = por %p161, %p162
    %p164 = scmp.ne.s32.totalorder %s153, %s154
    %p165 = scmp.eq.s32.totalorder %s29, 0
    %p166 = por %p164, %p165
    %p167 = scmp.ne.s32.totalorder %s153, %s154
    %p168 = scmp.eq.s32.totalorder %s30, 3
    %p169 = por %p167, %p168
    %p171 = scmp.ne.s32.totalorder %s154, %s170
    %p172 = scmp.eq.s32.totalorder %s30, 0
    %p173 = por %p171, %p172
    %s174 = ssub.s32 %s32, %s39
    %p175 = scmp.eq.s32.totalorder %s174, 0
    %s177 = sadd.s32 %s176, 1
    %s178 = scalar_select %p175, %s176, %s177
    %p181 = pneg %p175
    %p182 = scmp.eq.s32.totalorder %s24, 3
    %p183 = por %p181, %p182
    %p184 = scmp.ne.s32.totalorder %s176, %s179
    %p185 = scmp.eq.s32.totalorder %s24, 0
    %p186 = por %p184, %p185
    %p187 = scmp.ne.s32.totalorder %s176, %s179
    %p188 = scmp.eq.s32.totalorder %s29, 3
    %p189 = por %p187, %p188
    %p190 = scmp.ne.s32.totalorder %s179, %s180
    %p191 = scmp.eq.s32.totalorder %s29, 0
    %p192 = por %p190, %p191
    %p193 = scmp.ne.s32.totalorder %s179, %s180
    %p194 = scmp.eq.s32.totalorder %s30, 3
    %p195 = por %p193, %p194
    %p197 = scmp.ne.s32.totalorder %s180, %s196
    %p198 = scmp.eq.s32.totalorder %s30, 0
    %p199 = por %p197, %p198
    %s200 = ssub.s32 %s32, %s39
    %p201 = scmp.eq.s32.totalorder %s200, 0
    %s203 = sadd.s32 %s202, 1
    %s204 = scalar_select %p201, %s202, %s203
    %p207 = pneg %p201
    %p208 = scmp.eq.s32.totalorder %s24, 3
    %p209 = por %p207, %p208
    %p210 = scmp.ne.s32.totalorder %s202, %s205
    %p211 = scmp.eq.s32.totalorder %s24, 0
    %p212 = por %p210, %p211
    %p213 = scmp.ne.s32.totalorder %s202, %s205
    %p214 = scmp.eq.s32.totalorder %s29, 3
    %p215 = por %p213, %p214
    %p216 = scmp.ne.s32.totalorder %s205, %s206
    %p217 = scmp.eq.s32.totalorder %s29, 0
    %p218 = por %p216, %p217
    %p219 = scmp.ne.s32.totalorder %s205, %s206
    %p220 = scmp.eq.s32.totalorder %s30, 3
    %p221 = por %p219, %p220
    %p223 = scmp.ne.s32.totalorder %s206, %s222
    %p224 = scmp.eq.s32.totalorder %s30, 0
    %p225 = por %p223, %p224
    %s226 = ssub.s32 %s32, %s39
    %p227 = scmp.eq.s32.totalorder %s226, 0
    %s229 = sadd.s32 %s228, 1
    %s230 = scalar_select %p227, %s228, %s229
    %p233 = pneg %p227
    %p234 = scmp.eq.s32.totalorder %s24, 3
    %p235 = por %p233, %p234
    %p236 = scmp.ne.s32.totalorder %s228, %s231
    %p237 = scmp.eq.s32.totalorder %s24, 0
    %p238 = por %p236, %p237
    %p239 = scmp.ne.s32.totalorder %s228, %s231
    %p240 = scmp.eq.s32.totalorder %s29, 3
    %p241 = por %p239, %p240
    %p242 = scmp.ne.s32.totalorder %s231, %s232
    %p243 = scmp.eq.s32.totalorder %s29, 0
    %p244 = por %p242, %p243
    %p245 = scmp.ne.s32.totalorder %s231, %s232
    %p246 = scmp.eq.s32.totalorder %s30, 3
    %p247 = por %p245, %p246
    %p249 = scmp.ne.s32.totalorder %s232, %s248
    %p250 = scmp.eq.s32.totalorder %s30, 0
    %p251 = por %p249, %p250
    %s252 = ssub.s32 %s32, %s39
    %p253 = scmp.eq.s32.totalorder %s252, 0
    %s255 = sadd.s32 %s254, 1
    %s256 = scalar_select %p253, %s254, %s255
    %p259 = pneg %p253
    %p260 = scmp.eq.s32.totalorder %s24, 3
    %p261 = por %p259, %p260
    %p262 = scmp.ne.s32.totalorder %s254, %s257
    %p263 = scmp.eq.s32.totalorder %s24, 0
    %p264 = por %p262, %p263
    %p265 = scmp.ne.s32.totalorder %s254, %s257
    %p266 = scmp.eq.s32.totalorder %s29, 3
    %p267 = por %p265, %p266
    %p268 = scmp.ne.s32.totalorder %s257, %s258
    %p269 = scmp.eq.s32.totalorder %s29, 0
    %p270 = por %p268, %p269
    %p271 = scmp.ne.s32.totalorder %s257, %s258
    %p272 = scmp.eq.s32.totalorder %s30, 3
    %p273 = por %p271, %p272
    %p275 = scmp.ne.s32.totalorder %s258, %s274
    %p276 = scmp.eq.s32.totalorder %s30, 0
    %p277 = por %p275, %p276
    %s278 = ssub.s32 %s32, %s39
    %p279 = scmp.eq.s32.totalorder %s278, 0
    %s281 = sadd.s32 %s280, 1
    %s282 = scalar_select %p279, %s280, %s281
    %p285 = pneg %p279
    %p286 = scmp.eq.s32.totalorder %s24, 3
    %p287 = por %p285, %p286
    %p288 = scmp.ne.s32.totalorder %s280, %s283
    %p289 = scmp.eq.s32.totalorder %s24, 0
    %p290 = por %p288, %p289
    %p291 = scmp.ne.s32.totalorder %s280, %s283
    %p292 = scmp.eq.s32.totalorder %s29, 3
    %p293 = por %p291, %p292
    %p294 = scmp.ne.s32.totalorder %s283, %s284
    %p295 = scmp.eq.s32.totalorder %s29, 0
    %p296 = por %p294, %p295
    %p297 = scmp.ne.s32.totalorder %s283, %s284
    %p298 = scmp.eq.s32.totalorder %s30, 3
    %p299 = por %p297, %p298
    %p301 = scmp.ne.s32.totalorder %s284, %s300
    %p302 = scmp.eq.s32.totalorder %s30, 0
    %p303 = por %p301, %p302
    %s304 = ssub.s32 %s32, %s39
    %p305 = scmp.eq.s32.totalorder %s304, 0
    %s307 = sadd.s32 %s306, 1
    %s308 = scalar_select %p305, %s306, %s307
    %p311 = pneg %p305
    %p312 = scmp.eq.s32.totalorder %s24, 3
    %p313 = por %p311, %p312
    %p314 = scmp.ne.s32.totalorder %s306, %s309
    %p315 = scmp.eq.s32.totalorder %s24, 0
    %p316 = por %p314, %p315
    %p317 = scmp.ne.s32.totalorder %s306, %s309
    %p318 = scmp.eq.s32.totalorder %s29, 3
    %p319 = por %p317, %p318
    %p320 = scmp.ne.s32.totalorder %s309, %s310
    %p321 = scmp.eq.s32.totalorder %s29, 0
    %p322 = por %p320, %p321
    %p323 = scmp.ne.s32.totalorder %s309, %s310
    %p324 = scmp.eq.s32.totalorder %s30, 3
    %p325 = por %p323, %p324
    %p327 = scmp.ne.s32.totalorder %s310, %s326
    %p328 = scmp.eq.s32.totalorder %s30, 0
    %p329 = por %p327, %p328
    %s330 = ssub.s32 %s32, %s39
    %p331 = scmp.eq.s32.totalorder %s330, 0
    %s333 = sadd.s32 %s332, 1
    %s334 = scalar_select %p331, %s332, %s333
    %p337 = pneg %p331
    %p338 = scmp.eq.s32.totalorder %s24, 3
    %p339 = por %p337, %p338
    %p340 = scmp.ne.s32.totalorder %s332, %s335
    %p341 = scmp.eq.s32.totalorder %s24, 0
    %p342 = por %p340, %p341
    %p343 = scmp.ne.s32.totalorder %s332, %s335
    %p344 = scmp.eq.s32.totalorder %s29, 3
    %p345 = por %p343, %p344
    %p346 = scmp.ne.s32.totalorder %s335, %s336
    %p347 = scmp.eq.s32.totalorder %s29, 0
    %p348 = por %p346, %p347
    %p349 = scmp.ne.s32.totalorder %s335, %s336
    %p350 = scmp.eq.s32.totalorder %s30, 3
    %p351 = por %p349, %p350
    %p353 = scmp.ne.s32.totalorder %s336, %s352
    %p354 = scmp.eq.s32.totalorder %s30, 0
    %p355 = por %p353, %p354
    %s356 = ssub.s32 %s32, %s39
    %p357 = scmp.eq.s32.totalorder %s356, 0
    %s359 = sadd.s32 %s358, 1
    %s360 = scalar_select %p357, %s358, %s359
    %p363 = pneg %p357
    %p364 = scmp.eq.s32.totalorder %s24, 3
    %p365 = por %p363, %p364
    %p366 = scmp.ne.s32.totalorder %s358, %s361
    %p367 = scmp.eq.s32.totalorder %s24, 0
    %p368 = por %p366, %p367
    %p369 = scmp.ne.s32.totalorder %s358, %s361
    %p370 = scmp.eq.s32.totalorder %s29, 3
    %p371 = por %p369, %p370
    %p372 = scmp.ne.s32.totalorder %s361, %s362
    %p373 = scmp.eq.s32.totalorder %s29, 0
    %p374 = por %p372, %p373
    %p375 = scmp.ne.s32.totalorder %s361, %s362
    %p376 = scmp.eq.s32.totalorder %s30, 3
    %p377 = por %p375, %p376
    %p379 = scmp.ne.s32.totalorder %s362, %s378
    %p380 = scmp.eq.s32.totalorder %s30, 0
    %p381 = por %p379, %p380
    %s382 = ssub.s32 %s32, %s39
    %p383 = scmp.eq.s32.totalorder %s382, 0
    %s385 = sadd.s32 %s384, 1
    %s386 = scalar_select %p383, %s384, %s385
    %p389 = pneg %p383
    %p390 = scmp.eq.s32.totalorder %s24, 3
    %p391 = por %p389, %p390
    %p392 = scmp.ne.s32.totalorder %s384, %s387
    %p393 = scmp.eq.s32.totalorder %s24, 0
    %p394 = por %p392, %p393
    %p395 = scmp.ne.s32.totalorder %s384, %s387
    %p396 = scmp.eq.s32.totalorder %s29, 3
    %p397 = por %p395, %p396
    %p398 = scmp.ne.s32.totalorder %s387, %s388
    %p399 = scmp.eq.s32.totalorder %s29, 0
    %p400 = por %p398, %p399
    %p401 = scmp.ne.s32.totalorder %s387, %s388
    %p402 = scmp.eq.s32.totalorder %s30, 3
    %p403 = por %p401, %p402
    %p405 = scmp.ne.s32.totalorder %s388, %s404
    %p406 = scmp.eq.s32.totalorder %s30, 0
    %p407 = por %p405, %p406
    %s408 = ssub.s32 %s32, %s39
    %p409 = scmp.eq.s32.totalorder %s408, 0
    %s411 = sadd.s32 %s410, 1
    %s412 = scalar_select %p409, %s410, %s411
    %p415 = pneg %p409
    %p416 = scmp.eq.s32.totalorder %s24, 3
    %p417 = por %p415, %p416
    %p418 = scmp.ne.s32.totalorder %s410, %s413
    %p419 = scmp.eq.s32.totalorder %s24, 0
    %p420 = por %p418, %p419
    %p421 = scmp.ne.s32.totalorder %s410, %s413
    %p422 = scmp.eq.s32.totalorder %s29, 3
    %p423 = por %p421, %p422
    %p424 = scmp.ne.s32.totalorder %s413, %s414
    %p425 = scmp.eq.s32.totalorder %s29, 0
    %p426 = por %p424, %p425
    %p427 = scmp.ne.s32.totalorder %s413, %s414
    %p428 = scmp.eq.s32.totalorder %s30, 3
    %p429 = por %p427, %p428
    %p431 = scmp.ne.s32.totalorder %s414, %s430
    %p432 = scmp.eq.s32.totalorder %s30, 0
    %p433 = por %p431, %p432
    %s434 = ssub.s32 %s32, %s39
    %p435 = scmp.eq.s32.totalorder %s434, 0
    %s437 = sadd.s32 %s436, 1
    %s438 = scalar_select %p435, %s436, %s437
    %p441 = pneg %p435
    %p442 = scmp.eq.s32.totalorder %s24, 3
    %p443 = por %p441, %p442
    %p444 = scmp.ne.s32.totalorder %s436, %s439
    %p445 = scmp.eq.s32.totalorder %s24, 0
    %p446 = por %p444, %p445
    %p447 = scmp.ne.s32.totalorder %s436, %s439
    %p448 = scmp.eq.s32.totalorder %s29, 3
    %p449 = por %p447, %p448
    %p450 = scmp.ne.s32.totalorder %s439, %s440
    %p451 = scmp.eq.s32.totalorder %s29, 0
    %p452 = por %p450, %p451
    %p453 = scmp.ne.s32.totalorder %s439, %s440
    %p454 = scmp.eq.s32.totalorder %s30, 3
    %p455 = por %p453, %p454
    %p457 = scmp.ne.s32.totalorder %s440, %s456
    %p458 = scmp.eq.s32.totalorder %s30, 0
    %p459 = por %p457, %p458
    %s460 = ssub.s32 %s31, %s43
    %p461 = scmp.eq.s32.totalorder %s460, 0
    %s463 = sadd.s32 %s462, 1
    %s464 = scalar_select %p461, %s462, %s463
    %p467 = pneg %p461
    %p468 = scmp.eq.s32.totalorder %s24, 3
    %p469 = por %p467, %p468
    %p470 = scmp.ne.s32.totalorder %s462, %s465
    %p471 = scmp.eq.s32.totalorder %s24, 0
    %p472 = por %p470, %p471
    %p473 = scmp.ne.s32.totalorder %s462, %s465
    %p474 = scmp.eq.s32.totalorder %s29, 3
    %p475 = por %p473, %p474
    %p476 = scmp.ne.s32.totalorder %s465, %s466
    %p477 = scmp.eq.s32.totalorder %s29, 0
    %p478 = por %p476, %p477
    %p479 = scmp.ne.s32.totalorder %s465, %s466
    %p480 = scmp.eq.s32.totalorder %s30, 3
    %p481 = por %p479, %p480
    %p483 = scmp.ne.s32.totalorder %s466, %s482
    %p484 = scmp.eq.s32.totalorder %s30, 0
    %p485 = por %p483, %p484
    %s486 = ssub.s32 %s32, %s39
    %s487 = ssub.s32 %s31, %s43
    %s488 = sor.u32 %s486, %s487
    %p489 = scmp.eq.s32.totalorder %s488, 0
    %s491 = sadd.s32 %s490, 1
    %s492 = scalar_select %p489, %s490, %s491
    %p495 = pneg %p489
    %p496 = scmp.eq.s32.totalorder %s24, 3
    %p497 = por %p495, %p496
    %p498 = scmp.ne.s32.totalorder %s490, %s493
    %p499 = scmp.eq.s32.totalorder %s24, 0
    %p500 = por %p498, %p499
    %p501 = scmp.ne.s32.totalorder %s490, %s493
    %p502 = scmp.eq.s32.totalorder %s29, 3
    %p503 = por %p501, %p502
    %p504 = scmp.ne.s32.totalorder %s493, %s494
    %p505 = scmp.eq.s32.totalorder %s29, 0
    %p506 = por %p504, %p505
    %p507 = scmp.ne.s32.totalorder %s493, %s494
    %p508 = scmp.eq.s32.totalorder %s30, 3
    %p509 = por %p507, %p508
    %p511 = scmp.ne.s32.totalorder %s494, %s510
    %p512 = scmp.eq.s32.totalorder %s30, 0
    %p513 = por %p511, %p512
    %p514 = scmp.le.s32.totalorder 1, %s24
    %p515 = scmp.lt.s32.totalorder %s24, 5
    %p516 = pnand %p514, %p515
    %p517 = pneg %p516
    // Predicated region
    $region9: #{actor_forward.2} parent=5 // pred_check
      _
    $region10: #{actor_forward.2} parent=5 // pred_check_branch
      %519 = sbr.rel (%p516) target = $region12
    $region11: #{actor_forward.2} parent=5 // pred_region
      %s520 = ssub.s32 %s24, 1
    $region12: #{actor_forward.2} parent=5 // pred_fallthru
      _
    %p521 = scmp.lt.s32.totalorder %s24, 4
    // Predicated region
    $region13: #{actor_forward.2} parent=5 // pred_check
      %p522 = pneg %p521
    $region14: #{actor_forward.2} parent=5 // pred_check_branch
      %524 = sbr.rel (%p522) target = $region16
    $region15: #{actor_forward.2} parent=5 // pred_region
      // Predicated region
      $region17: #{actor_forward.2} parent=15 // pred_check
        %p525 = pneg %p56
      $region18: #{actor_forward.2} parent=15 // pred_check_branch
        %527 = sbr.rel (%p525) target = $region20
      $region19: #{actor_forward.2} parent=15 // pred_region
        %p528 = scmp.lt.s32.totalorder %s31, 1
        %s529 = scalar_select %p528, %s31, 1
        %s530 = scalar_lea.vmem %s0, %s529
      $region20: #{actor_forward.2} parent=15 // pred_fallthru
        _
      // Predicated region
      $region21: #{actor_forward.2} parent=15 // pred_check
        %p531 = pneg %p82
      $region22: #{actor_forward.2} parent=15 // pred_check_branch
        %533 = sbr.rel (%p531) target = $region24
      $region23: #{actor_forward.2} parent=15 // pred_region
        %p534 = scmp.lt.s32.totalorder %s31, 1
        %s535 = scalar_select %p534, %s31, 1
        %s536 = smul.addr %s535, 8
        %s537 = scalar_lea.vmem %s1, %s536
      $region24: #{actor_forward.2} parent=15 // pred_fallthru
        _
      // Predicated region
      $region25: #{actor_forward.2} parent=15 // pred_check
        %p538 = pneg %p108
      $region26: #{actor_forward.2} parent=15 // pred_check_branch
        %540 = sbr.rel (%p538) target = $region28
      $region27: #{actor_forward.2} parent=15 // pred_region
        %p541 = scmp.lt.s32.totalorder %s32, 1
        %s542 = scalar_select %p541, %s32, 1
        %s543 = smul.addr %s542, 4
        %s544 = smul.addr %s543, 4
        %s545 = scalar_lea.vmem %s2, %s544
      $region28: #{actor_forward.2} parent=15 // pred_fallthru
        _
      // Predicated region
      $region29: #{actor_forward.2} parent=15 // pred_check
        %p546 = pneg %p134
      $region30: #{actor_forward.2} parent=15 // pred_check_branch
        %548 = sbr.rel (%p546) target = $region32
      $region31: #{actor_forward.2} parent=15 // pred_region
        %p549 = scmp.lt.s32.totalorder %s32, 1
        %s550 = scalar_select %p549, %s32, 1
        %s551 = scalar_lea.vmem %s3, %s550
      $region32: #{actor_forward.2} parent=15 // pred_fallthru
        _
      // Predicated region
      $region33: #{actor_forward.2} parent=15 // pred_check
        %p552 = pneg %p160
      $region34: #{actor_forward.2} parent=15 // pred_check_branch
        %554 = sbr.rel (%p552) target = $region36
      $region35: #{actor_forward.2} parent=15 // pred_region
        %p555 = scmp.lt.s32.totalorder %s32, 1
        %s556 = scalar_select %p555, %s32, 1
        %s557 = smul.addr %s556, 4
        %s558 = smul.addr %s557, 4
        %s559 = scalar_lea.vmem %s4, %s558
      $region36: #{actor_forward.2} parent=15 // pred_fallthru
        _
      // Predicated region
      $region37: #{actor_forward.2} parent=15 // pred_check
        %p560 = pneg %p186
      $region38: #{actor_forward.2} parent=15 // pred_check_branch
        %562 = sbr.rel (%p560) target = $region40
      $region39: #{actor_forward.2} parent=15 // pred_region
        %p563 = scmp.lt.s32.totalorder %s32, 1
        %s564 = scalar_select %p563, %s32, 1
        %s565 = scalar_lea.vmem %s5, %s564
      $region40: #{actor_forward.2} parent=15 // pred_fallthru
        _
      // Predicated region
      $region41: #{actor_forward.2} parent=15 // pred_check
        %p566 = pneg %p212
      $region42: #{actor_forward.2} parent=15 // pred_check_branch
        %568 = sbr.rel (%p566) target = $region44
      $region43: #{actor_forward.2} parent=15 // pred_region
        %p569 = scmp.lt.s32.totalorder %s32, 1
        %s570 = scalar_select %p569, %s32, 1
        %s571 = scalar_lea.vmem %s6, %s570
      $region44: #{actor_forward.2} parent=15 // pred_fallthru
        _
      // Predicated region
      $region45: #{actor_forward.2} parent=15 // pred_check
        %p572 = pneg %p238
      $region46: #{actor_forward.2} parent=15 // pred_check_branch
        %574 = sbr.rel (%p572) target = $region48
      $region47: #{actor_forward.2} parent=15 // pred_region
        %p575 = scmp.lt.s32.totalorder %s32, 1
        %s576 = scalar_select %p575, %s32, 1
        %s577 = scalar_lea.vmem %s7, %s576
      $region48: #{actor_forward.2} parent=15 // pred_fallthru
        _
      // Predicated region
      $region49: #{actor_forward.2} parent=15 // pred_check
        %p578 = pneg %p264
      $region50: #{actor_forward.2} parent=15 // pred_check_branch
        %580 = sbr.rel (%p578) target = $region52
      $region51: #{actor_forward.2} parent=15 // pred_region
        %p581 = scmp.lt.s32.totalorder %s32, 1
        %s582 = scalar_select %p581, %s32, 1
        %s583 = smul.addr %s582, 4
        %s584 = smul.addr %s583, 4
        %s585 = scalar_lea.vmem %s8, %s584
      $region52: #{actor_forward.2} parent=15 // pred_fallthru
        _
      // Predicated region
      $region53: #{actor_forward.2} parent=15 // pred_check
        %p586 = pneg %p290
      $region54: #{actor_forward.2} parent=15 // pred_check_branch
        %588 = sbr.rel (%p586) target = $region56
      $region55: #{actor_forward.2} parent=15 // pred_region
        %p589 = scmp.lt.s32.totalorder %s32, 1
        %s590 = scalar_select %p589, %s32, 1
        %s591 = scalar_lea.vmem %s9, %s590
      $region56: #{actor_forward.2} parent=15 // pred_fallthru
        _
      // Predicated region
      $region57: #{actor_forward.2} parent=15 // pred_check
        %p592 = pneg %p316
      $region58: #{actor_forward.2} parent=15 // pred_check_branch
        %594 = sbr.rel (%p592) target = $region60
      $region59: #{actor_forward.2} parent=15 // pred_region
        %p595 = scmp.lt.s32.totalorder %s32, 1
        %s596 = scalar_select %p595, %s32, 1
        %s597 = smul.addr %s596, 16
        %s598 = smul.addr %s597, 4
        %s599 = scalar_lea.vmem %s10, %s598
      $region60: #{actor_forward.2} parent=15 // pred_fallthru
        _
      // Predicated region
      $region61: #{actor_forward.2} parent=15 // pred_check
        %p600 = pneg %p342
      $region62: #{actor_forward.2} parent=15 // pred_check_branch
        %602 = sbr.rel (%p600) target = $region64
      $region63: #{actor_forward.2} parent=15 // pred_region
        %p603 = scmp.lt.s32.totalorder %s32, 1
        %s604 = scalar_select %p603, %s32, 1
        %s605 = smul.addr %s604, 4
        %s606 = scalar_lea.vmem %s11, %s605
      $region64: #{actor_forward.2} parent=15 // pred_fallthru
        _
      // Predicated region
      $region65: #{actor_forward.2} parent=15 // pred_check
        %p607 = pneg %p368
      $region66: #{actor_forward.2} parent=15 // pred_check_branch
        %609 = sbr.rel (%p607) target = $region68
      $region67: #{actor_forward.2} parent=15 // pred_region
        %p610 = scmp.lt.s32.totalorder %s32, 1
        %s611 = scalar_select %p610, %s32, 1
        %s612 = smul.addr %s611, 32
        %s613 = smul.addr %s612, 4
        %s614 = scalar_lea.vmem %s12, %s613
      $region68: #{actor_forward.2} parent=15 // pred_fallthru
        _
      // Predicated region
      $region69: #{actor_forward.2} parent=15 // pred_check
        %p615 = pneg %p394
      $region70: #{actor_forward.2} parent=15 // pred_check_branch
        %617 = sbr.rel (%p615) target = $region72
      $region71: #{actor_forward.2} parent=15 // pred_region
        %p618 = scmp.lt.s32.totalorder %s32, 1
        %s619 = scalar_select %p618, %s32, 1
        %s620 = smul.addr %s619, 4
        %s621 = scalar_lea.vmem %s13, %s620
      $region72: #{actor_forward.2} parent=15 // pred_fallthru
        _
      // Predicated region
      $region73: #{actor_forward.2} parent=15 // pred_check
        %p622 = pneg %p420
      $region74: #{actor_forward.2} parent=15 // pred_check_branch
        %624 = sbr.rel (%p622) target = $region76
      $region75: #{actor_forward.2} parent=15 // pred_region
        %p625 = scmp.lt.s32.totalorder %s32, 1
        %s626 = scalar_select %p625, %s32, 1
        %s627 = scalar_lea.vmem %s14, %s626
      $region76: #{actor_forward.2} parent=15 // pred_fallthru
        _
      // Predicated region
      $region77: #{actor_forward.2} parent=15 // pred_check
        %p628 = pneg %p446
      $region78: #{actor_forward.2} parent=15 // pred_check_branch
        %630 = sbr.rel (%p628) target = $region80
      $region79: #{actor_forward.2} parent=15 // pred_region
        %p631 = scmp.lt.s32.totalorder %s32, 1
        %s632 = scalar_select %p631, %s32, 1
        %s633 = scalar_lea.vmem %s15, %s632
      $region80: #{actor_forward.2} parent=15 // pred_fallthru
        _
    $region16: #{actor_forward.2} parent=5 // pred_fallthru
      _
    %p634 = scmp.le.s32.totalorder 1, %s24
    %p635 = scmp.lt.s32.totalorder %s24, 5
    %p636 = pnand %p634, %p635
    %p637 = pneg %p636
    // Predicated region
    $region81: #{actor_forward.2} parent=5 // pred_check
      _
    $region82: #{actor_forward.2} parent=5 // pred_check_branch
      %639 = sbr.rel (%p636) target = $region84
    $region83: #{actor_forward.2} parent=5 // pred_region
      %s640 = ssub.s32 %s24, 1
      %p641 = scmp.lt.s32.totalorder %s33, 1
      %s642 = scalar_select %p641, %s33, 1
      %s643 = scalar_lea.vmem %s0, %s642
      %p644 = pneg %p62
      %p645 = pneg %p59
      %p646 = scmp.lt.s32.totalorder %s33, 1
      %s647 = scalar_select %p646, %s33, 1
      %s648 = smul.addr %s647, 8
      %s649 = scalar_lea.vmem %s1, %s648
      %p650 = pneg %p88
      %p651 = pneg %p85
      %p652 = scmp.lt.s32.totalorder %s34, 1
      %s653 = scalar_select %p652, %s34, 1
      %s654 = smul.addr %s653, 4
      %s655 = smul.addr %s654, 4
      %s656 = scalar_lea.vmem %s2, %s655
      %p657 = pneg %p114
      %p658 = pneg %p111
      %p659 = scmp.lt.s32.totalorder %s34, 1
      %s660 = scalar_select %p659, %s34, 1
      %s661 = scalar_lea.vmem %s3, %s660
      %p662 = pneg %p140
      %p663 = pneg %p137
      %p664 = scmp.lt.s32.totalorder %s34, 1
      %s665 = scalar_select %p664, %s34, 1
      %s666 = smul.addr %s665, 4
      %s667 = smul.addr %s666, 4
      %s668 = scalar_lea.vmem %s4, %s667
      %p669 = pneg %p166
      %p670 = pneg %p163
      %p671 = scmp.lt.s32.totalorder %s34, 1
      %s672 = scalar_select %p671, %s34, 1
      %s673 = scalar_lea.vmem %s5, %s672
      %p674 = pneg %p192
      %p675 = pneg %p189
      %p676 = scmp.lt.s32.totalorder %s34, 1
      %s677 = scalar_select %p676, %s34, 1
      %s678 = scalar_lea.vmem %s6, %s677
      %p679 = pneg %p218
      %p680 = pneg %p215
      %p681 = scmp.lt.s32.totalorder %s34, 1
      %s682 = scalar_select %p681, %s34, 1
      %s683 = scalar_lea.vmem %s7, %s682
      %p684 = pneg %p244
      %p685 = pneg %p241
      %p686 = scmp.lt.s32.totalorder %s34, 1
      %s687 = scalar_select %p686, %s34, 1
      %s688 = smul.addr %s687, 4
      %s689 = smul.addr %s688, 4
      %s690 = scalar_lea.vmem %s8, %s689
      %p691 = pneg %p270
      %p692 = pneg %p267
      %p693 = scmp.lt.s32.totalorder %s34, 1
      %s694 = scalar_select %p693, %s34, 1
      %s695 = scalar_lea.vmem %s9, %s694
      %p696 = pneg %p296
      %p697 = pneg %p293
      %p698 = scmp.lt.s32.totalorder %s34, 1
      %s699 = scalar_select %p698, %s34, 1
      %s700 = smul.addr %s699, 16
      %s701 = smul.addr %s700, 4
      %s702 = scalar_lea.vmem %s10, %s701
      %p703 = pneg %p322
      %p704 = pneg %p319
      %p705 = scmp.lt.s32.totalorder %s34, 1
      %s706 = scalar_select %p705, %s34, 1
      %s707 = smul.addr %s706, 4
      %s708 = scalar_lea.vmem %s11, %s707
      %p709 = pneg %p348
      %p710 = pneg %p345
      %p711 = scmp.lt.s32.totalorder %s34, 1
      %s712 = scalar_select %p711, %s34, 1
      %s713 = smul.addr %s712, 32
      %s714 = smul.addr %s713, 4
      %s715 = scalar_lea.vmem %s12, %s714
      %p716 = pneg %p374
      %p717 = pneg %p371
      %p718 = scmp.lt.s32.totalorder %s34, 1
      %s719 = scalar_select %p718, %s34, 1
      %s720 = smul.addr %s719, 4
      %s721 = scalar_lea.vmem %s13, %s720
      %p722 = pneg %p400
      %p723 = pneg %p397
      %p724 = scmp.lt.s32.totalorder %s34, 1
      %s725 = scalar_select %p724, %s34, 1
      %s726 = scalar_lea.vmem %s14, %s725
      %p727 = pneg %p426
      %p728 = pneg %p423
      %p729 = scmp.lt.s32.totalorder %s34, 1
      %s730 = scalar_select %p729, %s34, 1
      %s731 = scalar_lea.vmem %s15, %s730
      %p732 = pneg %p452
      %p733 = pneg %p449
      %p734 = pneg %p478
      %p735 = pneg %p475
      %p736 = scmp.lt.s32.totalorder %s33, 1
      %s737 = scalar_select %p736, %s33, 1
      %s738 = smul.addr %s737, 8
      %s739 = scalar_lea.vmem %s16, %s738
      %p740 = pneg %p506
      %p741 = pneg %p503
      %p742 = scmp.lt.s32.totalorder %s34, 1
      %s743 = scalar_select %p742, %s34, 1
      %p744 = scmp.lt.s32.totalorder %s33, 1
      %s745 = scalar_select %p744, %s33, 1
      %s746 = smul.addr %s743, 2
      %s747 = sadd.s32 %s745, %s746
      %s748 = smul.addr %s747, 8
      %s749 = scalar_lea.vmem %s17, %s748
      %p750 = scmp.lt.s32.totalorder %s33, 1
      %s751 = scalar_select %p750, %s33, 1
      %s752 = scalar_lea.vmem %s0, %s751
      %p753 = scmp.lt.s32.totalorder %s33, 1
      %s754 = scalar_select %p753, %s33, 1
      %s755 = smul.addr %s754, 8
      %s756 = scalar_lea.vmem %s1, %s755
      %p757 = scmp.lt.s32.totalorder %s34, 1
      %s758 = scalar_select %p757, %s34, 1
      %s759 = smul.addr %s758, 4
      %s760 = smul.addr %s759, 4
      %s761 = scalar_lea.vmem %s2, %s760
      %p762 = scmp.lt.s32.totalorder %s34, 1
      %s763 = scalar_select %p762, %s34, 1
      %s764 = scalar_lea.vmem %s3, %s763
      %p765 = scmp.lt.s32.totalorder %s34, 1
      %s766 = scalar_select %p765, %s34, 1
      %s767 = smul.addr %s766, 4
      %s768 = smul.addr %s767, 4
      %s769 = scalar_lea.vmem %s4, %s768
      %p770 = scmp.lt.s32.totalorder %s34, 1
      %s771 = scalar_select %p770, %s34, 1
      %s772 = scalar_lea.vmem %s5, %s771
      %p773 = scmp.lt.s32.totalorder %s34, 1
      %s774 = scalar_select %p773, %s34, 1
      %s775 = scalar_lea.vmem %s6, %s774
      %p776 = scmp.lt.s32.totalorder %s34, 1
      %s777 = scalar_select %p776, %s34, 1
      %s778 = scalar_lea.vmem %s7, %s777
      %p779 = scmp.lt.s32.totalorder %s34, 1
      %s780 = scalar_select %p779, %s34, 1
      %s781 = smul.addr %s780, 4
      %s782 = smul.addr %s781, 4
      %s783 = scalar_lea.vmem %s8, %s782
      %p784 = scmp.lt.s32.totalorder %s34, 1
      %s785 = scalar_select %p784, %s34, 1
      %s786 = scalar_lea.vmem %s9, %s785
      %p787 = scmp.lt.s32.totalorder %s34, 1
      %s788 = scalar_select %p787, %s34, 1
      %s789 = smul.addr %s788, 16
      %s790 = smul.addr %s789, 4
      %s791 = scalar_lea.vmem %s10, %s790
      %p792 = scmp.lt.s32.totalorder %s34, 1
      %s793 = scalar_select %p792, %s34, 1
      %s794 = smul.addr %s793, 4
      %s795 = scalar_lea.vmem %s11, %s794
      %p796 = scmp.lt.s32.totalorder %s34, 1
      %s797 = scalar_select %p796, %s34, 1
      %s798 = smul.addr %s797, 32
      %s799 = smul.addr %s798, 4
      %s800 = scalar_lea.vmem %s12, %s799
      %p801 = scmp.lt.s32.totalorder %s34, 1
      %s802 = scalar_select %p801, %s34, 1
      %s803 = smul.addr %s802, 4
      %s804 = scalar_lea.vmem %s13, %s803
      %p805 = scmp.lt.s32.totalorder %s34, 1
      %s806 = scalar_select %p805, %s34, 1
      %s807 = scalar_lea.vmem %s14, %s806
      %p808 = scmp.lt.s32.totalorder %s34, 1
      %s809 = scalar_select %p808, %s34, 1
      %s810 = scalar_lea.vmem %s15, %s809
      %p811 = scmp.lt.s32.totalorder %s33, 1
      %s812 = scalar_select %p811, %s33, 1
      %s813 = smul.addr %s812, 8
      %s814 = scalar_lea.vmem %s16, %s813
      %p815 = scmp.lt.s32.totalorder %s34, 1
      %s816 = scalar_select %p815, %s34, 1
      %p817 = scmp.lt.s32.totalorder %s33, 1
      %s818 = scalar_select %p817, %s33, 1
      %s819 = smul.addr %s816, 2
      %s820 = sadd.s32 %s818, %s819
      %s821 = smul.addr %s820, 8
      %s822 = scalar_lea.vmem %s17, %s821
      %p824 = scmp.eq.s32.totalorder %s34, 0
      // Predicated region
      $region85: #{actor_forward.2} parent=83 // pred_check
        %p825 = pneg %p824
      $region86: #{actor_forward.2} parent=83 // pred_check_branch
        %827 = sbr.rel (%p825) target = $region88
      $region87: #{actor_forward.2} parent=83 // pred_region
        %v828 = vld [vmem:[%s756] sm:$0xff]
        %vm829 = vcmask 261120
        %830 = vst.msk [vmem:[#allocation2] sm:$0xff] %vm829, %v828
      $region88: #{actor_forward.2} parent=83 // pred_fallthru
        _
      %v831 = vld [vmem:[#allocation2] sm:$0xff]
      %v832 = vld [vmem:[%s752] sm:$0x1]
      %vm833 = vcmp.eq.s32.totalorder %v832, 2
      %v834 = vsel %vm833, -1e+09, 0.0
      %v835 = vpack.c.bf16 %v831, %v831
      %v836 = vld [vmem:[%s761] sm:$0xf]
      %v837 = vld [vmem:[%s761 + $0x4] sm:$0xf]
      %v838 = vld [vmem:[%s761 + $0x8] sm:$0xf]
      %v839 = vld [vmem:[%s761 + $0xc] sm:$0xf]
      %v840 = vld [vmem:[%s764] sm:$0x1]
      %v842 = vlaneseq
      %v843 = vshrl.u32 %v842, 7
      %v844 = vsub.s32 0, %v843
      %v845 = vrot.slane %v840, %v844
      %v851 = vunpack.c.l.b16 %v836
      %v852 = vunpack.c.l.b16 %v837
      %v853 = vunpack.c.l.b16 %v838
      %v854 = vunpack.c.l.b16 %v839
      %v855 = vpack.c.b16 %v852, %v851
      %v856 = vpack.c.b16 %v854, %v853
      %vm859 = vcmask 261120
      %v861 = vsel %vm859, %v835, 0
      %863 = vmatprep.subr.bf16.mxu0 0
      %864 = vmatpush1.bf16.msra.mxu0 %v855
      %865 = vmatprep.subr.bf16.mxu0 0
      %866 = vmatpush1.bf16.msra.mxu0 %v856
      %867 = vmatprep.subr.bf16.mxu0 0
      %868 = vmatpush1.bf16.msra.mxu0 0
      %869 = vmatprep.subr.bf16.mxu0 0
      %870 = vmatpush1.bf16.msra.mxu0 0
      %871 = vmatprep.subr.bf16.mxu0 0
      %872 = vmatpush1.bf16.msra.mxu0 0
      %873 = vmatprep.subr.bf16.mxu0 0
      %874 = vmatpush1.bf16.msra.mxu0 0
      %875 = vmatprep.subr.bf16.mxu0 0
      %876 = vmatpush1.bf16.msra.mxu0 0
      %877 = vmatprep.subr.bf16.mxu0 0
      %878 = vmatpush1.bf16.msra.mxu0 0
      %879 = vmatprep.subr.bf16.mxu0 0
      %880 = vmatpush1.bf16.msra.mxu0 0
      %881 = vmatprep.subr.bf16.mxu0 0
      %882 = vmatpush1.bf16.msra.mxu0 0
      %883 = vmatprep.subr.bf16.mxu0 0
      %884 = vmatpush1.bf16.msra.mxu0 0
      %885 = vmatprep.subr.bf16.mxu0 0
      %886 = vmatpush1.bf16.msra.mxu0 0
      %887 = vmatprep.subr.bf16.mxu0 0
      %888 = vmatpush1.bf16.msra.mxu0 0
      %889 = vmatprep.subr.bf16.mxu0 0
      %890 = vmatpush1.bf16.msra.mxu0 0
      %891 = vmatprep.subr.bf16.mxu0 0
      %892 = vmatpush1.bf16.msra.mxu0 0
      %893 = vmatprep.subr.bf16.mxu0 0
      %894 = vmatpush1.bf16.msra.mxu0 0
      %895 = vmatprep.mubr.bf16.mxu0 0
      %896 = vmatmul.mubr.bf16.gmra.mrb[0].mxu0 %v861
      %v897 = vpop.f32.mrb[0].mxu0
      %v898 = vadd.f32 %v845, %v897
      %v899 = vpop.f32.mrb[0].mxu0
      %v900 = vpop.f32.mrb[0].mxu0
      %v901 = vpop.f32.mrb[0].mxu0
      %902 = vdwg.mxu0
      %v903 = vld [vmem:[%s769] sm:$0xf]
      %v904 = vld [vmem:[%s769 + $0x4] sm:$0xf]
      %v905 = vld [vmem:[%s769 + $0x8] sm:$0xf]
      %v906 = vld [vmem:[%s769 + $0xc] sm:$0xf]
      %v907 = vpack.c.bf16 %v898, %v898
      %909 = vrot.lane.b32.xlu0 %v907, 96
      %v910 = vpop.permute.xlu0 %909
      %vm911 = vcmask 64512
      %v913 = vsel %vm911, %v907, 0
      %v916 = vsel %vm911, %v910, 0
      %918 = vmatprep.subr.bf16.mxu0 0
      %919 = vmatpush1.bf16.xpose.msra.mxu0 %v916
      %920 = vmatprep.subr.bf16.mxu0 0
      %921 = vmatpush1.bf16.xpose.msra.mxu0 0
      %922 = vmatprep.subr.bf16.mxu0 0
      %923 = vmatpush1.bf16.xpose.msra.mxu0 0
      %924 = vmatprep.subr.bf16.mxu0 0
      %925 = vmatpush1.bf16.xpose.msra.mxu0 0
      %926 = vmatprep.subr.bf16.mxu0 0
      %927 = vmatpush1.bf16.xpose.msra.mxu0 0
      %928 = vmatprep.subr.bf16.mxu0 0
      %929 = vmatpush1.bf16.xpose.msra.mxu0 0
      %930 = vmatprep.subr.bf16.mxu0 0
      %931 = vmatpush1.bf16.xpose.msra.mxu0 0
      %932 = vmatprep.subr.bf16.mxu0 0
      %933 = vmatpush1.bf16.xpose.msra.mxu0 0
      %934 = vmatprep.subr.bf16.mxu0 0
      %935 = vmatpush1.bf16.xpose.msra.mxu0 0
      %936 = vmatprep.subr.bf16.mxu0 0
      %937 = vmatpush1.bf16.xpose.msra.mxu0 0
      %938 = vmatprep.subr.bf16.mxu0 0
      %939 = vmatpush1.bf16.xpose.msra.mxu0 0
      %940 = vmatprep.subr.bf16.mxu0 0
      %941 = vmatpush1.bf16.xpose.msra.mxu0 0
      %942 = vmatprep.subr.bf16.mxu0 0
      %943 = vmatpush1.bf16.xpose.msra.mxu0 0
      %944 = vmatprep.subr.bf16.mxu0 0
      %945 = vmatpush1.bf16.xpose.msra.mxu0 0
      %946 = vmatprep.subr.bf16.mxu0 0
      %947 = vmatpush1.bf16.xpose.msra.mxu0 0
      %948 = vmatprep.subr.bf16.mxu0 0
      %949 = vmatpush1.bf16.xpose.msra.mxu0 0
      %950 = vmatprep.mubr.bf16.mxu0 0
      %951 = vmatmul.mubr.bf16.gmra.mrb[0].mxu0 %v913
      %v952 = vpop.f32.mrb[0].mxu0
      %v953 = vadd.f32 0.0, %v952
      %v954 = vpop.f32.mrb[0].mxu0
      %v955 = vpop.f32.mrb[0].mxu0
      %v956 = vpop.f32.mrb[0].mxu0
      %957 = vdwg.mxu0
      %v958 = vmul.f32 %v953, 0.35355338
      %v960 = vlaneseq
      %v961 = vshrl.u32 %v960, 7
      %v962 = vsub.s32 0, %v961
      %v963 = vrot.slane %v834, %v962
      %v965 = vadd.f32 %v958, %v963
      %v966 = vsel %vm911, %v965, -inf
      %967 = vmax.xlane.f32.xlu0 %v966
      %v968 = vpop.xlane.xlu0 %967
      %v969 = vsub.f32 %v965, %v968
      %v970 = vmul.f32 %v969, 1.442695
      %v971 = vpow.pop %v970
      %v972 = vsel %vm911, %v971, 0.0
      %973 = vadd.xlane.f32.xlu0 %v972
      %v974 = vpop.xlane.xlu0 %973
      %v975 = vrcp.pop %v974
      %v976 = vmul.f32 %v971, %v975
      %v977 = vpack.c.bf16 %v976, %v976
      %978 = vrot.lane.b32.xlu0 %v907, 64
      %v979 = vpop.permute.xlu0 %978
      %v981 = vsel %vm911, %v977, 0
      %vm983 = vcmask 1043456
      %v985 = vsel %vm983, %v979, 0
      %987 = vmatprep.subr.bf16.mxu0 0
      %988 = vmatpush1.bf16.msra.mxu0 %v985
      %989 = vmatprep.subr.bf16.mxu0 0
      %990 = vmatpush1.bf16.msra.mxu0 0
      %991 = vmatprep.subr.bf16.mxu0 0
      %992 = vmatpush1.bf16.msra.mxu0 0
      %993 = vmatprep.subr.bf16.mxu0 0
      %994 = vmatpush1.bf16.msra.mxu0 0
      %995 = vmatprep.subr.bf16.mxu0 0
      %996 = vmatpush1.bf16.msra.mxu0 0
      %997 = vmatprep.subr.bf16.mxu0 0
      %998 = vmatpush1.bf16.msra.mxu0 0
      %999 = vmatprep.subr.bf16.mxu0 0
      %1000 = vmatpush1.bf16.msra.mxu0 0
      %1001 = vmatprep.subr.bf16.mxu0 0
      %1002 = vmatpush1.bf16.msra.mxu0 0
      %1003 = vmatprep.subr.bf16.mxu0 0
      %1004 = vmatpush1.bf16.msra.mxu0 0
      %1005 = vmatprep.subr.bf16.mxu0 0
      %1006 = vmatpush1.bf16.msra.mxu0 0
      %1007 = vmatprep.subr.bf16.mxu0 0
      %1008 = vmatpush1.bf16.msra.mxu0 0
      %1009 = vmatprep.subr.bf16.mxu0 0
      %1010 = vmatpush1.bf16.msra.mxu0 0
      %1011 = vmatprep.subr.bf16.mxu0 0
      %1012 = vmatpush1.bf16.msra.mxu0 0
      %1013 = vmatprep.subr.bf16.mxu0 0
      %1014 = vmatpush1.bf16.msra.mxu0 0
      %1015 = vmatprep.subr.bf16.mxu0 0
      %1016 = vmatpush1.bf16.msra.mxu0 0
      %1017 = vmatprep.subr.bf16.mxu0 0
      %1018 = vmatpush1.bf16.msra.mxu0 0
      %1019 = vmatprep.mubr.bf16.mxu0 0
      %1020 = vmatmul.mubr.bf16.gmra.mrb[0].mxu0 %v981
      %v1021 = vpop.f32.mrb[0].mxu0
      %v1022 = vadd.f32 0.0, %v1021
      %v1023 = vpop.f32.mrb[0].mxu0
      %v1024 = vpop.f32.mrb[0].mxu0
      %v1025 = vpop.f32.mrb[0].mxu0
      %1026 = vdwg.mxu0
      %v1027 = vpack.c.bf16 %v1022, %v1022
      %1028 = vrot.lane.b32.xlu0 %v907, 120
      %v1029 = vpop.permute.xlu0 %1028
      %1030 = vrot.lane.b32.xlu0 %v907, 88
      %v1031 = vpop.permute.xlu0 %1030
      %v1033 = vsel %vm911, %v1029, 0
      %v1036 = vsel %vm911, %v1031, 0
      %1038 = vmatprep.subr.bf16.mxu0 0
      %1039 = vmatpush1.bf16.xpose.msra.mxu0 %v1036
      %1040 = vmatprep.subr.bf16.mxu0 0
      %1041 = vmatpush1.bf16.xpose.msra.mxu0 0
      %1042 = vmatprep.subr.bf16.mxu0 0
      %1043 = vmatpush1.bf16.xpose.msra.mxu0 0
      %1044 = vmatprep.subr.bf16.mxu0 0
      %1045 = vmatpush1.bf16.xpose.msra.mxu0 0
      %1046 = vmatprep.subr.bf16.mxu0 0
      %1047 = vmatpush1.bf16.xpose.msra.mxu0 0
      %1048 = vmatprep.subr.bf16.mxu0 0
      %1049 = vmatpush1.bf16.xpose.msra.mxu0 0
      %1050 = vmatprep.subr.bf16.mxu0 0
      %1051 = vmatpush1.bf16.xpose.msra.mxu0 0
      %1052 = vmatprep.subr.bf16.mxu0 0
      %1053 = vmatpush1.bf16.xpose.msra.mxu0 0
      %1054 = vmatprep.subr.bf16.mxu0 0
      %1055 = vmatpush1.bf16.xpose.msra.mxu0 0
      %1056 = vmatprep.subr.bf16.mxu0 0
      %1057 = vmatpush1.bf16.xpose.msra.mxu0 0
      %1058 = vmatprep.subr.bf16.mxu0 0
      %1059 = vmatpush1.bf16.xpose.msra.mxu0 0
      %1060 = vmatprep.subr.bf16.mxu0 0
      %1061 = vmatpush1.bf16.xpose.msra.mxu0 0
      %1062 = vmatprep.subr.bf16.mxu0 0
      %1063 = vmatpush1.bf16.xpose.msra.mxu0 0
      %1064 = vmatprep.subr.bf16.mxu0 0
      %1065 = vmatpush1.bf16.xpose.msra.mxu0 0
      %1066 = vmatprep.subr.bf16.mxu0 0
      %1067 = vmatpush1.bf16.xpose.msra.mxu0 0
      %1068 = vmatprep.subr.bf16.mxu0 0
      %1069 = vmatpush1.bf16.xpose.msra.mxu0 0
      %1070 = vmatprep.mubr.bf16.mxu0 0
      %1071 = vmatmul.mubr.bf16.gmra.mrb[0].mxu0 %v1033
      %v1072 = vpop.f32.mrb[0].mxu0
      %v1073 = vadd.f32 0.0, %v1072
      %v1074 = vpop.f32.mrb[0].mxu0
      %v1075 = vpop.f32.mrb[0].mxu0
      %v1076 = vpop.f32.mrb[0].mxu0
      %1077 = vdwg.mxu0
      %v1078 = vmul.f32 %v1073, 0.35355338
      %v1079 = vadd.f32 %v1078, %v963
      %v1080 = vsel %vm911, %v1079, -inf
      %1081 = vmax.xlane.f32.xlu0 %v1080
      %v1082 = vpop.xlane.xlu0 %1081
      %v1083 = vsub.f32 %v1079, %v1082
      %v1084 = vmul.f32 %v1083, 1.442695
      %v1085 = vpow.pop %v1084
      %v1086 = vsel %vm911, %v1085, 0.0
      %1087 = vadd.xlane.f32.xlu0 %v1086
      %v1088 = vpop.xlane.xlu0 %1087
      %v1089 = vrcp.pop %v1088
      %v1090 = vmul.f32 %v1085, %v1089
      %v1091 = vpack.c.bf16 %v1090, %v1090
      %1092 = vrot.lane.b32.xlu0 %v907, 56
      %v1093 = vpop.permute.xlu0 %1092
      %v1095 = vsel %vm911, %v1091, 0
      %v1098 = vsel %vm983, %v1093, 0
      %1100 = vmatprep.subr.bf16.mxu0 0
      %1101 = vmatpush1.bf16.msra.mxu0 %v1098
      %1102 = vmatprep.subr.bf16.mxu0 0
      %1103 = vmatpush1.bf16.msra.mxu0 0
      %1104 = vmatprep.subr.bf16.mxu0 0
      %1105 = vmatpush1.bf16.msra.mxu0 0
      %1106 = vmatprep.subr.bf16.mxu0 0
      %1107 = vmatpush1.bf16.msra.mxu0 0
      %1108 = vmatprep.subr.bf16.mxu0 0
      %1109 = vmatpush1.bf16.msra.mxu0 0
      %1110 = vmatprep.subr.bf16.mxu0 0
      %1111 = vmatpush1.bf16.msra.mxu0 0
      %1112 = vmatprep.subr.bf16.mxu0 0
      %1113 = vmatpush1.bf16.msra.mxu0 0
      %1114 = vmatprep.subr.bf16.mxu0 0
      %1115 = vmatpush1.bf16.msra.mxu0 0
      %1116 = vmatprep.subr.bf16.mxu0 0
      %1117 = vmatpush1.bf16.msra.mxu0 0
      %1118 = vmatprep.subr.bf16.mxu0 0
      %1119 = vmatpush1.bf16.msra.mxu0 0
      %1120 = vmatprep.subr.bf16.mxu0 0
      %1121 = vmatpush1.bf16.msra.mxu0 0
      %1122 = vmatprep.subr.bf16.mxu0 0
      %1123 = vmatpush1.bf16.msra.mxu0 0
      %1124 = vmatprep.subr.bf16.mxu0 0
      %1125 = vmatpush1.bf16.msra.mxu0 0
      %1126 = vmatprep.subr.bf16.mxu0 0
      %1127 = vmatpush1.bf16.msra.mxu0 0
      %1128 = vmatprep.subr.bf16.mxu0 0
      %1129 = vmatpush1.bf16.msra.mxu0 0
      %1130 = vmatprep.subr.bf16.mxu0 0
      %1131 = vmatpush1.bf16.msra.mxu0 0
      %1132 = vmatprep.mubr.bf16.mxu0 0
      %1133 = vmatmul.mubr.bf16.gmra.mrb[0].mxu0 %v1095
      %v1134 = vpop.f32.mrb[0].mxu0
      %v1135 = vadd.f32 0.0, %v1134
      %v1136 = vpop.f32.mrb[0].mxu0
      %v1137 = vpop.f32.mrb[0].mxu0
      %v1138 = vpop.f32.mrb[0].mxu0
      %1139 = vdwg.mxu0
      %v1140 = vpack.c.bf16 %v1135, %v1135
      %v1142 = vsel %vm911, %v1140, 0
      %v1145 = vsel %vm983, %v904, 0
      %1147 = vmatprep.subr.bf16.mxu0 0
      %1148 = vmatpush1.bf16.msra.mxu0 %v1145
      %1149 = vmatprep.subr.bf16.mxu0 0
      %1150 = vmatpush1.bf16.msra.mxu0 0
      %1151 = vmatprep.subr.bf16.mxu0 0
      %1152 = vmatpush1.bf16.msra.mxu0 0
      %1153 = vmatprep.subr.bf16.mxu0 0
      %1154 = vmatpush1.bf16.msra.mxu0 0
      %1155 = vmatprep.subr.bf16.mxu0 0
      %1156 = vmatpush1.bf16.msra.mxu0 0
      %1157 = vmatprep.subr.bf16.mxu0 0
      %1158 = vmatpush1.bf16.msra.mxu0 0
      %1159 = vmatprep.subr.bf16.mxu0 0
      %1160 = vmatpush1.bf16.msra.mxu0 0
      %1161 = vmatprep.subr.bf16.mxu0 0
      %1162 = vmatpush1.bf16.msra.mxu0 0
      %1163 = vmatprep.subr.bf16.mxu0 0
      %1164 = vmatpush1.bf16.msra.mxu0 0
      %1165 = vmatprep.subr.bf16.mxu0 0
      %1166 = vmatpush1.bf16.msra.mxu0 0
      %1167 = vmatprep.subr.bf16.mxu0 0
      %1168 = vmatpush1.bf16.msra.mxu0 0
      %1169 = vmatprep.subr.bf16.mxu0 0
      %1170 = vmatpush1.bf16.msra.mxu0 0
      %1171 = vmatprep.subr.bf16.mxu0 0
      %1172 = vmatpush1.bf16.msra.mxu0 0
      %1173 = vmatprep.subr.bf16.mxu0 0
      %1174 = vmatpush1.bf16.msra.mxu0 0
      %1175 = vmatprep.subr.bf16.mxu0 0
      %1176 = vmatpush1.bf16.msra.mxu0 0
      %1177 = vmatprep.subr.bf16.mxu0 0
      %1178 = vmatpush1.bf16.msra.mxu0 0
      %1179 = vmatprep.mubr.bf16.mxu0 0
      %1180 = vmatmul.mubr.bf16.gmra.mrb[0].mxu0 %v1142
      %v1181 = vpop.f32.mrb[0].mxu0
      %v1182 = vadd.f32 0.0, %v1181
      %v1183 = vpop.f32.mrb[0].mxu0
      %v1184 = vpop.f32.mrb[0].mxu0
      %v1185 = vpop.f32.mrb[0].mxu0
      %1186 = vdwg.mxu0
      %v1188 = vsel %vm911, %v1027, 0
      %v1191 = vsel %vm983, %v903, 0
      %1193 = vmatprep.subr.bf16.mxu0 0
      %1194 = vmatpush1.bf16.msra.mxu0 %v1191
      %1195 = vmatprep.subr.bf16.mxu0 0
      %1196 = vmatpush1.bf16.msra.mxu0 0
      %1197 = vmatprep.subr.bf16.mxu0 0
      %1198 = vmatpush1.bf16.msra.mxu0 0
      %1199 = vmatprep.subr.bf16.mxu0 0
      %1200 = vmatpush1.bf16.msra.mxu0 0
      %1201 = vmatprep.subr.bf16.mxu0 0
      %1202 = vmatpush1.bf16.msra.mxu0 0
      %1203 = vmatprep.subr.bf16.mxu0 0
      %1204 = vmatpush1.bf16.msra.mxu0 0
      %1205 = vmatprep.subr.bf16.mxu0 0
      %1206 = vmatpush1.bf16.msra.mxu0 0
      %1207 = vmatprep.subr.bf16.mxu0 0
      %1208 = vmatpush1.bf16.msra.mxu0 0
      %1209 = vmatprep.subr.bf16.mxu0 0
      %1210 = vmatpush1.bf16.msra.mxu0 0
      %1211 = vmatprep.subr.bf16.mxu0 0
      %1212 = vmatpush1.bf16.msra.mxu0 0
      %1213 = vmatprep.subr.bf16.mxu0 0
      %1214 = vmatpush1.bf16.msra.mxu0 0
      %1215 = vmatprep.subr.bf16.mxu0 0
      %1216 = vmatpush1.bf16.msra.mxu0 0
      %1217 = vmatprep.subr.bf16.mxu0 0
      %1218 = vmatpush1.bf16.msra.mxu0 0
      %1219 = vmatprep.subr.bf16.mxu0 0
      %1220 = vmatpush1.bf16.msra.mxu0 0
      %1221 = vmatprep.subr.bf16.mxu0 0
      %1222 = vmatpush1.bf16.msra.mxu0 0
      %1223 = vmatprep.subr.bf16.mxu0 0
      %1224 = vmatpush1.bf16.msra.mxu0 0
      %1225 = vmatprep.mubr.bf16.mxu0 0
      %1226 = vmatmul.mubr.bf16.gmra.mrb[0].mxu0 %v1188
      %v1227 = vpop.f32.mrb[0].mxu0
      %v1228 = vadd.f32 %v1182, %v1227
      %v1229 = vpop.f32.mrb[0].mxu0
      %v1230 = vpop.f32.mrb[0].mxu0
      %v1231 = vpop.f32.mrb[0].mxu0
      %1232 = vdwg.mxu0
      %1233 = vrot.lane.b32.xlu0 %v907, 112
      %v1234 = vpop.permute.xlu0 %1233
      %1235 = vrot.lane.b32.xlu0 %v907, 80
      %v1236 = vpop.permute.xlu0 %1235
      %v1238 = vsel %vm911, %v1234, 0
      %v1241 = vsel %vm911, %v1236, 0
      %1243 = vmatprep.subr.bf16.mxu0 0
      %1244 = vmatpush1.bf16.xpose.msra.mxu0 %v1241
      %1245 = vmatprep.subr.bf16.mxu0 0
      %1246 = vmatpush1.bf16.xpose.msra.mxu0 0
      %1247 = vmatprep.subr.bf16.mxu0 0
      %1248 = vmatpush1.bf16.xpose.msra.mxu0 0
      %1249 = vmatprep.subr.bf16.mxu0 0
      %1250 = vmatpush1.bf16.xpose.msra.mxu0 0
      %1251 = vmatprep.subr.bf16.mxu0 0
      %1252 = vmatpush1.bf16.xpose.msra.mxu0 0
      %1253 = vmatprep.subr.bf16.mxu0 0
      %1254 = vmatpush1.bf16.xpose.msra.mxu0 0
      %1255 = vmatprep.subr.bf16.mxu0 0
      %1256 = vmatpush1.bf16.xpose.msra.mxu0 0
      %1257 = vmatprep.subr.bf16.mxu0 0
      %1258 = vmatpush1.bf16.xpose.msra.mxu0 0
      %1259 = vmatprep.subr.bf16.mxu0 0
      %1260 = vmatpush1.bf16.xpose.msra.mxu0 0
      %1261 = vmatprep.subr.bf16.mxu0 0
      %1262 = vmatpush1.bf16.xpose.msra.mxu0 0
      %1263 = vmatprep.subr.bf16.mxu0 0
      %1264 = vmatpush1.bf16.xpose.msra.mxu0 0
      %1265 = vmatprep.subr.bf16.mxu0 0
      %1266 = vmatpush1.bf16.xpose.msra.mxu0 0
      %1267 = vmatprep.subr.bf16.mxu0 0
      %1268 = vmatpush1.bf16.xpose.msra.mxu0 0
      %1269 = vmatprep.subr.bf16.mxu0 0
      %1270 = vmatpush1.bf16.xpose.msra.mxu0 0
      %1271 = vmatprep.subr.bf16.mxu0 0
      %1272 = vmatpush1.bf16.xpose.msra.mxu0 0
      %1273 = vmatprep.subr.bf16.mxu0 0
      %1274 = vmatpush1.bf16.xpose.msra.mxu0 0
      %1275 = vmatprep.mubr.bf16.mxu0 0
      %1276 = vmatmul.mubr.bf16.gmra.mrb[0].mxu0 %v1238
      %v1277 = vpop.f32.mrb[0].mxu0
      %v1278 = vadd.f32 0.0, %v1277
      %v1279 = vpop.f32.mrb[0].mxu0
      %v1280 = vpop.f32.mrb[0].mxu0
      %v1281 = vpop.f32.mrb[0].mxu0
      %1282 = vdwg.mxu0
      %v1283 = vmul.f32 %v1278, 0.35355338
      %v1284 = vadd.f32 %v1283, %v963
      %v1285 = vsel %vm911, %v1284, -inf
      %1286 = vmax.xlane.f32.xlu0 %v1285
      %v1287 = vpop.xlane.xlu0 %1286
      %v1288 = vsub.f32 %v1284, %v1287
      %v1289 = vmul.f32 %v1288, 1.442695
      %v1290 = vpow.pop %v1289
      %v1291 = vsel %vm911, %v1290, 0.0
      %1292 = vadd.xlane.f32.xlu0 %v1291
      %v1293 = vpop.xlane.xlu0 %1292
      %v1294 = vrcp.pop %v1293
      %v1295 = vmul.f32 %v1290, %v1294
      %v1296 = vpack.c.bf16 %v1295, %v1295
      %1297 = vrot.lane.b32.xlu0 %v907, 48
      %v1298 = vpop.permute.xlu0 %1297
      %v1300 = vsel %vm911, %v1296, 0
      %v1303 = vsel %vm983, %v1298, 0
      %1305 = vmatprep.subr.bf16.mxu0 0
      %1306 = vmatpush1.bf16.msra.mxu0 %v1303
      %1307 = vmatprep.subr.bf16.mxu0 0
      %1308 = vmatpush1.bf16.msra.mxu0 0
      %1309 = vmatprep.subr.bf16.mxu0 0
      %1310 = vmatpush1.bf16.msra.mxu0 0
      %1311 = vmatprep.subr.bf16.mxu0 0
      %1312 = vmatpush1.bf16.msra.mxu0 0
      %1313 = vmatprep.subr.bf16.mxu0 0
      %1314 = vmatpush1.bf16.msra.mxu0 0
      %1315 = vmatprep.subr.bf16.mxu0 0
      %1316 = vmatpush1.bf16.msra.mxu0 0
      %1317 = vmatprep.subr.bf16.mxu0 0
      %1318 = vmatpush1.bf16.msra.mxu0 0
      %1319 = vmatprep.subr.bf16.mxu0 0
      %1320 = vmatpush1.bf16.msra.mxu0 0
      %1321 = vmatprep.subr.bf16.mxu0 0
      %1322 = vmatpush1.bf16.msra.mxu0 0
      %1323 = vmatprep.subr.bf16.mxu0 0
      %1324 = vmatpush1.bf16.msra.mxu0 0
      %1325 = vmatprep.subr.bf16.mxu0 0
      %1326 = vmatpush1.bf16.msra.mxu0 0
      %1327 = vmatprep.subr.bf16.mxu0 0
      %1328 = vmatpush1.bf16.msra.mxu0 0
      %1329 = vmatprep.subr.bf16.mxu0 0
      %1330 = vmatpush1.bf16.msra.mxu0 0
      %1331 = vmatprep.subr.bf16.mxu0 0
      %1332 = vmatpush1.bf16.msra.mxu0 0
      %1333 = vmatprep.subr.bf16.mxu0 0
      %1334 = vmatpush1.bf16.msra.mxu0 0
      %1335 = vmatprep.subr.bf16.mxu0 0
      %1336 = vmatpush1.bf16.msra.mxu0 0
      %1337 = vmatprep.mubr.bf16.mxu0 0
      %1338 = vmatmul.mubr.bf16.gmra.mrb[0].mxu0 %v1300
      %v1339 = vpop.f32.mrb[0].mxu0
      %v1340 = vadd.f32 0.0, %v1339
      %v1341 = vpop.f32.mrb[0].mxu0
      %v1342 = vpop.f32.mrb[0].mxu0
      %v1343 = vpop.f32.mrb[0].mxu0
      %1344 = vdwg.mxu0
      %v1345 = vpack.c.bf16 %v1340, %v1340
      %v1347 = vsel %vm911, %v1345, 0
      %v1350 = vsel %vm983, %v905, 0
      %1352 = vmatprep.subr.bf16.mxu0 0
      %1353 = vmatpush1.bf16.msra.mxu0 %v1350
      %1354 = vmatprep.subr.bf16.mxu0 0
      %1355 = vmatpush1.bf16.msra.mxu0 0
      %1356 = vmatprep.subr.bf16.mxu0 0
      %1357 = vmatpush1.bf16.msra.mxu0 0
      %1358 = vmatprep.subr.bf16.mxu0 0
      %1359 = vmatpush1.bf16.msra.mxu0 0
      %1360 = vmatprep.subr.bf16.mxu0 0
      %1361 = vmatpush1.bf16.msra.mxu0 0
      %1362 = vmatprep.subr.bf16.mxu0 0
      %1363 = vmatpush1.bf16.msra.mxu0 0
      %1364 = vmatprep.subr.bf16.mxu0 0
      %1365 = vmatpush1.bf16.msra.mxu0 0
      %1366 = vmatprep.subr.bf16.mxu0 0
      %1367 = vmatpush1.bf16.msra.mxu0 0
      %1368 = vmatprep.subr.bf16.mxu0 0
      %1369 = vmatpush1.bf16.msra.mxu0 0
      %1370 = vmatprep.subr.bf16.mxu0 0
      %1371 = vmatpush1.bf16.msra.mxu0 0
      %1372 = vmatprep.subr.bf16.mxu0 0
      %1373 = vmatpush1.bf16.msra.mxu0 0
      %1374 = vmatprep.subr.bf16.mxu0 0
      %1375 = vmatpush1.bf16.msra.mxu0 0
      %1376 = vmatprep.subr.bf16.mxu0 0
      %1377 = vmatpush1.bf16.msra.mxu0 0
      %1378 = vmatprep.subr.bf16.mxu0 0
      %1379 = vmatpush1.bf16.msra.mxu0 0
      %1380 = vmatprep.subr.bf16.mxu0 0
      %1381 = vmatpush1.bf16.msra.mxu0 0
      %1382 = vmatprep.subr.bf16.mxu0 0
      %1383 = vmatpush1.bf16.msra.mxu0 0
      %1384 = vmatprep.mubr.bf16.mxu0 0
      %1385 = vmatmul.mubr.bf16.gmra.mrb[0].mxu0 %v1347
      %v1386 = vpop.f32.mrb[0].mxu0
      %v1387 = vadd.f32 0.0, %v1386
      %v1388 = vpop.f32.mrb[0].mxu0
      %v1389 = vpop.f32.mrb[0].mxu0
      %v1390 = vpop.f32.mrb[0].mxu0
      %1391 = vdwg.mxu0
      %v1392 = vadd.f32 %v1228, %v1387
      %1393 = vrot.lane.b32.xlu0 %v907, 104
      %v1394 = vpop.permute.xlu0 %1393
      %1395 = vrot.lane.b32.xlu0 %v907, 72
      %v1396 = vpop.permute.xlu0 %1395
      %v1398 = vsel %vm911, %v1394, 0
      %v1401 = vsel %vm911, %v1396, 0
      %1403 = vmatprep.subr.bf16.mxu0 0
      %1404 = vmatpush1.bf16.xpose.msra.mxu0 %v1401
      %1405 = vmatprep.subr.bf16.mxu0 0
      %1406 = vmatpush1.bf16.xpose.msra.mxu0 0
      %1407 = vmatprep.subr.bf16.mxu0 0
      %1408 = vmatpush1.bf16.xpose.msra.mxu0 0
      %1409 = vmatprep.subr.bf16.mxu0 0
      %1410 = vmatpush1.bf16.xpose.msra.mxu0 0
      %1411 = vmatprep.subr.bf16.mxu0 0
      %1412 = vmatpush1.bf16.xpose.msra.mxu0 0
      %1413 = vmatprep.subr.bf16.mxu0 0
      %1414 = vmatpush1.bf16.xpose.msra.mxu0 0
      %1415 = vmatprep.subr.bf16.mxu0 0
      %1416 = vmatpush1.bf16.xpose.msra.mxu0 0
      %1417 = vmatprep.subr.bf16.mxu0 0
      %1418 = vmatpush1.bf16.xpose.msra.mxu0 0
      %1419 = vmatprep.subr.bf16.mxu0 0
      %1420 = vmatpush1.bf16.xpose.msra.mxu0 0
      %1421 = vmatprep.subr.bf16.mxu0 0
      %1422 = vmatpush1.bf16.xpose.msra.mxu0 0
      %1423 = vmatprep.subr.bf16.mxu0 0
      %1424 = vmatpush1.bf16.xpose.msra.mxu0 0
      %1425 = vmatprep.subr.bf16.mxu0 0
      %1426 = vmatpush1.bf16.xpose.msra.mxu0 0
      %1427 = vmatprep.subr.bf16.mxu0 0
      %1428 = vmatpush1.bf16.xpose.msra.mxu0 0
      %1429 = vmatprep.subr.bf16.mxu0 0
      %1430 = vmatpush1.bf16.xpose.msra.mxu0 0
      %1431 = vmatprep.subr.bf16.mxu0 0
      %1432 = vmatpush1.bf16.xpose.msra.mxu0 0
      %1433 = vmatprep.subr.bf16.mxu0 0
      %1434 = vmatpush1.bf16.xpose.msra.mxu0 0
      %1435 = vmatprep.mubr.bf16.mxu0 0
      %1436 = vmatmul.mubr.bf16.gmra.mrb[0].mxu0 %v1398
      %v1437 = vpop.f32.mrb[0].mxu0
      %v1438 = vadd.f32 0.0, %v1437
      %v1439 = vpop.f32.mrb[0].mxu0
      %v1440 = vpop.f32.mrb[0].mxu0
      %v1441 = vpop.f32.mrb[0].mxu0
      %1442 = vdwg.mxu0
      %v1443 = vmul.f32 %v1438, 0.35355338
      %v1444 = vadd.f32 %v1443, %v963
      %v1445 = vsel %vm911, %v1444, -inf
      %1446 = vmax.xlane.f32.xlu0 %v1445
      %v1447 = vpop.xlane.xlu0 %1446
      %v1448 = vsub.f32 %v1444, %v1447
      %v1449 = vmul.f32 %v1448, 1.442695
      %v1450 = vpow.pop %v1449
      %v1451 = vsel %vm911, %v1450, 0.0
      %1452 = vadd.xlane.f32.xlu0 %v1451
      %v1453 = vpop.xlane.xlu0 %1452
      %v1454 = vrcp.pop %v1453
      %v1455 = vmul.f32 %v1450, %v1454
      %v1456 = vpack.c.bf16 %v1455, %v1455
      %1457 = vrot.lane.b32.xlu0 %v907, 40
      %v1458 = vpop.permute.xlu0 %1457
      %v1460 = vsel %vm911, %v1456, 0
      %v1463 = vsel %vm983, %v1458, 0
      %1465 = vmatprep.subr.bf16.mxu0 0
      %1466 = vmatpush1.bf16.msra.mxu0 %v1463
      %1467 = vmatprep.subr.bf16.mxu0 0
      %1468 = vmatpush1.bf16.msra.mxu0 0
      %1469 = vmatprep.subr.bf16.mxu0 0
      %1470 = vmatpush1.bf16.msra.mxu0 0
      %1471 = vmatprep.subr.bf16.mxu0 0
      %1472 = vmatpush1.bf16.msra.mxu0 0
      %1473 = vmatprep.subr.bf16.mxu0 0
      %1474 = vmatpush1.bf16.msra.mxu0 0
      %1475 = vmatprep.subr.bf16.mxu0 0
      %1476 = vmatpush1.bf16.msra.mxu0 0
      %1477 = vmatprep.subr.bf16.mxu0 0
      %1478 = vmatpush1.bf16.msra.mxu0 0
      %1479 = vmatprep.subr.bf16.mxu0 0
      %1480 = vmatpush1.bf16.msra.mxu0 0
      %1481 = vmatprep.subr.bf16.mxu0 0
      %1482 = vmatpush1.bf16.msra.mxu0 0
      %1483 = vmatprep.subr.bf16.mxu0 0
      %1484 = vmatpush1.bf16.msra.mxu0 0
      %1485 = vmatprep.subr.bf16.mxu0 0
      %1486 = vmatpush1.bf16.msra.mxu0 0
      %1487 = vmatprep.subr.bf16.mxu0 0
      %1488 = vmatpush1.bf16.msra.mxu0 0
      %1489 = vmatprep.subr.bf16.mxu0 0
      %1490 = vmatpush1.bf16.msra.mxu0 0
      %1491 = vmatprep.subr.bf16.mxu0 0
      %1492 = vmatpush1.bf16.msra.mxu0 0
      %1493 = vmatprep.subr.bf16.mxu0 0
      %1494 = vmatpush1.bf16.msra.mxu0 0
      %1495 = vmatprep.subr.bf16.mxu0 0
      %1496 = vmatpush1.bf16.msra.mxu0 0
      %1497 = vmatprep.mubr.bf16.mxu0 0
      %1498 = vmatmul.mubr.bf16.gmra.mrb[0].mxu0 %v1460
      %v1499 = vpop.f32.mrb[0].mxu0
      %v1500 = vadd.f32 0.0, %v1499
      %v1501 = vpop.f32.mrb[0].mxu0
      %v1502 = vpop.f32.mrb[0].mxu0
      %v1503 = vpop.f32.mrb[0].mxu0
      %1504 = vdwg.mxu0
      %v1505 = vpack.c.bf16 %v1500, %v1500
      %v1507 = vsel %vm911, %v1505, 0
      %v1510 = vsel %vm983, %v906, 0
      %1512 = vmatprep.subr.bf16.mxu0 0
      %1513 = vmatpush1.bf16.msra.mxu0 %v1510
      %1514 = vmatprep.subr.bf16.mxu0 0
      %1515 = vmatpush1.bf16.msra.mxu0 0
      %1516 = vmatprep.subr.bf16.mxu0 0
      %1517 = vmatpush1.bf16.msra.mxu0 0
      %1518 = vmatprep.subr.bf16.mxu0 0
      %1519 = vmatpush1.bf16.msra.mxu0 0
      %1520 = vmatprep.subr.bf16.mxu0 0
      %1521 = vmatpush1.bf16.msra.mxu0 0
      %1522 = vmatprep.subr.bf16.mxu0 0
      %1523 = vmatpush1.bf16.msra.mxu0 0
      %1524 = vmatprep.subr.bf16.mxu0 0
      %1525 = vmatpush1.bf16.msra.mxu0 0
      %1526 = vmatprep.subr.bf16.mxu0 0
      %1527 = vmatpush1.bf16.msra.mxu0 0
      %1528 = vmatprep.subr.bf16.mxu0 0
      %1529 = vmatpush1.bf16.msra.mxu0 0
      %1530 = vmatprep.subr.bf16.mxu0 0
      %1531 = vmatpush1.bf16.msra.mxu0 0
      %1532 = vmatprep.subr.bf16.mxu0 0
      %1533 = vmatpush1.bf16.msra.mxu0 0
      %1534 = vmatprep.subr.bf16.mxu0 0
      %1535 = vmatpush1.bf16.msra.mxu0 0
      %1536 = vmatprep.subr.bf16.mxu0 0
      %1537 = vmatpush1.bf16.msra.mxu0 0
      %1538 = vmatprep.subr.bf16.mxu0 0
      %1539 = vmatpush1.bf16.msra.mxu0 0
      %1540 = vmatprep.subr.bf16.mxu0 0
      %1541 = vmatpush1.bf16.msra.mxu0 0
      %1542 = vmatprep.subr.bf16.mxu0 0
      %1543 = vmatpush1.bf16.msra.mxu0 0
      %1544 = vmatprep.mubr.bf16.mxu0 0
      %1545 = vmatmul.mubr.bf16.gmra.mrb[0].mxu0 %v1507
      %v1546 = vpop.f32.mrb[0].mxu0
      %v1547 = vadd.f32 0.0, %v1546
      %v1548 = vpop.f32.mrb[0].mxu0
      %v1549 = vpop.f32.mrb[0].mxu0
      %v1550 = vpop.f32.mrb[0].mxu0
      %1551 = vdwg.mxu0
      %v1552 = vadd.f32 %v1392, %v1547
      %v1553 = vld [vmem:[%s772] sm:$0x1]
      %v1555 = vlaneseq
      %v1556 = vshrl.u32 %v1555, 7
      %v1557 = vsub.s32 0, %v1556
      %v1558 = vrot.slane %v1553, %v1557
      %v1560 = vadd.f32 %v1552, %v1558
      %v1561 = vadd.f32 %v831, %v1560
      %v1562 = vsel %vm859, %v1561, 0.0
      %1563 = vadd.xlane.f32.xlu0 %v1562
      %v1564 = vpop.xlane.xlu0 %1563
      %v1565 = vrcp.pop 32.0
      %v1566 = vmul.f32 %v1564, %v1565
      %v1567 = vsub.f32 %v1561, %v1566
      %v1568 = vmul.f32 %v1567, %v1567
      %v1569 = vsel %vm859, %v1568, 0.0
      %1570 = vadd.xlane.f32.xlu0 %v1569
      %v1571 = vpop.xlane.xlu0 %1570
      %v1572 = vmul.f32 %v1571, %v1565
      %v1573 = vadd.f32 %v1572, 1e-05
      %v1574 = vrsqrt.pop %v1573
      %v1575 = vmul.f32 %v1567, %v1574
      %v1576 = vld [vmem:[%s775] sm:$0x1]
      %v1578 = vlaneseq
      %v1579 = vshrl.u32 %v1578, 7
      %v1580 = vsub.s32 0, %v1579
      %v1581 = vrot.slane %v1576, %v1580
      %v1583 = vmul.f32 %v1575, %v1581
      %v1584 = vld [vmem:[%s778] sm:$0x1]
      %v1586 = vlaneseq
      %v1587 = vshrl.u32 %v1586, 7
      %v1588 = vsub.s32 0, %v1587
      %v1589 = vrot.slane %v1584, %v1588
      %v1591 = vadd.f32 %v1583, %v1589
      %v1592 = vpack.c.bf16 %v1591, %v1591
      %v1593 = vld [vmem:[%s783] sm:$0xf]
      %v1594 = vld [vmem:[%s783 + $0x4] sm:$0xf]
      %v1595 = vld [vmem:[%s783 + $0x8] sm:$0xf]
      %v1596 = vld [vmem:[%s783 + $0xc] sm:$0xf]
      %v1597 = vld [vmem:[%s786] sm:$0x1]
      %v1599 = vlaneseq
      %v1600 = vshrl.u32 %v1599, 7
      %v1601 = vsub.s32 0, %v1600
      %v1602 = vrot.slane %v1597, %v1601
      %v1608 = vunpack.c.l.b16 %v1593
      %v1609 = vunpack.c.l.b16 %v1594
      %v1610 = vunpack.c.l.b16 %v1595
      %v1611 = vunpack.c.l.b16 %v1596
      %v1612 = vpack.c.b16 %v1609, %v1608
      %v1613 = vpack.c.b16 %v1611, %v1610
      %v1617 = vsel %vm859, %v1592, 0
      %1619 = vmatprep.subr.bf16.mxu0 0
      %1620 = vmatpush1.bf16.msra.mxu0 %v1612
      %1621 = vmatprep.subr.bf16.mxu0 0
      %1622 = vmatpush1.bf16.msra.mxu0 %v1613
      %1623 = vmatprep.subr.bf16.mxu0 0
      %1624 = vmatpush1.bf16.msra.mxu0 0
      %1625 = vmatprep.subr.bf16.mxu0 0
      %1626 = vmatpush1.bf16.msra.mxu0 0
      %1627 = vmatprep.subr.bf16.mxu0 0
      %1628 = vmatpush1.bf16.msra.mxu0 0
      %1629 = vmatprep.subr.bf16.mxu0 0
      %1630 = vmatpush1.bf16.msra.mxu0 0
      %1631 = vmatprep.subr.bf16.mxu0 0
      %1632 = vmatpush1.bf16.msra.mxu0 0
      %1633 = vmatprep.subr.bf16.mxu0 0
      %1634 = vmatpush1.bf16.msra.mxu0 0
      %1635 = vmatprep.subr.bf16.mxu0 0
      %1636 = vmatpush1.bf16.msra.mxu0 0
      %1637 = vmatprep.subr.bf16.mxu0 0
      %1638 = vmatpush1.bf16.msra.mxu0 0
      %1639 = vmatprep.subr.bf16.mxu0 0
      %1640 = vmatpush1.bf16.msra.mxu0 0
      %1641 = vmatprep.subr.bf16.mxu0 0
      %1642 = vmatpush1.bf16.msra.mxu0 0
      %1643 = vmatprep.subr.bf16.mxu0 0
      %1644 = vmatpush1.bf16.msra.mxu0 0
      %1645 = vmatprep.subr.bf16.mxu0 0
      %1646 = vmatpush1.bf16.msra.mxu0 0
      %1647 = vmatprep.subr.bf16.mxu0 0
      %1648 = vmatpush1.bf16.msra.mxu0 0
      %1649 = vmatprep.subr.bf16.mxu0 0
      %1650 = vmatpush1.bf16.msra.mxu0 0
      %1651 = vmatprep.mubr.bf16.mxu0 0
      %1652 = vmatmul.mubr.bf16.gmra.mrb[0].mxu0 %v1617
      %v1653 = vpop.f32.mrb[0].mxu0
      %v1654 = vadd.f32 %v1602, %v1653
      %v1655 = vpop.f32.mrb[0].mxu0
      %v1656 = vpop.f32.mrb[0].mxu0
      %v1657 = vpop.f32.mrb[0].mxu0
      %1658 = vdwg.mxu0
      %1659 = vst [vmem:[%s822] sm:$0xff] %v1654
      %v1660 = vlaneseq
      %v1661 = vand.u32 %v1660, 127
      %v1662 = vcvt.s32.f32 %v1661
      %1663 = vmax.xlane.f32.xlu0 %v1654
      %v1664 = vpop.xlane.xlu0 %1663
      %vm1665 = vcmp.ge.f32.partialorder %v1654, %v1664
      %v1666 = vsel %vm1665, %v1662, 128.0
      %1667 = vmin.xlane.f32.xlu0 %v1666
      %v1668 = vpop.xlane.xlu0 %1667
      %vm1669 = vcmp.eq.f32.partialorder %v1662, %v1668
      %v1670 = vsel %vm1669, 1, 0
      %v1671 = vcvt.s32.f32 %v1670
      %v1672 = vadd.f32 %v1671, 0.0
      %vm1673 = vcmp.gt.f32.partialorder %v1671, 0.0
      %v1674 = vsel %vm1673, -3e+38, %v1654
      %1675 = vmax.xlane.f32.xlu0 %v1674
      %v1676 = vpop.xlane.xlu0 %1675
      %vm1677 = vcmp.ge.f32.partialorder %v1674, %v1676
      %v1678 = vsel %vm1677, %v1662, 128.0
      %1679 = vmin.xlane.f32.xlu0 %v1678
      %v1680 = vpop.xlane.xlu0 %1679
      %vm1681 = vcmp.eq.f32.partialorder %v1662, %v1680
      %v1682 = vsel %vm1681, 1, 0
      %v1683 = vcvt.s32.f32 %v1682
      %v1684 = vadd.f32 %v1672, %v1683
      %vm1685 = vcmp.gt.f32.partialorder %v1684, 0.0
      %v1686 = vsel %vm1685, %v1654, -3e+38
      %1687 = vmax.xlane.f32.xlu0 %v1686
      %v1688 = vpop.xlane.xlu0 %1687
      %v1689 = vsub.f32 %v1654, %v1688
      %v1690 = vmul.f32 %v1689, 1.442695
      %v1691 = vpow.pop %v1690
      %v1692 = vsel %vm1685, %v1691, 0.0
      %1693 = vadd.xlane.f32.xlu0 %v1692
      %v1694 = vpop.xlane.xlu0 %1693
      %v1695 = vrcp.pop %v1694
      %v1696 = vmul.f32 %v1692, %v1695
      %v1697 = vld [vmem:[%s791] sm:$0xf]
      %v1698 = vld [vmem:[%s791 + $0x4] sm:$0xf]
      %v1699 = vld [vmem:[%s791 + $0x8] sm:$0xf]
      %v1700 = vld [vmem:[%s791 + $0xc] sm:$0xf]
      %v1701 = vld [vmem:[%s795] sm:$0x1]
      %v1703 = vlaneseq
      %v1704 = vshrl.u32 %v1703, 7
      %v1705 = vsub.s32 0, %v1704
      %v1706 = vrot.slane %v1701, %v1705
      %v1712 = vunpack.c.l.b16 %v1697
      %v1713 = vunpack.c.l.b16 %v1698
      %v1714 = vunpack.c.l.b16 %v1699
      %v1715 = vunpack.c.l.b16 %v1700
      %v1716 = vpack.c.b16 %v1713, %v1712
      %v1717 = vpack.c.b16 %v1715, %v1714
      %1720 = vmatprep.subr.bf16.mxu0 0
      %1721 = vmatpush1.bf16.msra.mxu0 %v1716
      %1722 = vmatprep.subr.bf16.mxu0 0
      %1723 = vmatpush1.bf16.msra.mxu0 %v1717
      %1724 = vmatprep.subr.bf16.mxu0 0
      %1725 = vmatpush1.bf16.msra.mxu0 0
      %1726 = vmatprep.subr.bf16.mxu0 0
      %1727 = vmatpush1.bf16.msra.mxu0 0
      %1728 = vmatprep.subr.bf16.mxu0 0
      %1729 = vmatpush1.bf16.msra.mxu0 0
      %1730 = vmatprep.subr.bf16.mxu0 0
      %1731 = vmatpush1.bf16.msra.mxu0 0
      %1732 = vmatprep.subr.bf16.mxu0 0
      %1733 = vmatpush1.bf16.msra.mxu0 0
      %1734 = vmatprep.subr.bf16.mxu0 0
      %1735 = vmatpush1.bf16.msra.mxu0 0
      %1736 = vmatprep.subr.bf16.mxu0 0
      %1737 = vmatpush1.bf16.msra.mxu0 0
      %1738 = vmatprep.subr.bf16.mxu0 0
      %1739 = vmatpush1.bf16.msra.mxu0 0
      %1740 = vmatprep.subr.bf16.mxu0 0
      %1741 = vmatpush1.bf16.msra.mxu0 0
      %1742 = vmatprep.subr.bf16.mxu0 0
      %1743 = vmatpush1.bf16.msra.mxu0 0
      %1744 = vmatprep.subr.bf16.mxu0 0
      %1745 = vmatpush1.bf16.msra.mxu0 0
      %1746 = vmatprep.subr.bf16.mxu0 0
      %1747 = vmatpush1.bf16.msra.mxu0 0
      %1748 = vmatprep.subr.bf16.mxu0 0
      %1749 = vmatpush1.bf16.msra.mxu0 0
      %1750 = vmatprep.subr.bf16.mxu0 0
      %1751 = vmatpush1.bf16.msra.mxu0 0
      %1752 = vmatprep.mubr.bf16.mxu0 0
      %1753 = vmatmul.mubr.bf16.gmra.mrb[0].mxu0 %v1617
      %v1754 = vpop.f32.mrb[0].mxu0
      %v1755 = vadd.f32 %v1706, %v1754
      %v1756 = vpop.f32.mrb[0].mxu0
      %v1757 = vpop.f32.mrb[0].mxu0
      %v1758 = vpop.f32.mrb[0].mxu0
      %1759 = vdwg.mxu0
      %v1760 = vmax.f32 %v1755, 0.0
      %v1761 = vpack.c.bf16 %v1760, %v1760
      %v1762 = vld [vmem:[%s800] sm:$0xf]
      %v1763 = vld [vmem:[%s800 + $0x4] sm:$0xf]
      %v1764 = vld [vmem:[%s800 + $0x8] sm:$0xf]
      %v1765 = vld [vmem:[%s800 + $0xc] sm:$0xf]
      %v1766 = vld [vmem:[%s800 + $0x10] sm:$0xf]
      %v1767 = vld [vmem:[%s800 + $0x14] sm:$0xf]
      %v1768 = vld [vmem:[%s800 + $0x18] sm:$0xf]
      %v1769 = vld [vmem:[%s800 + $0x1c] sm:$0xf]
      %v1770 = vld [vmem:[%s804] sm:$0x1]
      %v1772 = vlaneseq
      %v1773 = vshrl.u32 %v1772, 7
      %v1774 = vsub.s32 0, %v1773
      %v1775 = vrot.slane %v1770, %v1774
      %v1785 = vunpack.c.l.b16 %v1762
      %v1786 = vunpack.c.l.b16 %v1763
      %v1787 = vunpack.c.l.b16 %v1764
      %v1788 = vunpack.c.l.b16 %v1765
      %v1789 = vunpack.c.l.b16 %v1766
      %v1790 = vunpack.c.l.b16 %v1767
      %v1791 = vunpack.c.l.b16 %v1768
      %v1792 = vunpack.c.l.b16 %v1769
      %v1793 = vpack.c.b16 %v1786, %v1785
      %v1794 = vpack.c.b16 %v1788, %v1787
      %v1795 = vpack.c.b16 %v1790, %v1789
      %v1796 = vpack.c.b16 %v1792, %v1791
      %vm1801 = vcmask 523264
      %v1803 = vsel %vm1801, %v1761, 0
      %1805 = vmatprep.subr.bf16.mxu0 0
      %1806 = vmatpush1.bf16.msra.mxu0 %v1793
      %1807 = vmatprep.subr.bf16.mxu0 0
      %1808 = vmatpush1.bf16.msra.mxu0 %v1794
      %1809 = vmatprep.subr.bf16.mxu0 0
      %1810 = vmatpush1.bf16.msra.mxu0 %v1795
      %1811 = vmatprep.subr.bf16.mxu0 0
      %1812 = vmatpush1.bf16.msra.mxu0 %v1796
      %1813 = vmatprep.subr.bf16.mxu0 0
      %1814 = vmatpush1.bf16.msra.mxu0 0
      %1815 = vmatprep.subr.bf16.mxu0 0
      %1816 = vmatpush1.bf16.msra.mxu0 0
      %1817 = vmatprep.subr.bf16.mxu0 0
      %1818 = vmatpush1.bf16.msra.mxu0 0
      %1819 = vmatprep.subr.bf16.mxu0 0
      %1820 = vmatpush1.bf16.msra.mxu0 0
      %1821 = vmatprep.subr.bf16.mxu0 0
      %1822 = vmatpush1.bf16.msra.mxu0 0
      %1823 = vmatprep.subr.bf16.mxu0 0
      %1824 = vmatpush1.bf16.msra.mxu0 0
      %1825 = vmatprep.subr.bf16.mxu0 0
      %1826 = vmatpush1.bf16.msra.mxu0 0
      %1827 = vmatprep.subr.bf16.mxu0 0
      %1828 = vmatpush1.bf16.msra.mxu0 0
      %1829 = vmatprep.subr.bf16.mxu0 0
      %1830 = vmatpush1.bf16.msra.mxu0 0
      %1831 = vmatprep.subr.bf16.mxu0 0
      %1832 = vmatpush1.bf16.msra.mxu0 0
      %1833 = vmatprep.subr.bf16.mxu0 0
      %1834 = vmatpush1.bf16.msra.mxu0 0
      %1835 = vmatprep.subr.bf16.mxu0 0
      %1836 = vmatpush1.bf16.msra.mxu0 0
      %1837 = vmatprep.mubr.bf16.mxu0 0
      %1838 = vmatmul.mubr.bf16.gmra.mrb[0].mxu0 %v1803
      %v1839 = vpop.f32.mrb[0].mxu0
      %v1840 = vadd.f32 %v1775, %v1839
      %v1841 = vpop.f32.mrb[0].mxu0
      %v1842 = vpop.f32.mrb[0].mxu0
      %v1843 = vpop.f32.mrb[0].mxu0
      %1844 = vdwg.mxu0
      %1846 = vset.pattern.permute.xlu0 0
      %1847 = vperm.xlu0 %1846, %v1696
      %v1848 = vpop.permute.xlu0 %1847
      %v1850 = vmul.f32 %v1848, %v1840
      %v1851 = vadd.f32 %v1850, 0.0
      %s1852 = scalar_lea.vmem %s791, 16
      %v1853 = vld [vmem:[%s1852] sm:$0xf]
      %v1854 = vld [vmem:[%s1852 + $0x4] sm:$0xf]
      %v1855 = vld [vmem:[%s1852 + $0x8] sm:$0xf]
      %v1856 = vld [vmem:[%s1852 + $0xc] sm:$0xf]
      %s1857 = scalar_lea.vmem %s795, 1
      %v1858 = vld [vmem:[%s1857] sm:$0x1]
      %v1860 = vlaneseq
      %v1861 = vshrl.u32 %v1860, 7
      %v1862 = vsub.s32 0, %v1861
      %v1863 = vrot.slane %v1858, %v1862
      %v1869 = vunpack.c.l.b16 %v1853
      %v1870 = vunpack.c.l.b16 %v1854
      %v1871 = vunpack.c.l.b16 %v1855
      %v1872 = vunpack.c.l.b16 %v1856
      %v1873 = vpack.c.b16 %v1870, %v1869
      %v1874 = vpack.c.b16 %v1872, %v1871
      %1877 = vmatprep.subr.bf16.mxu0 0
      %1878 = vmatpush1.bf16.msra.mxu0 %v1873
      %1879 = vmatprep.subr.bf16.mxu0 0
      %1880 = vmatpush1.bf16.msra.mxu0 %v1874
      %1881 = vmatprep.subr.bf16.mxu0 0
      %1882 = vmatpush1.bf16.msra.mxu0 0
      %1883 = vmatprep.subr.bf16.mxu0 0
      %1884 = vmatpush1.bf16.msra.mxu0 0
      %1885 = vmatprep.subr.bf16.mxu0 0
      %1886 = vmatpush1.bf16.msra.mxu0 0
      %1887 = vmatprep.subr.bf16.mxu0 0
      %1888 = vmatpush1.bf16.msra.mxu0 0
      %1889 = vmatprep.subr.bf16.mxu0 0
      %1890 = vmatpush1.bf16.msra.mxu0 0
      %1891 = vmatprep.subr.bf16.mxu0 0
      %1892 = vmatpush1.bf16.msra.mxu0 0
      %1893 = vmatprep.subr.bf16.mxu0 0
      %1894 = vmatpush1.bf16.msra.mxu0 0
      %1895 = vmatprep.subr.bf16.mxu0 0
      %1896 = vmatpush1.bf16.msra.mxu0 0
      %1897 = vmatprep.subr.bf16.mxu0 0
      %1898 = vmatpush1.bf16.msra.mxu0 0
      %1899 = vmatprep.subr.bf16.mxu0 0
      %1900 = vmatpush1.bf16.msra.mxu0 0
      %1901 = vmatprep.subr.bf16.mxu0 0
      %1902 = vmatpush1.bf16.msra.mxu0 0
      %1903 = vmatprep.subr.bf16.mxu0 0
      %1904 = vmatpush1.bf16.msra.mxu0 0
      %1905 = vmatprep.subr.bf16.mxu0 0
      %1906 = vmatpush1.bf16.msra.mxu0 0
      %1907 = vmatprep.subr.bf16.mxu0 0
      %1908 = vmatpush1.bf16.msra.mxu0 0
      %1909 = vmatprep.mubr.bf16.mxu0 0
      %1910 = vmatmul.mubr.bf16.gmra.mrb[0].mxu0 %v1617
      %v1911 = vpop.f32.mrb[0].mxu0
      %v1912 = vadd.f32 %v1863, %v1911
      %v1913 = vpop.f32.mrb[0].mxu0
      %v1914 = vpop.f32.mrb[0].mxu0
      %v1915 = vpop.f32.mrb[0].mxu0
      %1916 = vdwg.mxu0
      %v1917 = vmax.f32 %v1912, 0.0
      %v1918 = vpack.c.bf16 %v1917, %v1917
      %s1919 = scalar_lea.vmem %s800, 32
      %v1920 = vld [vmem:[%s1919] sm:$0xf]
      %v1921 = vld [vmem:[%s1919 + $0x4] sm:$0xf]
      %v1922 = vld [vmem:[%s1919 + $0x8] sm:$0xf]
      %v1923 = vld [vmem:[%s1919 + $0xc] sm:$0xf]
      %v1924 = vld [vmem:[%s1919 + $0x10] sm:$0xf]
      %v1925 = vld [vmem:[%s1919 + $0x14] sm:$0xf]
      %v1926 = vld [vmem:[%s1919 + $0x18] sm:$0xf]
      %v1927 = vld [vmem:[%s1919 + $0x1c] sm:$0xf]
      %s1928 = scalar_lea.vmem %s804, 1
      %v1929 = vld [vmem:[%s1928] sm:$0x1]
      %v1931 = vlaneseq
      %v1932 = vshrl.u32 %v1931, 7
      %v1933 = vsub.s32 0, %v1932
      %v1934 = vrot.slane %v1929, %v1933
      %v1944 = vunpack.c.l.b16 %v1920
      %v1945 = vunpack.c.l.b16 %v1921
      %v1946 = vunpack.c.l.b16 %v1922
      %v1947 = vunpack.c.l.b16 %v1923
      %v1948 = vunpack.c.l.b16 %v1924
      %v1949 = vunpack.c.l.b16 %v1925
      %v1950 = vunpack.c.l.b16 %v1926
      %v1951 = vunpack.c.l.b16 %v1927
      %v1952 = vpack.c.b16 %v1945, %v1944
      %v1953 = vpack.c.b16 %v1947, %v1946
      %v1954 = vpack.c.b16 %v1949, %v1948
      %v1955 = vpack.c.b16 %v1951, %v1950
      %v1961 = vsel %vm1801, %v1918, 0
      %1963 = vmatprep.subr.bf16.mxu0 0
      %1964 = vmatpush1.bf16.msra.mxu0 %v1952
      %1965 = vmatprep.subr.bf16.mxu0 0
      %1966 = vmatpush1.bf16.msra.mxu0 %v1953
      %1967 = vmatprep.subr.bf16.mxu0 0
      %1968 = vmatpush1.bf16.msra.mxu0 %v1954
      %1969 = vmatprep.subr.bf16.mxu0 0
      %1970 = vmatpush1.bf16.msra.mxu0 %v1955
      %1971 = vmatprep.subr.bf16.mxu0 0
      %1972 = vmatpush1.bf16.msra.mxu0 0
      %1973 = vmatprep.subr.bf16.mxu0 0
      %1974 = vmatpush1.bf16.msra.mxu0 0
      %1975 = vmatprep.subr.bf16.mxu0 0
      %1976 = vmatpush1.bf16.msra.mxu0 0
      %1977 = vmatprep.subr.bf16.mxu0 0
      %1978 = vmatpush1.bf16.msra.mxu0 0
      %1979 = vmatprep.subr.bf16.mxu0 0
      %1980 = vmatpush1.bf16.msra.mxu0 0
      %1981 = vmatprep.subr.bf16.mxu0 0
      %1982 = vmatpush1.bf16.msra.mxu0 0
      %1983 = vmatprep.subr.bf16.mxu0 0
      %1984 = vmatpush1.bf16.msra.mxu0 0
      %1985 = vmatprep.subr.bf16.mxu0 0
      %1986 = vmatpush1.bf16.msra.mxu0 0
      %1987 = vmatprep.subr.bf16.mxu0 0
      %1988 = vmatpush1.bf16.msra.mxu0 0
      %1989 = vmatprep.subr.bf16.mxu0 0
      %1990 = vmatpush1.bf16.msra.mxu0 0
      %1991 = vmatprep.subr.bf16.mxu0 0
      %1992 = vmatpush1.bf16.msra.mxu0 0
      %1993 = vmatprep.subr.bf16.mxu0 0
      %1994 = vmatpush1.bf16.msra.mxu0 0
      %1995 = vmatprep.mubr.bf16.mxu0 0
      %1996 = vmatmul.mubr.bf16.gmra.mrb[0].mxu0 %v1961
      %v1997 = vpop.f32.mrb[0].mxu0
      %v1998 = vadd.f32 %v1934, %v1997
      %v1999 = vpop.f32.mrb[0].mxu0
      %v2000 = vpop.f32.mrb[0].mxu0
      %v2001 = vpop.f32.mrb[0].mxu0
      %2002 = vdwg.mxu0
      %2003 = vset.pattern.permute.xlu0 1
      %2004 = vperm.xlu0 %2003, %v1696
      %v2005 = vpop.permute.xlu0 %2004
      %v2007 = vmul.f32 %v2005, %v1998
      %v2008 = vadd.f32 %v1851, %v2007
      %s2009 = scalar_lea.vmem %s791, 32
      %v2010 = vld [vmem:[%s2009] sm:$0xf]
      %v2011 = vld [vmem:[%s2009 + $0x4] sm:$0xf]
      %v2012 = vld [vmem:[%s2009 + $0x8] sm:$0xf]
      %v2013 = vld [vmem:[%s2009 + $0xc] sm:$0xf]
      %s2014 = scalar_lea.vmem %s795, 2
      %v2015 = vld [vmem:[%s2014] sm:$0x1]
      %v2017 = vlaneseq
      %v2018 = vshrl.u32 %v2017, 7
      %v2019 = vsub.s32 0, %v2018
      %v2020 = vrot.slane %v2015, %v2019
      %v2026 = vunpack.c.l.b16 %v2010
      %v2027 = vunpack.c.l.b16 %v2011
      %v2028 = vunpack.c.l.b16 %v2012
      %v2029 = vunpack.c.l.b16 %v2013
      %v2030 = vpack.c.b16 %v2027, %v2026
      %v2031 = vpack.c.b16 %v2029, %v2028
      %2034 = vmatprep.subr.bf16.mxu0 0
      %2035 = vmatpush1.bf16.msra.mxu0 %v2030
      %2036 = vmatprep.subr.bf16.mxu0 0
      %2037 = vmatpush1.bf16.msra.mxu0 %v2031
      %2038 = vmatprep.subr.bf16.mxu0 0
      %2039 = vmatpush1.bf16.msra.mxu0 0
      %2040 = vmatprep.subr.bf16.mxu0 0
      %2041 = vmatpush1.bf16.msra.mxu0 0
      %2042 = vmatprep.subr.bf16.mxu0 0
      %2043 = vmatpush1.bf16.msra.mxu0 0
      %2044 = vmatprep.subr.bf16.mxu0 0
      %2045 = vmatpush1.bf16.msra.mxu0 0
      %2046 = vmatprep.subr.bf16.mxu0 0
      %2047 = vmatpush1.bf16.msra.mxu0 0
      %2048 = vmatprep.subr.bf16.mxu0 0
      %2049 = vmatpush1.bf16.msra.mxu0 0
      %2050 = vmatprep.subr.bf16.mxu0 0
      %2051 = vmatpush1.bf16.msra.mxu0 0
      %2052 = vmatprep.subr.bf16.mxu0 0
      %2053 = vmatpush1.bf16.msra.mxu0 0
      %2054 = vmatprep.subr.bf16.mxu0 0
      %2055 = vmatpush1.bf16.msra.mxu0 0
      %2056 = vmatprep.subr.bf16.mxu0 0
      %2057 = vmatpush1.bf16.msra.mxu0 0
      %2058 = vmatprep.subr.bf16.mxu0 0
      %2059 = vmatpush1.bf16.msra.mxu0 0
      %2060 = vmatprep.subr.bf16.mxu0 0
      %2061 = vmatpush1.bf16.msra.mxu0 0
      %2062 = vmatprep.subr.bf16.mxu0 0
      %2063 = vmatpush1.bf16.msra.mxu0 0
      %2064 = vmatprep.subr.bf16.mxu0 0
      %2065 = vmatpush1.bf16.msra.mxu0 0
      %2066 = vmatprep.mubr.bf16.mxu0 0
      %2067 = vmatmul.mubr.bf16.gmra.mrb[0].mxu0 %v1617
      %v2068 = vpop.f32.mrb[0].mxu0
      %v2069 = vadd.f32 %v2020, %v2068
      %v2070 = vpop.f32.mrb[0].mxu0
      %v2071 = vpop.f32.mrb[0].mxu0
      %v2072 = vpop.f32.mrb[0].mxu0
      %2073 = vdwg.mxu0
      %v2074 = vmax.f32 %v2069, 0.0
      %v2075 = vpack.c.bf16 %v2074, %v2074
      %s2076 = scalar_lea.vmem %s800, 64
      %v2077 = vld [vmem:[%s2076] sm:$0xf]
      %v2078 = vld [vmem:[%s2076 + $0x4] sm:$0xf]
      %v2079 = vld [vmem:[%s2076 + $0x8] sm:$0xf]
      %v2080 = vld [vmem:[%s2076 + $0xc] sm:$0xf]
      %v2081 = vld [vmem:[%s2076 + $0x10] sm:$0xf]
      %v2082 = vld [vmem:[%s2076 + $0x14] sm:$0xf]
      %v2083 = vld [vmem:[%s2076 + $0x18] sm:$0xf]
      %v2084 = vld [vmem:[%s2076 + $0x1c] sm:$0xf]
      %s2085 = scalar_lea.vmem %s804, 2
      %v2086 = vld [vmem:[%s2085] sm:$0x1]
      %v2088 = vlaneseq
      %v2089 = vshrl.u32 %v2088, 7
      %v2090 = vsub.s32 0, %v2089
      %v2091 = vrot.slane %v2086, %v2090
      %v2101 = vunpack.c.l.b16 %v2077
      %v2102 = vunpack.c.l.b16 %v2078
      %v2103 = vunpack.c.l.b16 %v2079
      %v2104 = vunpack.c.l.b16 %v2080
      %v2105 = vunpack.c.l.b16 %v2081
      %v2106 = vunpack.c.l.b16 %v2082
      %v2107 = vunpack.c.l.b16 %v2083
      %v2108 = vunpack.c.l.b16 %v2084
      %v2109 = vpack.c.b16 %v2102, %v2101
      %v2110 = vpack.c.b16 %v2104, %v2103
      %v2111 = vpack.c.b16 %v2106, %v2105
      %v2112 = vpack.c.b16 %v2108, %v2107
      %v2118 = vsel %vm1801, %v2075, 0
      %2120 = vmatprep.subr.bf16.mxu0 0
      %2121 = vmatpush1.bf16.msra.mxu0 %v2109
      %2122 = vmatprep.subr.bf16.mxu0 0
      %2123 = vmatpush1.bf16.msra.mxu0 %v2110
      %2124 = vmatprep.subr.bf16.mxu0 0
      %2125 = vmatpush1.bf16.msra.mxu0 %v2111
      %2126 = vmatprep.subr.bf16.mxu0 0
      %2127 = vmatpush1.bf16.msra.mxu0 %v2112
      %2128 = vmatprep.subr.bf16.mxu0 0
      %2129 = vmatpush1.bf16.msra.mxu0 0
      %2130 = vmatprep.subr.bf16.mxu0 0
      %2131 = vmatpush1.bf16.msra.mxu0 0
      %2132 = vmatprep.subr.bf16.mxu0 0
      %2133 = vmatpush1.bf16.msra.mxu0 0
      %2134 = vmatprep.subr.bf16.mxu0 0
      %2135 = vmatpush1.bf16.msra.mxu0 0
      %2136 = vmatprep.subr.bf16.mxu0 0
      %2137 = vmatpush1.bf16.msra.mxu0 0
      %2138 = vmatprep.subr.bf16.mxu0 0
      %2139 = vmatpush1.bf16.msra.mxu0 0
      %2140 = vmatprep.subr.bf16.mxu0 0
      %2141 = vmatpush1.bf16.msra.mxu0 0
      %2142 = vmatprep.subr.bf16.mxu0 0
      %2143 = vmatpush1.bf16.msra.mxu0 0
      %2144 = vmatprep.subr.bf16.mxu0 0
      %2145 = vmatpush1.bf16.msra.mxu0 0
      %2146 = vmatprep.subr.bf16.mxu0 0
      %2147 = vmatpush1.bf16.msra.mxu0 0
      %2148 = vmatprep.subr.bf16.mxu0 0
      %2149 = vmatpush1.bf16.msra.mxu0 0
      %2150 = vmatprep.subr.bf16.mxu0 0
      %2151 = vmatpush1.bf16.msra.mxu0 0
      %2152 = vmatprep.mubr.bf16.mxu0 0
      %2153 = vmatmul.mubr.bf16.gmra.mrb[0].mxu0 %v2118
      %v2154 = vpop.f32.mrb[0].mxu0
      %v2155 = vadd.f32 %v2091, %v2154
      %v2156 = vpop.f32.mrb[0].mxu0
      %v2157 = vpop.f32.mrb[0].mxu0
      %v2158 = vpop.f32.mrb[0].mxu0
      %2159 = vdwg.mxu0
      %2160 = vset.pattern.permute.xlu0 2
      %2161 = vperm.xlu0 %2160, %v1696
      %v2162 = vpop.permute.xlu0 %2161
      %v2164 = vmul.f32 %v2162, %v2155
      %v2165 = vadd.f32 %v2008, %v2164
      %s2166 = scalar_lea.vmem %s791, 48
      %v2167 = vld [vmem:[%s2166] sm:$0xf]
      %v2168 = vld [vmem:[%s2166 + $0x4] sm:$0xf]
      %v2169 = vld [vmem:[%s2166 + $0x8] sm:$0xf]
      %v2170 = vld [vmem:[%s2166 + $0xc] sm:$0xf]
      %s2171 = scalar_lea.vmem %s795, 3
      %v2172 = vld [vmem:[%s2171] sm:$0x1]
      %v2174 = vlaneseq
      %v2175 = vshrl.u32 %v2174, 7
      %v2176 = vsub.s32 0, %v2175
      %v2177 = vrot.slane %v2172, %v2176
      %v2183 = vunpack.c.l.b16 %v2167
      %v2184 = vunpack.c.l.b16 %v2168
      %v2185 = vunpack.c.l.b16 %v2169
      %v2186 = vunpack.c.l.b16 %v2170
      %v2187 = vpack.c.b16 %v2184, %v2183
      %v2188 = vpack.c.b16 %v2186, %v2185
      %2191 = vmatprep.subr.bf16.mxu0 0
      %2192 = vmatpush1.bf16.msra.mxu0 %v2187
      %2193 = vmatprep.subr.bf16.mxu0 0
      %2194 = vmatpush1.bf16.msra.mxu0 %v2188
      %2195 = vmatprep.subr.bf16.mxu0 0
      %2196 = vmatpush1.bf16.msra.mxu0 0
      %2197 = vmatprep.subr.bf16.mxu0 0
      %2198 = vmatpush1.bf16.msra.mxu0 0
      %2199 = vmatprep.subr.bf16.mxu0 0
      %2200 = vmatpush1.bf16.msra.mxu0 0
      %2201 = vmatprep.subr.bf16.mxu0 0
      %2202 = vmatpush1.bf16.msra.mxu0 0
      %2203 = vmatprep.subr.bf16.mxu0 0
      %2204 = vmatpush1.bf16.msra.mxu0 0
      %2205 = vmatprep.subr.bf16.mxu0 0
      %2206 = vmatpush1.bf16.msra.mxu0 0
      %2207 = vmatprep.subr.bf16.mxu0 0
      %2208 = vmatpush1.bf16.msra.mxu0 0
      %2209 = vmatprep.subr.bf16.mxu0 0
      %2210 = vmatpush1.bf16.msra.mxu0 0
      %2211 = vmatprep.subr.bf16.mxu0 0
      %2212 = vmatpush1.bf16.msra.mxu0 0
      %2213 = vmatprep.subr.bf16.mxu0 0
      %2214 = vmatpush1.bf16.msra.mxu0 0
      %2215 = vmatprep.subr.bf16.mxu0 0
      %2216 = vmatpush1.bf16.msra.mxu0 0
      %2217 = vmatprep.subr.bf16.mxu0 0
      %2218 = vmatpush1.bf16.msra.mxu0 0
      %2219 = vmatprep.subr.bf16.mxu0 0
      %2220 = vmatpush1.bf16.msra.mxu0 0
      %2221 = vmatprep.subr.bf16.mxu0 0
      %2222 = vmatpush1.bf16.msra.mxu0 0
      %2223 = vmatprep.mubr.bf16.mxu0 0
      %2224 = vmatmul.mubr.bf16.gmra.mrb[0].mxu0 %v1617
      %v2225 = vpop.f32.mrb[0].mxu0
      %v2226 = vadd.f32 %v2177, %v2225
      %v2227 = vpop.f32.mrb[0].mxu0
      %v2228 = vpop.f32.mrb[0].mxu0
      %v2229 = vpop.f32.mrb[0].mxu0
      %2230 = vdwg.mxu0
      %v2231 = vmax.f32 %v2226, 0.0
      %v2232 = vpack.c.bf16 %v2231, %v2231
      %s2233 = scalar_lea.vmem %s800, 96
      %v2234 = vld [vmem:[%s2233] sm:$0xf]
      %v2235 = vld [vmem:[%s2233 + $0x4] sm:$0xf]
      %v2236 = vld [vmem:[%s2233 + $0x8] sm:$0xf]
      %v2237 = vld [vmem:[%s2233 + $0xc] sm:$0xf]
      %v2238 = vld [vmem:[%s2233 + $0x10] sm:$0xf]
      %v2239 = vld [vmem:[%s2233 + $0x14] sm:$0xf]
      %v2240 = vld [vmem:[%s2233 + $0x18] sm:$0xf]
      %v2241 = vld [vmem:[%s2233 + $0x1c] sm:$0xf]
      %s2242 = scalar_lea.vmem %s804, 3
      %v2243 = vld [vmem:[%s2242] sm:$0x1]
      %v2245 = vlaneseq
      %v2246 = vshrl.u32 %v2245, 7
      %v2247 = vsub.s32 0, %v2246
      %v2248 = vrot.slane %v2243, %v2247
      %v2258 = vunpack.c.l.b16 %v2234
      %v2259 = vunpack.c.l.b16 %v2235
      %v2260 = vunpack.c.l.b16 %v2236
      %v2261 = vunpack.c.l.b16 %v2237
      %v2262 = vunpack.c.l.b16 %v2238
      %v2263 = vunpack.c.l.b16 %v2239
      %v2264 = vunpack.c.l.b16 %v2240
      %v2265 = vunpack.c.l.b16 %v2241
      %v2266 = vpack.c.b16 %v2259, %v2258
      %v2267 = vpack.c.b16 %v2261, %v2260
      %v2268 = vpack.c.b16 %v2263, %v2262
      %v2269 = vpack.c.b16 %v2265, %v2264
      %v2275 = vsel %vm1801, %v2232, 0
      %2277 = vmatprep.subr.bf16.mxu0 0
      %2278 = vmatpush1.bf16.msra.mxu0 %v2266
      %2279 = vmatprep.subr.bf16.mxu0 0
      %2280 = vmatpush1.bf16.msra.mxu0 %v2267
      %2281 = vmatprep.subr.bf16.mxu0 0
      %2282 = vmatpush1.bf16.msra.mxu0 %v2268
      %2283 = vmatprep.subr.bf16.mxu0 0
      %2284 = vmatpush1.bf16.msra.mxu0 %v2269
      %2285 = vmatprep.subr.bf16.mxu0 0
      %2286 = vmatpush1.bf16.msra.mxu0 0
      %2287 = vmatprep.subr.bf16.mxu0 0
      %2288 = vmatpush1.bf16.msra.mxu0 0
      %2289 = vmatprep.subr.bf16.mxu0 0
      %2290 = vmatpush1.bf16.msra.mxu0 0
      %2291 = vmatprep.subr.bf16.mxu0 0
      %2292 = vmatpush1.bf16.msra.mxu0 0
      %2293 = vmatprep.subr.bf16.mxu0 0
      %2294 = vmatpush1.bf16.msra.mxu0 0
      %2295 = vmatprep.subr.bf16.mxu0 0
      %2296 = vmatpush1.bf16.msra.mxu0 0
      %2297 = vmatprep.subr.bf16.mxu0 0
      %2298 = vmatpush1.bf16.msra.mxu0 0
      %2299 = vmatprep.subr.bf16.mxu0 0
      %2300 = vmatpush1.bf16.msra.mxu0 0
      %2301 = vmatprep.subr.bf16.mxu0 0
      %2302 = vmatpush1.bf16.msra.mxu0 0
      %2303 = vmatprep.subr.bf16.mxu0 0
      %2304 = vmatpush1.bf16.msra.mxu0 0
      %2305 = vmatprep.subr.bf16.mxu0 0
      %2306 = vmatpush1.bf16.msra.mxu0 0
      %2307 = vmatprep.subr.bf16.mxu0 0
      %2308 = vmatpush1.bf16.msra.mxu0 0
      %2309 = vmatprep.mubr.bf16.mxu0 0
      %2310 = vmatmul.mubr.bf16.gmra.mrb[0].mxu0 %v2275
      %v2311 = vpop.f32.mrb[0].mxu0
      %v2312 = vadd.f32 %v2248, %v2311
      %v2313 = vpop.f32.mrb[0].mxu0
      %v2314 = vpop.f32.mrb[0].mxu0
      %v2315 = vpop.f32.mrb[0].mxu0
      %2316 = vdwg.mxu0
      %2317 = vset.pattern.permute.xlu0 3
      %2318 = vperm.xlu0 %2317, %v1696
      %v2319 = vpop.permute.xlu0 %2318
      %v2321 = vmul.f32 %v2319, %v2312
      %v2322 = vadd.f32 %v2165, %v2321
      %v2323 = vadd.f32 %v1591, %v2322
      %v2324 = vsel %vm859, %v2323, 0.0
      %2325 = vadd.xlane.f32.xlu0 %v2324
      %v2326 = vpop.xlane.xlu0 %2325
      %v2327 = vmul.f32 %v2326, %v1565
      %v2328 = vsub.f32 %v2323, %v2327
      %v2329 = vmul.f32 %v2328, %v2328
      %v2330 = vsel %vm859, %v2329, 0.0
      %2331 = vadd.xlane.f32.xlu0 %v2330
      %v2332 = vpop.xlane.xlu0 %2331
      %v2333 = vmul.f32 %v2332, %v1565
      %v2334 = vadd.f32 %v2333, 1e-05
      %v2335 = vrsqrt.pop %v2334
      %v2336 = vmul.f32 %v2328, %v2335
      %v2337 = vld [vmem:[%s807] sm:$0x1]
      %v2339 = vlaneseq
      %v2340 = vshrl.u32 %v2339, 7
      %v2341 = vsub.s32 0, %v2340
      %v2342 = vrot.slane %v2337, %v2341
      %v2344 = vmul.f32 %v2336, %v2342
      %v2345 = vld [vmem:[%s810] sm:$0x1]
      %v2347 = vlaneseq
      %v2348 = vshrl.u32 %v2347, 7
      %v2349 = vsub.s32 0, %v2348
      %v2350 = vrot.slane %v2345, %v2349
      %v2352 = vadd.f32 %v2344, %v2350
      %2353 = vst.msk [vmem:[#allocation2] sm:$0xff] %vm859, %v2352
      %p2354 = scmp.eq.s32.totalorder %s34, 1
      // Predicated region
      $region89: #{actor_forward.2} parent=83 // pred_check
        %p2355 = pneg %p2354
      $region90: #{actor_forward.2} parent=83 // pred_check_branch
        %2357 = sbr.rel (%p2355) target = $region92
      $region91: #{actor_forward.2} parent=83 // pred_region
        %2358 = vst.msk [vmem:[%s814] sm:$0xff] %vm859, %v2352
      $region92: #{actor_forward.2} parent=83 // pred_fallthru
        _
      %p2359 = scmp.lt.s32.totalorder %s33, 1
      %s2360 = scalar_select %p2359, %s33, 1
      %s2361 = smul.addr %s2360, 8
      %s2362 = scalar_lea.vmem %s16, %s2361
      %p2363 = scmp.lt.s32.totalorder %s34, 1
      %s2364 = scalar_select %p2363, %s34, 1
      %p2365 = scmp.lt.s32.totalorder %s33, 1
      %s2366 = scalar_select %p2365, %s33, 1
      %s2367 = smul.addr %s2364, 2
      %s2368 = sadd.s32 %s2366, %s2367
      %s2369 = smul.addr %s2368, 8
      %s2370 = scalar_lea.vmem %s17, %s2369
      // Predicated region
      $region93: #{actor_forward.2} parent=83 // pred_check
        %p2371 = pneg %p475
      $region94: #{actor_forward.2} parent=83 // pred_check_branch
        %2373 = sbr.rel (%p2371) target = $region96
      $region95: #{actor_forward.2} parent=83 // pred_region
        _
      $region96: #{actor_forward.2} parent=83 // pred_fallthru
        _
      // Predicated region
      $region97: #{actor_forward.2} parent=83 // pred_check
        %p2374 = pneg %p503
      $region98: #{actor_forward.2} parent=83 // pred_check_branch
        %2376 = sbr.rel (%p2374) target = $region100
      $region99: #{actor_forward.2} parent=83 // pred_region
        _
      $region100: #{actor_forward.2} parent=83 // pred_fallthru
        _
    $region84: #{actor_forward.2} parent=5 // pred_fallthru
      _
    %p2377 = scmp.le.s32.totalorder 2, %s24
    // Predicated region
    $region101: #{actor_forward.2} parent=5 // pred_check
      %p2378 = pneg %p2377
    $region102: #{actor_forward.2} parent=5 // pred_check_branch
      %2380 = sbr.rel (%p2378) target = $region104
    $region103: #{actor_forward.2} parent=5 // pred_region
      %s2381 = ssub.s32 %s24, 2
      // Predicated region
      $region105: #{actor_forward.2} parent=103 // pred_check
        %p2382 = pneg %p481
      $region106: #{actor_forward.2} parent=103 // pred_check_branch
        %2384 = sbr.rel (%p2382) target = $region108
      $region107: #{actor_forward.2} parent=103 // pred_region
        %p2385 = scmp.lt.s32.totalorder %s35, 1
        %s2386 = scalar_select %p2385, %s35, 1
        %s2387 = smul.addr %s2386, 8
        %s2388 = scalar_lea.vmem %s16, %s2387
      $region108: #{actor_forward.2} parent=103 // pred_fallthru
        _
      // Predicated region
      $region109: #{actor_forward.2} parent=103 // pred_check
        %p2389 = pneg %p509
      $region110: #{actor_forward.2} parent=103 // pred_check_branch
        %2391 = sbr.rel (%p2389) target = $region112
      $region111: #{actor_forward.2} parent=103 // pred_region
        %p2392 = scmp.lt.s32.totalorder %s36, 1
        %s2393 = scalar_select %p2392, %s36, 1
        %p2394 = scmp.lt.s32.totalorder %s35, 1
        %s2395 = scalar_select %p2394, %s35, 1
        %s2396 = smul.addr %s2393, 2
        %s2397 = sadd.s32 %s2395, %s2396
        %s2398 = smul.addr %s2397, 8
        %s2399 = scalar_lea.vmem %s17, %s2398
      $region112: #{actor_forward.2} parent=103 // pred_fallthru
        _
    $region104: #{actor_forward.2} parent=5 // pred_fallthru
      _
  $region6: #{actor_forward.2} parent=0 // loop_footer
    %s28 = sadd.s32 1, %s24
  $region7: #{actor_forward.2} parent=0 // loop_footer_branch
    %23 = sbr.rel target = $region3
  $region8: #{actor_forward.2} parent=0 // loop_exit
    _

</llo_original>
